<compile_context>
chip_gen: v5e
topology: v5e:2x2
jax: 0.10.0
libtpu: 0.0.40
codegen_flags: <defaults>
</compile_context>

<pallas_src>
import functools

import jax
import jax.numpy as jnp
from jax.experimental import pallas as pl
from jax.experimental.pallas import tpu as pltpu


def _stroke_kernel(H1, Bblk,
                   xpar_ref,
                   w1_ref, b1_ref, w2_ref, b2_ref, w3_ref, b3_ref,
                   w4_ref, b4_ref, w5_ref, b5_ref,
                   wf1_ref, bf1_ref, wf2_ref, bf2_ref,
                   o_ref):
    f32 = jnp.float32
    M = Bblk * H1 * H1

    xpar = xpar_ref[...]                              # (Bblk, Hp, Hp, 20)

    # ---- conv1: 5x5, stride 2, pad 2, 5 -> 16, as ONE im2col matmul ---------
    # Stride-2 handled by the parity decomposition packed on channels:
    #   padded[2i+dh, 2j+dw, c] == xpar[i+dh//2, j+dw//2, 5*((dh%2)*2+(dw%2)) + c]
    taps = []
    for dh in range(5):
        for dw in range(5):
            p = (dh % 2) * 2 + (dw % 2)
            taps.append(xpar[:, dh // 2:dh // 2 + H1,
                             dw // 2:dw // 2 + H1,
                             5 * p:5 * p + 5])
    patches = jnp.concatenate(taps, axis=-1)          # (Bblk, H1, H1, 125)
    h = jnp.dot(patches.reshape(M, 125), w1_ref[...],
                preferred_element_type=f32) + b1_ref[...]
    h = jnp.maximum(h, 0.0)                           # (M, 16)

    # ---- conv2 / conv3: 5x5, stride 1, pad 2, as im2col matmuls -------------
    def conv5x5(h_flat, cin, w_ref, b_ref):
        hm = h_flat.reshape(Bblk, H1, H1, cin)
        # zero-pad rows/cols by 2 in registers (no scratch, no re-zeroing)
        zr = jnp.zeros((Bblk, 2, H1, cin), f32)
        zc = jnp.zeros((Bblk, H1 + 4, 2, cin), f32)
        hp = jnp.concatenate([zr, hm, zr], axis=1)
        hp = jnp.concatenate([zc, hp, zc], axis=2)    # (Bblk, H1+4, H1+4, cin)
        tp = [hp[:, dh:dh + H1, dw:dw + H1, :]
              for dh in range(5) for dw in range(5)]
        pt = jnp.concatenate(tp, axis=-1).reshape(M, 25 * cin)
        y = jnp.dot(pt, w_ref[...], preferred_element_type=f32) + b_ref[...]
        return jnp.maximum(y, 0.0)

    h = conv5x5(h, 16, w2_ref, b2_ref)                # (M, 32)
    h = conv5x5(h, 32, w3_ref, b3_ref)                # (M, 64)

    # ---- conv4 / conv5: 1x1 convs -> plain (M,64)x(64,64) matmuls -----------
    h = jnp.maximum(jnp.dot(h, w4_ref[...], preferred_element_type=f32)
                    + b4_ref[...], 0.0)
    h = jnp.maximum(jnp.dot(h, w5_ref[...], preferred_element_type=f32)
                    + b5_ref[...], 0.0)

    # ---- global spatial max (== torch.max over dims 3 then 2) ---------------
    feat = jnp.max(h.reshape(Bblk, H1 * H1, 64), axis=1)        # (Bblk, 64)

    # ---- feed-forward head: Linear -> ReLU -> Linear -> Sigmoid -------------
    z1 = jnp.maximum(jnp.dot(feat, wf1_ref[...], preferred_element_type=f32)
                     + bf1_ref[...], 0.0)
    z2 = jnp.dot(z1, wf2_ref[...], preferred_element_type=f32) + bf2_ref[...]
    o_ref[...] = (1.0 / (1.0 + jnp.exp(-z2))).astype(o_ref.dtype)


def stroke_net_forward(x_nchw, params, size):
    # TODO(synk): parity-split stride-2 trick assumes even `size` (as tested).
    assert size % 2 == 0, "parity-split stride-2 conv requires even `size`"
    B = x_nchw.shape[0]
    H1 = (size - 1) // 2 + 1
    Hp = H1 + 2

    x = jnp.transpose(x_nchw, (0, 2, 3, 1)).astype(jnp.float32)   # NCHW -> NHWC

    # positional channels (same semantics as SharedNet.pos)
    col = jnp.arange(size, dtype=jnp.float32)
    wch = jnp.tile(col[None, :], (size, 1)) / size                # [i,j] = j/size
    hch = wch.T                                                   # [i,j] = i/size
    pos = jnp.broadcast_to(jnp.stack([wch, hch], axis=-1)[None],
                           (B, size, size, 2))
    xc = jnp.concatenate([x, pos], axis=-1)                       # (B, size, size, 5)

    # zero-pad by 2, split by row/col parity, and pack the 4 parity planes on
    # the channel axis -> a single lane-width-20 input per grid step.
    xp = jnp.pad(xc, ((0, 0), (2, 2), (2, 2), (0, 0)))
    xpar = jnp.concatenate(
        [xp[:, 0::2, 0::2, :], xp[:, 0::2, 1::2, :],
         xp[:, 1::2, 0::2, :], xp[:, 1::2, 1::2, :]], axis=-1)    # (B, Hp, Hp, 20)

    # batch blocking: many images per grid step so the convs become big MXU dots
    if B <= 32:
        Bblk, B_pad = B, B
    else:
        Bblk = 32                                                # multiple of 8
        B_pad = -(-B // Bblk) * Bblk
    if B_pad != B:
        xpar = jnp.pad(xpar, ((0, B_pad - B), (0, 0), (0, 0), (0, 0)))

    def conv_w(w):  # (O, I, kh, kw) -> (kh*kw*I, O), tap-major / channel-minor
        o, i, kh, kw = w.shape
        return jnp.transpose(w, (2, 3, 1, 0)).reshape(kh * kw * i, o)

    bias = lambda name: params[name].reshape(1, -1)

    args = (xpar,
            conv_w(params['w1']), bias('b1'),
            conv_w(params['w2']), bias('b2'),
            conv_w(params['w3']), bias('b3'),
            params['w4'][:, :, 0, 0].T, bias('b4'),
            params['w5'][:, :, 0, 0].T, bias('b5'),
            params['wf1'].T, bias('bf1'),
            params['wf2'].T, bias('bf2'))

    xspec = pl.BlockSpec((Bblk, Hp, Hp, 20), lambda b: (b, 0, 0, 0))

    def full_spec(a):
        nd = a.ndim
        return pl.BlockSpec(a.shape, lambda b, _nd=nd: (0,) * _nd)

    in_specs = [xspec] + [full_spec(a) for a in args[1:]]

    out = pl.pallas_call(
        functools.partial(_stroke_kernel, H1, Bblk),
        out_shape=jax.ShapeDtypeStruct((B_pad, 4), jnp.float32),
        grid_spec=pltpu.PrefetchScalarGridSpec(
            num_scalar_prefetch=0,
            grid=(B_pad // Bblk,),
            in_specs=in_specs,
            out_specs=pl.BlockSpec((Bblk, 4), lambda b: (b, 0)),
        ),
        compiler_params=pltpu.CompilerParams(
            dimension_semantics=("parallel",)),
    )(*args)
    return out[:B]


def init_params(key, size):
    # Deterministic synthetic init (stands in for init_orthogonal; shapes match
    # the PyTorch module).  Conv weights in PyTorch (O, I, kh, kw) layout,
    # Linear weights in (out, in) layout.
    ks = jax.random.split(key, 14)

    def conv(k, o, i, kk):
        return jax.random.normal(k, (o, i, kk, kk), jnp.float32) / jnp.sqrt(i * kk * kk)

    def vec(k, n):
        return 0.01 * jax.random.normal(k, (n,), jnp.float32)

    return dict(
        w1=conv(ks[0], 16, 5, 5),   b1=vec(ks[1], 16),
        w2=conv(ks[2], 32, 16, 5),  b2=vec(ks[3], 32),
        w3=conv(ks[4], 64, 32, 5),  b3=vec(ks[5], 64),
        w4=conv(ks[6], 64, 64, 1),  b4=vec(ks[7], 64),
        w5=conv(ks[8], 64, 64, 1),  b5=vec(ks[9], 64),
        wf1=jax.random.normal(ks[10], (64, 64), jnp.float32) / 8.0, bf1=vec(ks[11], 64),
        wf2=jax.random.normal(ks[12], (4, 64), jnp.float32) / 8.0,  bf2=vec(ks[13], 4),
    )


def ref_forward(x_nchw, params, size):
    # Pure-JAX (XLA) reference matching the PyTorch forward exactly.
    B = x_nchw.shape[0]
    col = jnp.arange(size, dtype=jnp.float32)
    wch = jnp.tile(col[None, :], (size, 1))
    hch = wch.T
    pos = jnp.stack([wch, hch])[None] / size
    xc = jnp.concatenate([x_nchw, jnp.broadcast_to(pos, (B, 2, size, size))], axis=1)

    def conv(x, w, b, stride):
        pad = w.shape[2] // 2
        y = jax.lax.conv_general_dilated(
            x, w, (stride, stride), [(pad, pad), (pad, pad)],
            dimension_numbers=('NCHW', 'OIHW', 'NCHW'))
        return jax.nn.relu(y + b[None, :, None, None])

    y = conv(xc, params['w1'], params['b1'], 2)
    y = conv(y, params['w2'], params['b2'], 1)
    y = conv(y, params['w3'], params['b3'], 1)
    y = conv(y, params['w4'], params['b4'], 1)
    y = conv(y, params['w5'], params['b5'], 1)
    y = jnp.max(y, axis=(2, 3))
    y = jax.nn.relu(y @ params['wf1'].T + params['bf1'])
    y = jax.nn.sigmoid(y @ params['wf2'].T + params['bf2'])
    return y


if __name__ == "__main__":
    size = 16
    batch = 2
    key = jax.random.PRNGKey(0)
    kx, kp = jax.random.split(key)
    x = jax.random.uniform(kx, (batch, 3, size, size), jnp.float32)
    params = init_params(kp, size)

    y = stroke_net_forward(x, params, size)
    y = jax.block_until_ready(y)
    assert y.shape == (batch, 4)

    y_ref = ref_forward(x, params, size)
    if not jnp.allclose(y, y_ref, atol=1e-4, rtol=1e-4):
        raise AssertionError(f"Pallas output {y} != reference {y_ref}")
    print("KERNEL_OK")
</pallas_src>

<mosaic_0001>
module attributes {stable_mosaic.version = 11 : i64} {
  func.func @_stroke_kernel(%arg0: i32, %arg1: memref<2x10x10x20xf32, #tpu.memory_space<vmem>>, %arg2: memref<125x16xf32, #tpu.memory_space<vmem>>, %arg3: memref<1x16xf32, #tpu.memory_space<vmem>>, %arg4: memref<400x32xf32, #tpu.memory_space<vmem>>, %arg5: memref<1x32xf32, #tpu.memory_space<vmem>>, %arg6: memref<800x64xf32, #tpu.memory_space<vmem>>, %arg7: memref<1x64xf32, #tpu.memory_space<vmem>>, %arg8: memref<64x64xf32, #tpu.memory_space<vmem>>, %arg9: memref<1x64xf32, #tpu.memory_space<vmem>>, %arg10: memref<64x64xf32, #tpu.memory_space<vmem>>, %arg11: memref<1x64xf32, #tpu.memory_space<vmem>>, %arg12: memref<64x64xf32, #tpu.memory_space<vmem>>, %arg13: memref<1x64xf32, #tpu.memory_space<vmem>>, %arg14: memref<64x4xf32, #tpu.memory_space<vmem>>, %arg15: memref<1x4xf32, #tpu.memory_space<vmem>>, %arg16: memref<2x4xf32, #tpu.memory_space<vmem>>) attributes {dimension_semantics = [#tpu.dimension_semantics<parallel>], iteration_bounds = array<i64: 1>, scalar_prefetch = 0 : i64, scratch_operands = 0 : i64, tpu.core_type = #tpu.core_type<tc>, window_params = [{transform_indices = @transform_0, window_bounds = array<i64: 2, 10, 10, 20>}, {pipeline_mode = #tpu.pipeline_mode<synchronous>, transform_indices = @transform_1, window_bounds = array<i64: 125, 16>}, {pipeline_mode = #tpu.pipeline_mode<synchronous>, transform_indices = @transform_2, window_bounds = array<i64: 1, 16>}, {pipeline_mode = #tpu.pipeline_mode<synchronous>, transform_indices = @transform_3, window_bounds = array<i64: 400, 32>}, {pipeline_mode = #tpu.pipeline_mode<synchronous>, transform_indices = @transform_4, window_bounds = array<i64: 1, 32>}, {pipeline_mode = #tpu.pipeline_mode<synchronous>, transform_indices = @transform_5, window_bounds = array<i64: 800, 64>}, {pipeline_mode = #tpu.pipeline_mode<synchronous>, transform_indices = @transform_6, window_bounds = array<i64: 1, 64>}, {pipeline_mode = #tpu.pipeline_mode<synchronous>, transform_indices = @transform_7, window_bounds = array<i64: 64, 64>}, {pipeline_mode = #tpu.pipeline_mode<synchronous>, transform_indices = @transform_8, window_bounds = array<i64: 1, 64>}, {pipeline_mode = #tpu.pipeline_mode<synchronous>, transform_indices = @transform_9, window_bounds = array<i64: 64, 64>}, {pipeline_mode = #tpu.pipeline_mode<synchronous>, transform_indices = @transform_10, window_bounds = array<i64: 1, 64>}, {pipeline_mode = #tpu.pipeline_mode<synchronous>, transform_indices = @transform_11, window_bounds = array<i64: 64, 64>}, {pipeline_mode = #tpu.pipeline_mode<synchronous>, transform_indices = @transform_12, window_bounds = array<i64: 1, 64>}, {pipeline_mode = #tpu.pipeline_mode<synchronous>, transform_indices = @transform_13, window_bounds = array<i64: 64, 4>}, {pipeline_mode = #tpu.pipeline_mode<synchronous>, transform_indices = @transform_14, window_bounds = array<i64: 1, 4>}, {transform_indices = @transform_15, window_bounds = array<i64: 2, 4>}]} {
    %c0 = arith.constant 0 : index
    %c0_0 = arith.constant 0 : index
    %c0_1 = arith.constant 0 : index
    %c0_2 = arith.constant 0 : index
    %0 = vector.load %arg1[%c0, %c0_0, %c0_1, %c0_2] : memref<2x10x10x20xf32, #tpu.memory_space<vmem>>, vector<2x10x10x20xf32>
    %1 = vector.extract_strided_slice %0 {offsets = [0, 0, 0, 0], sizes = [2, 8, 8, 5], strides = [1, 1, 1, 1]} : vector<2x10x10x20xf32> to vector<2x8x8x5xf32>
    %2 = vector.extract_strided_slice %0 {offsets = [0, 0, 0, 5], sizes = [2, 8, 8, 5], strides = [1, 1, 1, 1]} : vector<2x10x10x20xf32> to vector<2x8x8x5xf32>
    %3 = vector.extract_strided_slice %0 {offsets = [0, 0, 1, 0], sizes = [2, 8, 8, 5], strides = [1, 1, 1, 1]} : vector<2x10x10x20xf32> to vector<2x8x8x5xf32>
    %4 = vector.extract_strided_slice %0 {offsets = [0, 0, 1, 5], sizes = [2, 8, 8, 5], strides = [1, 1, 1, 1]} : vector<2x10x10x20xf32> to vector<2x8x8x5xf32>
    %5 = vector.extract_strided_slice %0 {offsets = [0, 0, 2, 0], sizes = [2, 8, 8, 5], strides = [1, 1, 1, 1]} : vector<2x10x10x20xf32> to vector<2x8x8x5xf32>
    %6 = vector.extract_strided_slice %0 {offsets = [0, 0, 0, 10], sizes = [2, 8, 8, 5], strides = [1, 1, 1, 1]} : vector<2x10x10x20xf32> to vector<2x8x8x5xf32>
    %7 = vector.extract_strided_slice %0 {offsets = [0, 0, 0, 15], sizes = [2, 8, 8, 5], strides = [1, 1, 1, 1]} : vector<2x10x10x20xf32> to vector<2x8x8x5xf32>
    %8 = vector.extract_strided_slice %0 {offsets = [0, 0, 1, 10], sizes = [2, 8, 8, 5], strides = [1, 1, 1, 1]} : vector<2x10x10x20xf32> to vector<2x8x8x5xf32>
    %9 = vector.extract_strided_slice %0 {offsets = [0, 0, 1, 15], sizes = [2, 8, 8, 5], strides = [1, 1, 1, 1]} : vector<2x10x10x20xf32> to vector<2x8x8x5xf32>
    %10 = vector.extract_strided_slice %0 {offsets = [0, 0, 2, 10], sizes = [2, 8, 8, 5], strides = [1, 1, 1, 1]} : vector<2x10x10x20xf32> to vector<2x8x8x5xf32>
    %11 = vector.extract_strided_slice %0 {offsets = [0, 1, 0, 0], sizes = [2, 8, 8, 5], strides = [1, 1, 1, 1]} : vector<2x10x10x20xf32> to vector<2x8x8x5xf32>
    %12 = vector.extract_strided_slice %0 {offsets = [0, 1, 0, 5], sizes = [2, 8, 8, 5], strides = [1, 1, 1, 1]} : vector<2x10x10x20xf32> to vector<2x8x8x5xf32>
    %13 = vector.extract_strided_slice %0 {offsets = [0, 1, 1, 0], sizes = [2, 8, 8, 5], strides = [1, 1, 1, 1]} : vector<2x10x10x20xf32> to vector<2x8x8x5xf32>
    %14 = vector.extract_strided_slice %0 {offsets = [0, 1, 1, 5], sizes = [2, 8, 8, 5], strides = [1, 1, 1, 1]} : vector<2x10x10x20xf32> to vector<2x8x8x5xf32>
    %15 = vector.extract_strided_slice %0 {offsets = [0, 1, 2, 0], sizes = [2, 8, 8, 5], strides = [1, 1, 1, 1]} : vector<2x10x10x20xf32> to vector<2x8x8x5xf32>
    %16 = vector.extract_strided_slice %0 {offsets = [0, 1, 0, 10], sizes = [2, 8, 8, 5], strides = [1, 1, 1, 1]} : vector<2x10x10x20xf32> to vector<2x8x8x5xf32>
    %17 = vector.extract_strided_slice %0 {offsets = [0, 1, 0, 15], sizes = [2, 8, 8, 5], strides = [1, 1, 1, 1]} : vector<2x10x10x20xf32> to vector<2x8x8x5xf32>
    %18 = vector.extract_strided_slice %0 {offsets = [0, 1, 1, 10], sizes = [2, 8, 8, 5], strides = [1, 1, 1, 1]} : vector<2x10x10x20xf32> to vector<2x8x8x5xf32>
    %19 = vector.extract_strided_slice %0 {offsets = [0, 1, 1, 15], sizes = [2, 8, 8, 5], strides = [1, 1, 1, 1]} : vector<2x10x10x20xf32> to vector<2x8x8x5xf32>
    %20 = vector.extract_strided_slice %0 {offsets = [0, 1, 2, 10], sizes = [2, 8, 8, 5], strides = [1, 1, 1, 1]} : vector<2x10x10x20xf32> to vector<2x8x8x5xf32>
    %21 = vector.extract_strided_slice %0 {offsets = [0, 2, 0, 0], sizes = [2, 8, 8, 5], strides = [1, 1, 1, 1]} : vector<2x10x10x20xf32> to vector<2x8x8x5xf32>
    %22 = vector.extract_strided_slice %0 {offsets = [0, 2, 0, 5], sizes = [2, 8, 8, 5], strides = [1, 1, 1, 1]} : vector<2x10x10x20xf32> to vector<2x8x8x5xf32>
    %23 = vector.extract_strided_slice %0 {offsets = [0, 2, 1, 0], sizes = [2, 8, 8, 5], strides = [1, 1, 1, 1]} : vector<2x10x10x20xf32> to vector<2x8x8x5xf32>
    %24 = vector.extract_strided_slice %0 {offsets = [0, 2, 1, 5], sizes = [2, 8, 8, 5], strides = [1, 1, 1, 1]} : vector<2x10x10x20xf32> to vector<2x8x8x5xf32>
    %25 = vector.extract_strided_slice %0 {offsets = [0, 2, 2, 0], sizes = [2, 8, 8, 5], strides = [1, 1, 1, 1]} : vector<2x10x10x20xf32> to vector<2x8x8x5xf32>
    %26 = tpu.concatenate %1, %2, %3, %4, %5, %6, %7, %8, %9, %10, %11, %12, %13, %14, %15, %16 in 3 : vector<2x8x8x5xf32>, vector<2x8x8x5xf32>, vector<2x8x8x5xf32>, vector<2x8x8x5xf32>, vector<2x8x8x5xf32>, vector<2x8x8x5xf32>, vector<2x8x8x5xf32>, vector<2x8x8x5xf32>, vector<2x8x8x5xf32>, vector<2x8x8x5xf32>, vector<2x8x8x5xf32>, vector<2x8x8x5xf32>, vector<2x8x8x5xf32>, vector<2x8x8x5xf32>, vector<2x8x8x5xf32>, vector<2x8x8x5xf32> -> vector<2x8x8x80xf32>
    %27 = tpu.concatenate %17, %18, %19, %20, %21, %22, %23, %24, %25 in 3 : vector<2x8x8x5xf32>, vector<2x8x8x5xf32>, vector<2x8x8x5xf32>, vector<2x8x8x5xf32>, vector<2x8x8x5xf32>, vector<2x8x8x5xf32>, vector<2x8x8x5xf32>, vector<2x8x8x5xf32>, vector<2x8x8x5xf32> -> vector<2x8x8x45xf32>
    %28 = tpu.concatenate %26, %27 in 3 : vector<2x8x8x80xf32>, vector<2x8x8x45xf32> -> vector<2x8x8x125xf32>
    %29 = vector.shape_cast %28 : vector<2x8x8x125xf32> to vector<128x125xf32>
    %c0_3 = arith.constant 0 : index
    %c0_4 = arith.constant 0 : index
    %30 = vector.load %arg2[%c0_3, %c0_4] : memref<125x16xf32, #tpu.memory_space<vmem>>, vector<125x16xf32>
    %cst = arith.constant dense<0.000000e+00> : vector<128x16xf32>
    %31 = tpu.matmul %29, %30, %cst {dimension_numbers = #tpu.dot_dimension_numbers<[1], [0], [0], [1], [0, 0, 1, 1], [], []>} : vector<128x125xf32>, vector<125x16xf32>, vector<128x16xf32> -> vector<128x16xf32>
    %c0_5 = arith.constant 0 : index
    %c0_6 = arith.constant 0 : index
    %32 = vector.load %arg3[%c0_5, %c0_6] : memref<1x16xf32, #tpu.memory_space<vmem>>, vector<1x16xf32>
    %33 = vector.broadcast %32 : vector<1x16xf32> to vector<128x16xf32>
    %34 = arith.addf %31, %33 : vector<128x16xf32>
    %cst_7 = arith.constant 0.000000e+00 : f32
    %35 = vector.broadcast %cst_7 : f32 to vector<128x16xf32>
    %36 = arith.maximumf %34, %35 : vector<128x16xf32>
    %37 = vector.shape_cast %36 : vector<128x16xf32> to vector<2x8x8x16xf32>
    %cst_8 = arith.constant 0.000000e+00 : f32
    %38 = vector.broadcast %cst_8 : f32 to vector<2x2x8x16xf32>
    %cst_9 = arith.constant 0.000000e+00 : f32
    %39 = vector.broadcast %cst_9 : f32 to vector<2x12x2x16xf32>
    %40 = tpu.concatenate %38, %37, %38 in 1 : vector<2x2x8x16xf32>, vector<2x8x8x16xf32>, vector<2x2x8x16xf32> -> vector<2x12x8x16xf32>
    %41 = tpu.concatenate %39, %40, %39 in 2 : vector<2x12x2x16xf32>, vector<2x12x8x16xf32>, vector<2x12x2x16xf32> -> vector<2x12x12x16xf32>
    %42 = vector.extract_strided_slice %41 {offsets = [0, 0, 0, 0], sizes = [2, 8, 8, 16], strides = [1, 1, 1, 1]} : vector<2x12x12x16xf32> to vector<2x8x8x16xf32>
    %43 = vector.extract_strided_slice %41 {offsets = [0, 0, 1, 0], sizes = [2, 8, 8, 16], strides = [1, 1, 1, 1]} : vector<2x12x12x16xf32> to vector<2x8x8x16xf32>
    %44 = vector.extract_strided_slice %41 {offsets = [0, 0, 2, 0], sizes = [2, 8, 8, 16], strides = [1, 1, 1, 1]} : vector<2x12x12x16xf32> to vector<2x8x8x16xf32>
    %45 = vector.extract_strided_slice %41 {offsets = [0, 0, 3, 0], sizes = [2, 8, 8, 16], strides = [1, 1, 1, 1]} : vector<2x12x12x16xf32> to vector<2x8x8x16xf32>
    %46 = vector.extract_strided_slice %41 {offsets = [0, 0, 4, 0], sizes = [2, 8, 8, 16], strides = [1, 1, 1, 1]} : vector<2x12x12x16xf32> to vector<2x8x8x16xf32>
    %47 = vector.extract_strided_slice %41 {offsets = [0, 1, 0, 0], sizes = [2, 8, 8, 16], strides = [1, 1, 1, 1]} : vector<2x12x12x16xf32> to vector<2x8x8x16xf32>
    %48 = vector.extract_strided_slice %41 {offsets = [0, 1, 1, 0], sizes = [2, 8, 8, 16], strides = [1, 1, 1, 1]} : vector<2x12x12x16xf32> to vector<2x8x8x16xf32>
    %49 = vector.extract_strided_slice %41 {offsets = [0, 1, 2, 0], sizes = [2, 8, 8, 16], strides = [1, 1, 1, 1]} : vector<2x12x12x16xf32> to vector<2x8x8x16xf32>
    %50 = vector.extract_strided_slice %41 {offsets = [0, 1, 3, 0], sizes = [2, 8, 8, 16], strides = [1, 1, 1, 1]} : vector<2x12x12x16xf32> to vector<2x8x8x16xf32>
    %51 = vector.extract_strided_slice %41 {offsets = [0, 1, 4, 0], sizes = [2, 8, 8, 16], strides = [1, 1, 1, 1]} : vector<2x12x12x16xf32> to vector<2x8x8x16xf32>
    %52 = vector.extract_strided_slice %41 {offsets = [0, 2, 0, 0], sizes = [2, 8, 8, 16], strides = [1, 1, 1, 1]} : vector<2x12x12x16xf32> to vector<2x8x8x16xf32>
    %53 = vector.extract_strided_slice %41 {offsets = [0, 2, 1, 0], sizes = [2, 8, 8, 16], strides = [1, 1, 1, 1]} : vector<2x12x12x16xf32> to vector<2x8x8x16xf32>
    %54 = vector.extract_strided_slice %41 {offsets = [0, 2, 2, 0], sizes = [2, 8, 8, 16], strides = [1, 1, 1, 1]} : vector<2x12x12x16xf32> to vector<2x8x8x16xf32>
    %55 = vector.extract_strided_slice %41 {offsets = [0, 2, 3, 0], sizes = [2, 8, 8, 16], strides = [1, 1, 1, 1]} : vector<2x12x12x16xf32> to vector<2x8x8x16xf32>
    %56 = vector.extract_strided_slice %41 {offsets = [0, 2, 4, 0], sizes = [2, 8, 8, 16], strides = [1, 1, 1, 1]} : vector<2x12x12x16xf32> to vector<2x8x8x16xf32>
    %57 = vector.extract_strided_slice %41 {offsets = [0, 3, 0, 0], sizes = [2, 8, 8, 16], strides = [1, 1, 1, 1]} : vector<2x12x12x16xf32> to vector<2x8x8x16xf32>
    %58 = vector.extract_strided_slice %41 {offsets = [0, 3, 1, 0], sizes = [2, 8, 8, 16], strides = [1, 1, 1, 1]} : vector<2x12x12x16xf32> to vector<2x8x8x16xf32>
    %59 = vector.extract_strided_slice %41 {offsets = [0, 3, 2, 0], sizes = [2, 8, 8, 16], strides = [1, 1, 1, 1]} : vector<2x12x12x16xf32> to vector<2x8x8x16xf32>
    %60 = vector.extract_strided_slice %41 {offsets = [0, 3, 3, 0], sizes = [2, 8, 8, 16], strides = [1, 1, 1, 1]} : vector<2x12x12x16xf32> to vector<2x8x8x16xf32>
    %61 = vector.extract_strided_slice %41 {offsets = [0, 3, 4, 0], sizes = [2, 8, 8, 16], strides = [1, 1, 1, 1]} : vector<2x12x12x16xf32> to vector<2x8x8x16xf32>
    %62 = vector.extract_strided_slice %41 {offsets = [0, 4, 0, 0], sizes = [2, 8, 8, 16], strides = [1, 1, 1, 1]} : vector<2x12x12x16xf32> to vector<2x8x8x16xf32>
    %63 = vector.extract_strided_slice %41 {offsets = [0, 4, 1, 0], sizes = [2, 8, 8, 16], strides = [1, 1, 1, 1]} : vector<2x12x12x16xf32> to vector<2x8x8x16xf32>
    %64 = vector.extract_strided_slice %41 {offsets = [0, 4, 2, 0], sizes = [2, 8, 8, 16], strides = [1, 1, 1, 1]} : vector<2x12x12x16xf32> to vector<2x8x8x16xf32>
    %65 = vector.extract_strided_slice %41 {offsets = [0, 4, 3, 0], sizes = [2, 8, 8, 16], strides = [1, 1, 1, 1]} : vector<2x12x12x16xf32> to vector<2x8x8x16xf32>
    %66 = vector.extract_strided_slice %41 {offsets = [0, 4, 4, 0], sizes = [2, 8, 8, 16], strides = [1, 1, 1, 1]} : vector<2x12x12x16xf32> to vector<2x8x8x16xf32>
    %67 = tpu.concatenate %42, %43, %44, %45, %46, %47, %48, %49, %50, %51, %52, %53, %54, %55, %56, %57 in 3 : vector<2x8x8x16xf32>, vector<2x8x8x16xf32>, vector<2x8x8x16xf32>, vector<2x8x8x16xf32>, vector<2x8x8x16xf32>, vector<2x8x8x16xf32>, vector<2x8x8x16xf32>, vector<2x8x8x16xf32>, vector<2x8x8x16xf32>, vector<2x8x8x16xf32>, vector<2x8x8x16xf32>, vector<2x8x8x16xf32>, vector<2x8x8x16xf32>, vector<2x8x8x16xf32>, vector<2x8x8x16xf32>, vector<2x8x8x16xf32> -> vector<2x8x8x256xf32>
    %68 = tpu.concatenate %58, %59, %60, %61, %62, %63, %64, %65, %66 in 3 : vector<2x8x8x16xf32>, vector<2x8x8x16xf32>, vector<2x8x8x16xf32>, vector<2x8x8x16xf32>, vector<2x8x8x16xf32>, vector<2x8x8x16xf32>, vector<2x8x8x16xf32>, vector<2x8x8x16xf32>, vector<2x8x8x16xf32> -> vector<2x8x8x144xf32>
    %69 = tpu.concatenate %67, %68 in 3 : vector<2x8x8x256xf32>, vector<2x8x8x144xf32> -> vector<2x8x8x400xf32>
    %70 = vector.shape_cast %69 : vector<2x8x8x400xf32> to vector<128x400xf32>
    %c0_10 = arith.constant 0 : index
    %c0_11 = arith.constant 0 : index
    %71 = vector.load %arg4[%c0_10, %c0_11] : memref<400x32xf32, #tpu.memory_space<vmem>>, vector<400x32xf32>
    %cst_12 = arith.constant dense<0.000000e+00> : vector<128x32xf32>
    %72 = tpu.matmul %70, %71, %cst_12 {dimension_numbers = #tpu.dot_dimension_numbers<[1], [0], [0], [1], [0, 0, 1, 1], [], []>} : vector<128x400xf32>, vector<400x32xf32>, vector<128x32xf32> -> vector<128x32xf32>
    %c0_13 = arith.constant 0 : index
    %c0_14 = arith.constant 0 : index
    %73 = vector.load %arg5[%c0_13, %c0_14] : memref<1x32xf32, #tpu.memory_space<vmem>>, vector<1x32xf32>
    %74 = vector.broadcast %73 : vector<1x32xf32> to vector<128x32xf32>
    %75 = arith.addf %72, %74 : vector<128x32xf32>
    %cst_15 = arith.constant 0.000000e+00 : f32
    %76 = vector.broadcast %cst_15 : f32 to vector<128x32xf32>
    %77 = arith.maximumf %75, %76 : vector<128x32xf32>
    %78 = vector.shape_cast %77 : vector<128x32xf32> to vector<2x8x8x32xf32>
    %cst_16 = arith.constant 0.000000e+00 : f32
    %79 = vector.broadcast %cst_16 : f32 to vector<2x2x8x32xf32>
    %cst_17 = arith.constant 0.000000e+00 : f32
    %80 = vector.broadcast %cst_17 : f32 to vector<2x12x2x32xf32>
    %81 = tpu.concatenate %79, %78, %79 in 1 : vector<2x2x8x32xf32>, vector<2x8x8x32xf32>, vector<2x2x8x32xf32> -> vector<2x12x8x32xf32>
    %82 = tpu.concatenate %80, %81, %80 in 2 : vector<2x12x2x32xf32>, vector<2x12x8x32xf32>, vector<2x12x2x32xf32> -> vector<2x12x12x32xf32>
    %83 = vector.extract_strided_slice %82 {offsets = [0, 0, 0, 0], sizes = [2, 8, 8, 32], strides = [1, 1, 1, 1]} : vector<2x12x12x32xf32> to vector<2x8x8x32xf32>
    %84 = vector.extract_strided_slice %82 {offsets = [0, 0, 1, 0], sizes = [2, 8, 8, 32], strides = [1, 1, 1, 1]} : vector<2x12x12x32xf32> to vector<2x8x8x32xf32>
    %85 = vector.extract_strided_slice %82 {offsets = [0, 0, 2, 0], sizes = [2, 8, 8, 32], strides = [1, 1, 1, 1]} : vector<2x12x12x32xf32> to vector<2x8x8x32xf32>
    %86 = vector.extract_strided_slice %82 {offsets = [0, 0, 3, 0], sizes = [2, 8, 8, 32], strides = [1, 1, 1, 1]} : vector<2x12x12x32xf32> to vector<2x8x8x32xf32>
    %87 = vector.extract_strided_slice %82 {offsets = [0, 0, 4, 0], sizes = [2, 8, 8, 32], strides = [1, 1, 1, 1]} : vector<2x12x12x32xf32> to vector<2x8x8x32xf32>
    %88 = vector.extract_strided_slice %82 {offsets = [0, 1, 0, 0], sizes = [2, 8, 8, 32], strides = [1, 1, 1, 1]} : vector<2x12x12x32xf32> to vector<2x8x8x32xf32>
    %89 = vector.extract_strided_slice %82 {offsets = [0, 1, 1, 0], sizes = [2, 8, 8, 32], strides = [1, 1, 1, 1]} : vector<2x12x12x32xf32> to vector<2x8x8x32xf32>
    %90 = vector.extract_strided_slice %82 {offsets = [0, 1, 2, 0], sizes = [2, 8, 8, 32], strides = [1, 1, 1, 1]} : vector<2x12x12x32xf32> to vector<2x8x8x32xf32>
    %91 = vector.extract_strided_slice %82 {offsets = [0, 1, 3, 0], sizes = [2, 8, 8, 32], strides = [1, 1, 1, 1]} : vector<2x12x12x32xf32> to vector<2x8x8x32xf32>
    %92 = vector.extract_strided_slice %82 {offsets = [0, 1, 4, 0], sizes = [2, 8, 8, 32], strides = [1, 1, 1, 1]} : vector<2x12x12x32xf32> to vector<2x8x8x32xf32>
    %93 = vector.extract_strided_slice %82 {offsets = [0, 2, 0, 0], sizes = [2, 8, 8, 32], strides = [1, 1, 1, 1]} : vector<2x12x12x32xf32> to vector<2x8x8x32xf32>
    %94 = vector.extract_strided_slice %82 {offsets = [0, 2, 1, 0], sizes = [2, 8, 8, 32], strides = [1, 1, 1, 1]} : vector<2x12x12x32xf32> to vector<2x8x8x32xf32>
    %95 = vector.extract_strided_slice %82 {offsets = [0, 2, 2, 0], sizes = [2, 8, 8, 32], strides = [1, 1, 1, 1]} : vector<2x12x12x32xf32> to vector<2x8x8x32xf32>
    %96 = vector.extract_strided_slice %82 {offsets = [0, 2, 3, 0], sizes = [2, 8, 8, 32], strides = [1, 1, 1, 1]} : vector<2x12x12x32xf32> to vector<2x8x8x32xf32>
    %97 = vector.extract_strided_slice %82 {offsets = [0, 2, 4, 0], sizes = [2, 8, 8, 32], strides = [1, 1, 1, 1]} : vector<2x12x12x32xf32> to vector<2x8x8x32xf32>
    %98 = vector.extract_strided_slice %82 {offsets = [0, 3, 0, 0], sizes = [2, 8, 8, 32], strides = [1, 1, 1, 1]} : vector<2x12x12x32xf32> to vector<2x8x8x32xf32>
    %99 = vector.extract_strided_slice %82 {offsets = [0, 3, 1, 0], sizes = [2, 8, 8, 32], strides = [1, 1, 1, 1]} : vector<2x12x12x32xf32> to vector<2x8x8x32xf32>
    %100 = vector.extract_strided_slice %82 {offsets = [0, 3, 2, 0], sizes = [2, 8, 8, 32], strides = [1, 1, 1, 1]} : vector<2x12x12x32xf32> to vector<2x8x8x32xf32>
    %101 = vector.extract_strided_slice %82 {offsets = [0, 3, 3, 0], sizes = [2, 8, 8, 32], strides = [1, 1, 1, 1]} : vector<2x12x12x32xf32> to vector<2x8x8x32xf32>
    %102 = vector.extract_strided_slice %82 {offsets = [0, 3, 4, 0], sizes = [2, 8, 8, 32], strides = [1, 1, 1, 1]} : vector<2x12x12x32xf32> to vector<2x8x8x32xf32>
    %103 = vector.extract_strided_slice %82 {offsets = [0, 4, 0, 0], sizes = [2, 8, 8, 32], strides = [1, 1, 1, 1]} : vector<2x12x12x32xf32> to vector<2x8x8x32xf32>
    %104 = vector.extract_strided_slice %82 {offsets = [0, 4, 1, 0], sizes = [2, 8, 8, 32], strides = [1, 1, 1, 1]} : vector<2x12x12x32xf32> to vector<2x8x8x32xf32>
    %105 = vector.extract_strided_slice %82 {offsets = [0, 4, 2, 0], sizes = [2, 8, 8, 32], strides = [1, 1, 1, 1]} : vector<2x12x12x32xf32> to vector<2x8x8x32xf32>
    %106 = vector.extract_strided_slice %82 {offsets = [0, 4, 3, 0], sizes = [2, 8, 8, 32], strides = [1, 1, 1, 1]} : vector<2x12x12x32xf32> to vector<2x8x8x32xf32>
    %107 = vector.extract_strided_slice %82 {offsets = [0, 4, 4, 0], sizes = [2, 8, 8, 32], strides = [1, 1, 1, 1]} : vector<2x12x12x32xf32> to vector<2x8x8x32xf32>
    %108 = tpu.concatenate %83, %84, %85, %86, %87, %88, %89, %90, %91, %92, %93, %94, %95, %96, %97, %98 in 3 : vector<2x8x8x32xf32>, vector<2x8x8x32xf32>, vector<2x8x8x32xf32>, vector<2x8x8x32xf32>, vector<2x8x8x32xf32>, vector<2x8x8x32xf32>, vector<2x8x8x32xf32>, vector<2x8x8x32xf32>, vector<2x8x8x32xf32>, vector<2x8x8x32xf32>, vector<2x8x8x32xf32>, vector<2x8x8x32xf32>, vector<2x8x8x32xf32>, vector<2x8x8x32xf32>, vector<2x8x8x32xf32>, vector<2x8x8x32xf32> -> vector<2x8x8x512xf32>
    %109 = tpu.concatenate %99, %100, %101, %102, %103, %104, %105, %106, %107 in 3 : vector<2x8x8x32xf32>, vector<2x8x8x32xf32>, vector<2x8x8x32xf32>, vector<2x8x8x32xf32>, vector<2x8x8x32xf32>, vector<2x8x8x32xf32>, vector<2x8x8x32xf32>, vector<2x8x8x32xf32>, vector<2x8x8x32xf32> -> vector<2x8x8x288xf32>
    %110 = tpu.concatenate %108, %109 in 3 : vector<2x8x8x512xf32>, vector<2x8x8x288xf32> -> vector<2x8x8x800xf32>
    %111 = vector.shape_cast %110 : vector<2x8x8x800xf32> to vector<128x800xf32>
    %c0_18 = arith.constant 0 : index
    %c0_19 = arith.constant 0 : index
    %112 = vector.load %arg6[%c0_18, %c0_19] : memref<800x64xf32, #tpu.memory_space<vmem>>, vector<800x64xf32>
    %cst_20 = arith.constant dense<0.000000e+00> : vector<128x64xf32>
    %113 = tpu.matmul %111, %112, %cst_20 {dimension_numbers = #tpu.dot_dimension_numbers<[1], [0], [0], [1], [0, 0, 1, 1], [], []>} : vector<128x800xf32>, vector<800x64xf32>, vector<128x64xf32> -> vector<128x64xf32>
    %c0_21 = arith.constant 0 : index
    %c0_22 = arith.constant 0 : index
    %114 = vector.load %arg7[%c0_21, %c0_22] : memref<1x64xf32, #tpu.memory_space<vmem>>, vector<1x64xf32>
    %115 = vector.broadcast %114 : vector<1x64xf32> to vector<128x64xf32>
    %116 = arith.addf %113, %115 : vector<128x64xf32>
    %cst_23 = arith.constant 0.000000e+00 : f32
    %117 = vector.broadcast %cst_23 : f32 to vector<128x64xf32>
    %118 = arith.maximumf %116, %117 : vector<128x64xf32>
    %c0_24 = arith.constant 0 : index
    %c0_25 = arith.constant 0 : index
    %119 = vector.load %arg8[%c0_24, %c0_25] : memref<64x64xf32, #tpu.memory_space<vmem>>, vector<64x64xf32>
    %cst_26 = arith.constant dense<0.000000e+00> : vector<128x64xf32>
    %120 = tpu.matmul %118, %119, %cst_26 {dimension_numbers = #tpu.dot_dimension_numbers<[1], [0], [0], [1], [0, 0, 1, 1], [], []>} : vector<128x64xf32>, vector<64x64xf32>, vector<128x64xf32> -> vector<128x64xf32>
    %c0_27 = arith.constant 0 : index
    %c0_28 = arith.constant 0 : index
    %121 = vector.load %arg9[%c0_27, %c0_28] : memref<1x64xf32, #tpu.memory_space<vmem>>, vector<1x64xf32>
    %122 = vector.broadcast %121 : vector<1x64xf32> to vector<128x64xf32>
    %123 = arith.addf %120, %122 : vector<128x64xf32>
    %cst_29 = arith.constant 0.000000e+00 : f32
    %124 = vector.broadcast %cst_29 : f32 to vector<128x64xf32>
    %125 = arith.maximumf %123, %124 : vector<128x64xf32>
    %c0_30 = arith.constant 0 : index
    %c0_31 = arith.constant 0 : index
    %126 = vector.load %arg10[%c0_30, %c0_31] : memref<64x64xf32, #tpu.memory_space<vmem>>, vector<64x64xf32>
    %cst_32 = arith.constant dense<0.000000e+00> : vector<128x64xf32>
    %127 = tpu.matmul %125, %126, %cst_32 {dimension_numbers = #tpu.dot_dimension_numbers<[1], [0], [0], [1], [0, 0, 1, 1], [], []>} : vector<128x64xf32>, vector<64x64xf32>, vector<128x64xf32> -> vector<128x64xf32>
    %c0_33 = arith.constant 0 : index
    %c0_34 = arith.constant 0 : index
    %128 = vector.load %arg11[%c0_33, %c0_34] : memref<1x64xf32, #tpu.memory_space<vmem>>, vector<1x64xf32>
    %129 = vector.broadcast %128 : vector<1x64xf32> to vector<128x64xf32>
    %130 = arith.addf %127, %129 : vector<128x64xf32>
    %cst_35 = arith.constant 0.000000e+00 : f32
    %131 = vector.broadcast %cst_35 : f32 to vector<128x64xf32>
    %132 = arith.maximumf %130, %131 : vector<128x64xf32>
    %133 = vector.shape_cast %132 : vector<128x64xf32> to vector<2x64x64xf32>
    %cst_36 = arith.constant dense<0xFF800000> : vector<2x64xf32>
    %134 = vector.multi_reduction <maximumf>, %133, %cst_36 [1] : vector<2x64x64xf32> to vector<2x64xf32>
    %c0_37 = arith.constant 0 : index
    %c0_38 = arith.constant 0 : index
    %135 = vector.load %arg12[%c0_37, %c0_38] : memref<64x64xf32, #tpu.memory_space<vmem>>, vector<64x64xf32>
    %cst_39 = arith.constant dense<0.000000e+00> : vector<2x64xf32>
    %136 = tpu.matmul %134, %135, %cst_39 {dimension_numbers = #tpu.dot_dimension_numbers<[1], [0], [0], [1], [0, 0, 1, 1], [], []>} : vector<2x64xf32>, vector<64x64xf32>, vector<2x64xf32> -> vector<2x64xf32>
    %c0_40 = arith.constant 0 : index
    %c0_41 = arith.constant 0 : index
    %137 = vector.load %arg13[%c0_40, %c0_41] : memref<1x64xf32, #tpu.memory_space<vmem>>, vector<1x64xf32>
    %138 = vector.broadcast %137 : vector<1x64xf32> to vector<2x64xf32>
    %139 = arith.addf %136, %138 : vector<2x64xf32>
    %cst_42 = arith.constant 0.000000e+00 : f32
    %140 = vector.broadcast %cst_42 : f32 to vector<2x64xf32>
    %141 = arith.maximumf %139, %140 : vector<2x64xf32>
    %c0_43 = arith.constant 0 : index
    %c0_44 = arith.constant 0 : index
    %142 = vector.load %arg14[%c0_43, %c0_44] : memref<64x4xf32, #tpu.memory_space<vmem>>, vector<64x4xf32>
    %cst_45 = arith.constant dense<0.000000e+00> : vector<2x4xf32>
    %143 = tpu.matmul %141, %142, %cst_45 {dimension_numbers = #tpu.dot_dimension_numbers<[1], [0], [0], [1], [0, 0, 1, 1], [], []>} : vector<2x64xf32>, vector<64x4xf32>, vector<2x4xf32> -> vector<2x4xf32>
    %c0_46 = arith.constant 0 : index
    %c0_47 = arith.constant 0 : index
    %144 = vector.load %arg15[%c0_46, %c0_47] : memref<1x4xf32, #tpu.memory_space<vmem>>, vector<1x4xf32>
    %145 = vector.broadcast %144 : vector<1x4xf32> to vector<2x4xf32>
    %146 = arith.addf %143, %145 : vector<2x4xf32>
    %cst_48 = arith.constant 0.000000e+00 : f32
    %147 = vector.broadcast %cst_48 : f32 to vector<2x4xf32>
    %148 = arith.subf %147, %146 : vector<2x4xf32>
    %149 = math.exp %148 : vector<2x4xf32>
    %cst_49 = arith.constant 1.000000e+00 : f32
    %150 = vector.broadcast %cst_49 : f32 to vector<2x4xf32>
    %151 = arith.addf %150, %149 : vector<2x4xf32>
    %cst_50 = arith.constant 1.000000e+00 : f32
    %152 = vector.broadcast %cst_50 : f32 to vector<2x4xf32>
    %153 = arith.divf %152, %151 : vector<2x4xf32>
    %c0_51 = arith.constant 0 : index
    %c0_52 = arith.constant 0 : index
    %154 = vector.load %arg16[%c0_51, %c0_52] : memref<2x4xf32, #tpu.memory_space<vmem>>, vector<2x4xf32>
    tpu.vector_store %arg16[%c0_51, %c0_52], %153 {strides = array<i32>} : memref<2x4xf32, #tpu.memory_space<vmem>>, vector<2x4xf32>,
    return
  }
  func.func @transform_0(%arg0: i32) -> (i32, i32, i32, i32) {
    %c0_i32 = arith.constant 0 : i32
    %c0_i32_0 = arith.constant 0 : i32
    %c0_i32_1 = arith.constant 0 : i32
    %c0_i32_2 = arith.constant 0 : i32
    return %arg0, %c0_i32, %c0_i32_0, %c0_i32_1 : i32, i32, i32, i32
  }
  func.func @transform_1(%arg0: i32) -> (i32, i32) {
    %c0_i32 = arith.constant 0 : i32
    %c0_i32_0 = arith.constant 0 : i32
    %c0_i32_1 = arith.constant 0 : i32
    return %c0_i32, %c0_i32_0 : i32, i32
  }
  func.func @transform_2(%arg0: i32) -> (i32, i32) {
    %c0_i32 = arith.constant 0 : i32
    %c0_i32_0 = arith.constant 0 : i32
    %c0_i32_1 = arith.constant 0 : i32
    return %c0_i32, %c0_i32_0 : i32, i32
  }
  func.func @transform_3(%arg0: i32) -> (i32, i32) {
    %c0_i32 = arith.constant 0 : i32
    %c0_i32_0 = arith.constant 0 : i32
    %c0_i32_1 = arith.constant 0 : i32
    return %c0_i32, %c0_i32_0 : i32, i32
  }
  func.func @transform_4(%arg0: i32) -> (i32, i32) {
    %c0_i32 = arith.constant 0 : i32
    %c0_i32_0 = arith.constant 0 : i32
    %c0_i32_1 = arith.constant 0 : i32
    return %c0_i32, %c0_i32_0 : i32, i32
  }
  func.func @transform_5(%arg0: i32) -> (i32, i32) {
    %c0_i32 = arith.constant 0 : i32
    %c0_i32_0 = arith.constant 0 : i32
    %c0_i32_1 = arith.constant 0 : i32
    return %c0_i32, %c0_i32_0 : i32, i32
  }
  func.func @transform_6(%arg0: i32) -> (i32, i32) {
    %c0_i32 = arith.constant 0 : i32
    %c0_i32_0 = arith.constant 0 : i32
    %c0_i32_1 = arith.constant 0 : i32
    return %c0_i32, %c0_i32_0 : i32, i32
  }
  func.func @transform_7(%arg0: i32) -> (i32, i32) {
    %c0_i32 = arith.constant 0 : i32
    %c0_i32_0 = arith.constant 0 : i32
    %c0_i32_1 = arith.constant 0 : i32
    return %c0_i32, %c0_i32_0 : i32, i32
  }
  func.func @transform_8(%arg0: i32) -> (i32, i32) {
    %c0_i32 = arith.constant 0 : i32
    %c0_i32_0 = arith.constant 0 : i32
    %c0_i32_1 = arith.constant 0 : i32
    return %c0_i32, %c0_i32_0 : i32, i32
  }
  func.func @transform_9(%arg0: i32) -> (i32, i32) {
    %c0_i32 = arith.constant 0 : i32
    %c0_i32_0 = arith.constant 0 : i32
    %c0_i32_1 = arith.constant 0 : i32
    return %c0_i32, %c0_i32_0 : i32, i32
  }
  func.func @transform_10(%arg0: i32) -> (i32, i32) {
    %c0_i32 = arith.constant 0 : i32
    %c0_i32_0 = arith.constant 0 : i32
    %c0_i32_1 = arith.constant 0 : i32
    return %c0_i32, %c0_i32_0 : i32, i32
  }
  func.func @transform_11(%arg0: i32) -> (i32, i32) {
    %c0_i32 = arith.constant 0 : i32
    %c0_i32_0 = arith.constant 0 : i32
    %c0_i32_1 = arith.constant 0 : i32
    return %c0_i32, %c0_i32_0 : i32, i32
  }
  func.func @transform_12(%arg0: i32) -> (i32, i32) {
    %c0_i32 = arith.constant 0 : i32
    %c0_i32_0 = arith.constant 0 : i32
    %c0_i32_1 = arith.constant 0 : i32
    return %c0_i32, %c0_i32_0 : i32, i32
  }
  func.func @transform_13(%arg0: i32) -> (i32, i32) {
    %c0_i32 = arith.constant 0 : i32
    %c0_i32_0 = arith.constant 0 : i32
    %c0_i32_1 = arith.constant 0 : i32
    return %c0_i32, %c0_i32_0 : i32, i32
  }
  func.func @transform_14(%arg0: i32) -> (i32, i32) {
    %c0_i32 = arith.constant 0 : i32
    %c0_i32_0 = arith.constant 0 : i32
    %c0_i32_1 = arith.constant 0 : i32
    return %c0_i32, %c0_i32_0 : i32, i32
  }
  func.func @transform_15(%arg0: i32) -> (i32, i32) {
    %c0_i32 = arith.constant 0 : i32
    %c0_i32_0 = arith.constant 0 : i32
    return %arg0, %c0_i32 : i32, i32
  }
}

</mosaic_0001>

<llo_original>
// kernel: tpu_custom_call.1
$region0: #{tpu_custom_call.1}
  #allocation0 [shape = 'u32[]', space=smem, size = 0x4, offset = 0x4, fixed_abs, tag = 'smem constant byte address 0x4 - core index']
  #allocation1 [shape = 'u32[72,128]{1,0:T(1,128)}', space=vmem, size = 0x9000, scoped, tag = 'internal scratch']
  %s0 = inlined_call_operand.vmem [shape: f32[2,10,10,20], index: 0, kind: input, shape index: {}]
  %s1 = inlined_call_operand.vmem [shape: f32[125,16], index: 1, kind: input, shape index: {}]
  %s2 = inlined_call_operand.vmem [shape: f32[1,16], index: 2, kind: input, shape index: {}]
  %s3 = inlined_call_operand.vmem [shape: f32[400,32], index: 3, kind: input, shape index: {}]
  %s4 = inlined_call_operand.vmem [shape: f32[1,32], index: 4, kind: input, shape index: {}]
  %s5 = inlined_call_operand.vmem [shape: f32[800,64], index: 5, kind: input, shape index: {}]
  %s6 = inlined_call_operand.vmem [shape: f32[1,64], index: 6, kind: input, shape index: {}]
  %s7 = inlined_call_operand.vmem [shape: f32[64,64], index: 7, kind: input, shape index: {}]
  %s8 = inlined_call_operand.vmem [shape: f32[1,64], index: 8, kind: input, shape index: {}]
  %s9 = inlined_call_operand.vmem [shape: f32[64,64], index: 9, kind: input, shape index: {}]
  %s10 = inlined_call_operand.vmem [shape: f32[1,64], index: 10, kind: input, shape index: {}]
  %s11 = inlined_call_operand.vmem [shape: f32[64,64], index: 11, kind: input, shape index: {}]
  %s12 = inlined_call_operand.vmem [shape: f32[1,64], index: 12, kind: input, shape index: {}]
  %s13 = inlined_call_operand.vmem [shape: f32[64,4], index: 13, kind: input, shape index: {}]
  %s14 = inlined_call_operand.vmem [shape: f32[1,4], index: 14, kind: input, shape index: {}]
  %s15 = inlined_call_operand.hbm [shape: f32[2,4], index: 15, kind: output, shape index: {}]
  %s16 = sld [smem:[#allocation0]]
  $region70: #{tpu_custom_call.1} parent=0
    _
  %s18 = ssub.s32 1, %s16
  %s19 = scalar_select 0, %s18, %s16
  $region1: #{tpu_custom_call.1} parent=0
    #allocation2 [shape = 'u8[1024]{0}', space=vmem, size = 0x400, scoped, tag = 'output window, operand 0, single buffered']
    #allocation3 [shape = 's32[1]{0}', space=sflag, size = 0x4, scoped, tag = 'scoped memory for tpu_custom_call.1']
    %20 = vsyncpa [#allocation3], 0
    // Predicated region
    $region2: #{tpu_custom_call.1} parent=1 // pred_check
      _
    $region3: #{tpu_custom_call.1} parent=1 // pred_check_branch
      %22 = sbr.rel (0) target = $region5
    $region4: #{tpu_custom_call.1} parent=1 // pred_region
      _
    $region5: #{tpu_custom_call.1} parent=1 // pred_fallthru
      _
    // Predicated region
    $region6: #{tpu_custom_call.1} parent=1 // pred_check
      _
    $region7: #{tpu_custom_call.1} parent=1 // pred_check_branch
      %24 = sbr.rel (0) target = $region9
    $region8: #{tpu_custom_call.1} parent=1 // pred_region
      _
    $region9: #{tpu_custom_call.1} parent=1 // pred_fallthru
      _
    // Predicated region
    $region10: #{tpu_custom_call.1} parent=1 // pred_check
      _
    $region11: #{tpu_custom_call.1} parent=1 // pred_check_branch
      %26 = sbr.rel (0) target = $region13
    $region12: #{tpu_custom_call.1} parent=1 // pred_region
      _
    $region13: #{tpu_custom_call.1} parent=1 // pred_fallthru
      _
    // Predicated region
    $region14: #{tpu_custom_call.1} parent=1 // pred_check
      _
    $region15: #{tpu_custom_call.1} parent=1 // pred_check_branch
      %28 = sbr.rel (0) target = $region17
    $region16: #{tpu_custom_call.1} parent=1 // pred_region
      _
    $region17: #{tpu_custom_call.1} parent=1 // pred_fallthru
      _
    // Predicated region
    $region18: #{tpu_custom_call.1} parent=1 // pred_check
      _
    $region19: #{tpu_custom_call.1} parent=1 // pred_check_branch
      %30 = sbr.rel (0) target = $region21
    $region20: #{tpu_custom_call.1} parent=1 // pred_region
      _
    $region21: #{tpu_custom_call.1} parent=1 // pred_fallthru
      _
    // Predicated region
    $region22: #{tpu_custom_call.1} parent=1 // pred_check
      _
    $region23: #{tpu_custom_call.1} parent=1 // pred_check_branch
      %32 = sbr.rel (0) target = $region25
    $region24: #{tpu_custom_call.1} parent=1 // pred_region
      _
    $region25: #{tpu_custom_call.1} parent=1 // pred_fallthru
      _
    // Predicated region
    $region26: #{tpu_custom_call.1} parent=1 // pred_check
      _
    $region27: #{tpu_custom_call.1} parent=1 // pred_check_branch
      %34 = sbr.rel (0) target = $region29
    $region28: #{tpu_custom_call.1} parent=1 // pred_region
      _
    $region29: #{tpu_custom_call.1} parent=1 // pred_fallthru
      _
    // Predicated region
    $region30: #{tpu_custom_call.1} parent=1 // pred_check
      _
    $region31: #{tpu_custom_call.1} parent=1 // pred_check_branch
      %36 = sbr.rel (0) target = $region33
    $region32: #{tpu_custom_call.1} parent=1 // pred_region
      _
    $region33: #{tpu_custom_call.1} parent=1 // pred_fallthru
      _
    // Predicated region
    $region34: #{tpu_custom_call.1} parent=1 // pred_check
      _
    $region35: #{tpu_custom_call.1} parent=1 // pred_check_branch
      %38 = sbr.rel (0) target = $region37
    $region36: #{tpu_custom_call.1} parent=1 // pred_region
      _
    $region37: #{tpu_custom_call.1} parent=1 // pred_fallthru
      _
    // Predicated region
    $region38: #{tpu_custom_call.1} parent=1 // pred_check
      _
    $region39: #{tpu_custom_call.1} parent=1 // pred_check_branch
      %40 = sbr.rel (0) target = $region41
    $region40: #{tpu_custom_call.1} parent=1 // pred_region
      _
    $region41: #{tpu_custom_call.1} parent=1 // pred_fallthru
      _
    // Predicated region
    $region42: #{tpu_custom_call.1} parent=1 // pred_check
      _
    $region43: #{tpu_custom_call.1} parent=1 // pred_check_branch
      %42 = sbr.rel (0) target = $region45
    $region44: #{tpu_custom_call.1} parent=1 // pred_region
      _
    $region45: #{tpu_custom_call.1} parent=1 // pred_fallthru
      _
    // Predicated region
    $region46: #{tpu_custom_call.1} parent=1 // pred_check
      _
    $region47: #{tpu_custom_call.1} parent=1 // pred_check_branch
      %44 = sbr.rel (0) target = $region49
    $region48: #{tpu_custom_call.1} parent=1 // pred_region
      _
    $region49: #{tpu_custom_call.1} parent=1 // pred_fallthru
      _
    // Predicated region
    $region50: #{tpu_custom_call.1} parent=1 // pred_check
      _
    $region51: #{tpu_custom_call.1} parent=1 // pred_check_branch
      %46 = sbr.rel (0) target = $region53
    $region52: #{tpu_custom_call.1} parent=1 // pred_region
      _
    $region53: #{tpu_custom_call.1} parent=1 // pred_fallthru
      _
    // Predicated region
    $region54: #{tpu_custom_call.1} parent=1 // pred_check
      _
    $region55: #{tpu_custom_call.1} parent=1 // pred_check_branch
      %48 = sbr.rel (0) target = $region57
    $region56: #{tpu_custom_call.1} parent=1 // pred_region
      _
    $region57: #{tpu_custom_call.1} parent=1 // pred_fallthru
      _
    // Predicated region
    $region58: #{tpu_custom_call.1} parent=1 // pred_check
      _
    $region59: #{tpu_custom_call.1} parent=1 // pred_check_branch
      %50 = sbr.rel (0) target = $region61
    $region60: #{tpu_custom_call.1} parent=1 // pred_region
      _
    $region61: #{tpu_custom_call.1} parent=1 // pred_fallthru
      _
    %v51 = vld [vmem:[%s0] sm:$0xff]
    %v52 = vld [vmem:[%s0 + $0x8] sm:$0x3]
    %v53 = vld [vmem:[%s0 + $0x10] sm:$0xff]
    %v54 = vld [vmem:[%s0 + $0x18] sm:$0x3]
    %v55 = vld [vmem:[%s0 + $0x20] sm:$0xff]
    %v56 = vld [vmem:[%s0 + $0x28] sm:$0x3]
    %v57 = vld [vmem:[%s0 + $0x30] sm:$0xff]
    %v58 = vld [vmem:[%s0 + $0x38] sm:$0x3]
    %v59 = vld [vmem:[%s0 + $0x40] sm:$0xff]
    %v60 = vld [vmem:[%s0 + $0x48] sm:$0x3]
    %v61 = vld [vmem:[%s0 + $0x50] sm:$0xff]
    %v62 = vld [vmem:[%s0 + $0x58] sm:$0x3]
    %v63 = vld [vmem:[%s0 + $0x60] sm:$0xff]
    %v64 = vld [vmem:[%s0 + $0x68] sm:$0x3]
    %v65 = vld [vmem:[%s0 + $0x70] sm:$0xff]
    %v66 = vld [vmem:[%s0 + $0x78] sm:$0x3]
    %v67 = vld [vmem:[%s0 + $0x80] sm:$0xff]
    %v68 = vld [vmem:[%s0 + $0x88] sm:$0x3]
    %v69 = vld [vmem:[%s0 + $0x90] sm:$0xff]
    %v70 = vld [vmem:[%s0 + $0x98] sm:$0x3]
    %v71 = vld [vmem:[%s0 + $0xa0] sm:$0xff]
    %v72 = vld [vmem:[%s0 + $0xa8] sm:$0x3]
    %v73 = vld [vmem:[%s0 + $0xb0] sm:$0xff]
    %v74 = vld [vmem:[%s0 + $0xb8] sm:$0x3]
    %v75 = vld [vmem:[%s0 + $0xc0] sm:$0xff]
    %v76 = vld [vmem:[%s0 + $0xc8] sm:$0x3]
    %v77 = vld [vmem:[%s0 + $0xd0] sm:$0xff]
    %v78 = vld [vmem:[%s0 + $0xd8] sm:$0x3]
    %v79 = vld [vmem:[%s0 + $0xe0] sm:$0xff]
    %v80 = vld [vmem:[%s0 + $0xe8] sm:$0x3]
    %v81 = vld [vmem:[%s0 + $0xf0] sm:$0xff]
    %v82 = vld [vmem:[%s0 + $0xf8] sm:$0x3]
    %v83 = vld [vmem:[%s0 + $0x100] sm:$0xff]
    %v84 = vld [vmem:[%s0 + $0x108] sm:$0x3]
    %v85 = vld [vmem:[%s0 + $0x110] sm:$0xff]
    %v86 = vld [vmem:[%s0 + $0x118] sm:$0x3]
    %v87 = vld [vmem:[%s0 + $0x120] sm:$0xff]
    %v88 = vld [vmem:[%s0 + $0x128] sm:$0x3]
    %v89 = vld [vmem:[%s0 + $0x130] sm:$0xff]
    %v90 = vld [vmem:[%s0 + $0x138] sm:$0x3]
    %vm123 = vcmask 1046528
    %v124 = vrot.slane %v51, 1
    %v125 = vrot.slane %v52, 1
    %v126 = vsel %vm123, %v124, %v125
    %v127 = vrot.slane %v53, 1
    %v128 = vrot.slane %v54, 1
    %v129 = vsel %vm123, %v127, %v128
    %v130 = vrot.slane %v55, 1
    %v131 = vrot.slane %v56, 1
    %v132 = vsel %vm123, %v130, %v131
    %v133 = vrot.slane %v57, 1
    %v134 = vrot.slane %v58, 1
    %v135 = vsel %vm123, %v133, %v134
    %v136 = vrot.slane %v59, 1
    %v137 = vrot.slane %v60, 1
    %v138 = vsel %vm123, %v136, %v137
    %v139 = vrot.slane %v61, 1
    %v140 = vrot.slane %v62, 1
    %v141 = vsel %vm123, %v139, %v140
    %v142 = vrot.slane %v63, 1
    %v143 = vrot.slane %v64, 1
    %v144 = vsel %vm123, %v142, %v143
    %v145 = vrot.slane %v65, 1
    %v146 = vrot.slane %v66, 1
    %v147 = vsel %vm123, %v145, %v146
    %v148 = vrot.slane %v71, 1
    %v149 = vrot.slane %v72, 1
    %v150 = vsel %vm123, %v148, %v149
    %v151 = vrot.slane %v73, 1
    %v152 = vrot.slane %v74, 1
    %v153 = vsel %vm123, %v151, %v152
    %v154 = vrot.slane %v75, 1
    %v155 = vrot.slane %v76, 1
    %v156 = vsel %vm123, %v154, %v155
    %v157 = vrot.slane %v77, 1
    %v158 = vrot.slane %v78, 1
    %v159 = vsel %vm123, %v157, %v158
    %v160 = vrot.slane %v79, 1
    %v161 = vrot.slane %v80, 1
    %v162 = vsel %vm123, %v160, %v161
    %v163 = vrot.slane %v81, 1
    %v164 = vrot.slane %v82, 1
    %v165 = vsel %vm123, %v163, %v164
    %v166 = vrot.slane %v83, 1
    %v167 = vrot.slane %v84, 1
    %v168 = vsel %vm123, %v166, %v167
    %v169 = vrot.slane %v85, 1
    %v170 = vrot.slane %v86, 1
    %v171 = vsel %vm123, %v169, %v170
    %172 = vrot.lane.b32.xlu0 %v126, 10
    %v173 = vpop.permute.xlu0 %172
    %174 = vrot.lane.b32.xlu0 %v129, 10
    %v175 = vpop.permute.xlu0 %174
    %176 = vrot.lane.b32.xlu0 %v132, 10
    %v177 = vpop.permute.xlu0 %176
    %178 = vrot.lane.b32.xlu0 %v135, 10
    %v179 = vpop.permute.xlu0 %178
    %180 = vrot.lane.b32.xlu0 %v138, 10
    %v181 = vpop.permute.xlu0 %180
    %182 = vrot.lane.b32.xlu0 %v141, 10
    %v183 = vpop.permute.xlu0 %182
    %184 = vrot.lane.b32.xlu0 %v144, 10
    %v185 = vpop.permute.xlu0 %184
    %186 = vrot.lane.b32.xlu0 %v147, 10
    %v187 = vpop.permute.xlu0 %186
    %188 = vrot.lane.b32.xlu0 %v150, 10
    %v189 = vpop.permute.xlu0 %188
    %190 = vrot.lane.b32.xlu0 %v153, 10
    %v191 = vpop.permute.xlu0 %190
    %192 = vrot.lane.b32.xlu0 %v156, 10
    %v193 = vpop.permute.xlu0 %192
    %194 = vrot.lane.b32.xlu0 %v159, 10
    %v195 = vpop.permute.xlu0 %194
    %196 = vrot.lane.b32.xlu0 %v162, 10
    %v197 = vpop.permute.xlu0 %196
    %198 = vrot.lane.b32.xlu0 %v165, 10
    %v199 = vpop.permute.xlu0 %198
    %200 = vrot.lane.b32.xlu0 %v168, 10
    %v201 = vpop.permute.xlu0 %200
    %202 = vrot.lane.b32.xlu0 %v171, 10
    %v203 = vpop.permute.xlu0 %202
    %vm220 = vcmask 1045504
    %v221 = vrot.slane %v51, 2
    %v222 = vrot.slane %v52, 2
    %v223 = vsel %vm220, %v221, %v222
    %v224 = vrot.slane %v53, 2
    %v225 = vrot.slane %v54, 2
    %v226 = vsel %vm220, %v224, %v225
    %v227 = vrot.slane %v55, 2
    %v228 = vrot.slane %v56, 2
    %v229 = vsel %vm220, %v227, %v228
    %v230 = vrot.slane %v57, 2
    %v231 = vrot.slane %v58, 2
    %v232 = vsel %vm220, %v230, %v231
    %v233 = vrot.slane %v59, 2
    %v234 = vrot.slane %v60, 2
    %v235 = vsel %vm220, %v233, %v234
    %v236 = vrot.slane %v61, 2
    %v237 = vrot.slane %v62, 2
    %v238 = vsel %vm220, %v236, %v237
    %v239 = vrot.slane %v63, 2
    %v240 = vrot.slane %v64, 2
    %v241 = vsel %vm220, %v239, %v240
    %v242 = vrot.slane %v65, 2
    %v243 = vrot.slane %v66, 2
    %v244 = vsel %vm220, %v242, %v243
    %v245 = vrot.slane %v71, 2
    %v246 = vrot.slane %v72, 2
    %v247 = vsel %vm220, %v245, %v246
    %v248 = vrot.slane %v73, 2
    %v249 = vrot.slane %v74, 2
    %v250 = vsel %vm220, %v248, %v249
    %v251 = vrot.slane %v75, 2
    %v252 = vrot.slane %v76, 2
    %v253 = vsel %vm220, %v251, %v252
    %v254 = vrot.slane %v77, 2
    %v255 = vrot.slane %v78, 2
    %v256 = vsel %vm220, %v254, %v255
    %v257 = vrot.slane %v79, 2
    %v258 = vrot.slane %v80, 2
    %v259 = vsel %vm220, %v257, %v258
    %v260 = vrot.slane %v81, 2
    %v261 = vrot.slane %v82, 2
    %v262 = vsel %vm220, %v260, %v261
    %v263 = vrot.slane %v83, 2
    %v264 = vrot.slane %v84, 2
    %v265 = vsel %vm220, %v263, %v264
    %v266 = vrot.slane %v85, 2
    %v267 = vrot.slane %v86, 2
    %v268 = vsel %vm220, %v266, %v267
    %269 = vrot.lane.b32.xlu0 %v223, 20
    %v270 = vpop.permute.xlu0 %269
    %271 = vrot.lane.b32.xlu0 %v226, 20
    %v272 = vpop.permute.xlu0 %271
    %273 = vrot.lane.b32.xlu0 %v229, 20
    %v274 = vpop.permute.xlu0 %273
    %275 = vrot.lane.b32.xlu0 %v232, 20
    %v276 = vpop.permute.xlu0 %275
    %277 = vrot.lane.b32.xlu0 %v235, 20
    %v278 = vpop.permute.xlu0 %277
    %279 = vrot.lane.b32.xlu0 %v238, 20
    %v280 = vpop.permute.xlu0 %279
    %281 = vrot.lane.b32.xlu0 %v241, 20
    %v282 = vpop.permute.xlu0 %281
    %283 = vrot.lane.b32.xlu0 %v244, 20
    %v284 = vpop.permute.xlu0 %283
    %285 = vrot.lane.b32.xlu0 %v247, 20
    %v286 = vpop.permute.xlu0 %285
    %287 = vrot.lane.b32.xlu0 %v250, 20
    %v288 = vpop.permute.xlu0 %287
    %289 = vrot.lane.b32.xlu0 %v253, 20
    %v290 = vpop.permute.xlu0 %289
    %291 = vrot.lane.b32.xlu0 %v256, 20
    %v292 = vpop.permute.xlu0 %291
    %293 = vrot.lane.b32.xlu0 %v259, 20
    %v294 = vpop.permute.xlu0 %293
    %295 = vrot.lane.b32.xlu0 %v262, 20
    %v296 = vpop.permute.xlu0 %295
    %297 = vrot.lane.b32.xlu0 %v265, 20
    %v298 = vpop.permute.xlu0 %297
    %299 = vrot.lane.b32.xlu0 %v268, 20
    %v300 = vpop.permute.xlu0 %299
    %317 = vrot.lane.b32.xlu0 %v51, 15
    %v318 = vpop.permute.xlu0 %317
    %319 = vrot.lane.b32.xlu0 %v53, 15
    %v320 = vpop.permute.xlu0 %319
    %321 = vrot.lane.b32.xlu0 %v55, 15
    %v322 = vpop.permute.xlu0 %321
    %323 = vrot.lane.b32.xlu0 %v57, 15
    %v324 = vpop.permute.xlu0 %323
    %325 = vrot.lane.b32.xlu0 %v59, 15
    %v326 = vpop.permute.xlu0 %325
    %327 = vrot.lane.b32.xlu0 %v61, 15
    %v328 = vpop.permute.xlu0 %327
    %329 = vrot.lane.b32.xlu0 %v63, 15
    %v330 = vpop.permute.xlu0 %329
    %331 = vrot.lane.b32.xlu0 %v65, 15
    %v332 = vpop.permute.xlu0 %331
    %333 = vrot.lane.b32.xlu0 %v71, 15
    %v334 = vpop.permute.xlu0 %333
    %335 = vrot.lane.b32.xlu0 %v73, 15
    %v336 = vpop.permute.xlu0 %335
    %337 = vrot.lane.b32.xlu0 %v75, 15
    %v338 = vpop.permute.xlu0 %337
    %339 = vrot.lane.b32.xlu0 %v77, 15
    %v340 = vpop.permute.xlu0 %339
    %341 = vrot.lane.b32.xlu0 %v79, 15
    %v342 = vpop.permute.xlu0 %341
    %343 = vrot.lane.b32.xlu0 %v81, 15
    %v344 = vpop.permute.xlu0 %343
    %345 = vrot.lane.b32.xlu0 %v83, 15
    %v346 = vpop.permute.xlu0 %345
    %347 = vrot.lane.b32.xlu0 %v85, 15
    %v348 = vpop.permute.xlu0 %347
    %365 = vrot.lane.b32.xlu0 %v126, 25
    %v366 = vpop.permute.xlu0 %365
    %367 = vrot.lane.b32.xlu0 %v129, 25
    %v368 = vpop.permute.xlu0 %367
    %369 = vrot.lane.b32.xlu0 %v132, 25
    %v370 = vpop.permute.xlu0 %369
    %371 = vrot.lane.b32.xlu0 %v135, 25
    %v372 = vpop.permute.xlu0 %371
    %373 = vrot.lane.b32.xlu0 %v138, 25
    %v374 = vpop.permute.xlu0 %373
    %375 = vrot.lane.b32.xlu0 %v141, 25
    %v376 = vpop.permute.xlu0 %375
    %377 = vrot.lane.b32.xlu0 %v144, 25
    %v378 = vpop.permute.xlu0 %377
    %379 = vrot.lane.b32.xlu0 %v147, 25
    %v380 = vpop.permute.xlu0 %379
    %381 = vrot.lane.b32.xlu0 %v150, 25
    %v382 = vpop.permute.xlu0 %381
    %383 = vrot.lane.b32.xlu0 %v153, 25
    %v384 = vpop.permute.xlu0 %383
    %385 = vrot.lane.b32.xlu0 %v156, 25
    %v386 = vpop.permute.xlu0 %385
    %387 = vrot.lane.b32.xlu0 %v159, 25
    %v388 = vpop.permute.xlu0 %387
    %389 = vrot.lane.b32.xlu0 %v162, 25
    %v390 = vpop.permute.xlu0 %389
    %391 = vrot.lane.b32.xlu0 %v165, 25
    %v392 = vpop.permute.xlu0 %391
    %393 = vrot.lane.b32.xlu0 %v168, 25
    %v394 = vpop.permute.xlu0 %393
    %395 = vrot.lane.b32.xlu0 %v171, 25
    %v396 = vpop.permute.xlu0 %395
    %413 = vrot.lane.b32.xlu0 %v223, 35
    %v414 = vpop.permute.xlu0 %413
    %415 = vrot.lane.b32.xlu0 %v226, 35
    %v416 = vpop.permute.xlu0 %415
    %417 = vrot.lane.b32.xlu0 %v229, 35
    %v418 = vpop.permute.xlu0 %417
    %419 = vrot.lane.b32.xlu0 %v232, 35
    %v420 = vpop.permute.xlu0 %419
    %421 = vrot.lane.b32.xlu0 %v235, 35
    %v422 = vpop.permute.xlu0 %421
    %423 = vrot.lane.b32.xlu0 %v238, 35
    %v424 = vpop.permute.xlu0 %423
    %425 = vrot.lane.b32.xlu0 %v241, 35
    %v426 = vpop.permute.xlu0 %425
    %427 = vrot.lane.b32.xlu0 %v244, 35
    %v428 = vpop.permute.xlu0 %427
    %429 = vrot.lane.b32.xlu0 %v247, 35
    %v430 = vpop.permute.xlu0 %429
    %431 = vrot.lane.b32.xlu0 %v250, 35
    %v432 = vpop.permute.xlu0 %431
    %433 = vrot.lane.b32.xlu0 %v253, 35
    %v434 = vpop.permute.xlu0 %433
    %435 = vrot.lane.b32.xlu0 %v256, 35
    %v436 = vpop.permute.xlu0 %435
    %437 = vrot.lane.b32.xlu0 %v259, 35
    %v438 = vpop.permute.xlu0 %437
    %439 = vrot.lane.b32.xlu0 %v262, 35
    %v440 = vpop.permute.xlu0 %439
    %441 = vrot.lane.b32.xlu0 %v265, 35
    %v442 = vpop.permute.xlu0 %441
    %443 = vrot.lane.b32.xlu0 %v268, 35
    %v444 = vpop.permute.xlu0 %443
    %463 = vrot.lane.b32.xlu0 %v53, 50
    %v464 = vpop.permute.xlu0 %463
    %465 = vrot.lane.b32.xlu0 %v55, 50
    %v466 = vpop.permute.xlu0 %465
    %467 = vrot.lane.b32.xlu0 %v57, 50
    %v468 = vpop.permute.xlu0 %467
    %469 = vrot.lane.b32.xlu0 %v59, 50
    %v470 = vpop.permute.xlu0 %469
    %471 = vrot.lane.b32.xlu0 %v61, 50
    %v472 = vpop.permute.xlu0 %471
    %473 = vrot.lane.b32.xlu0 %v63, 50
    %v474 = vpop.permute.xlu0 %473
    %475 = vrot.lane.b32.xlu0 %v65, 50
    %v476 = vpop.permute.xlu0 %475
    %477 = vrot.lane.b32.xlu0 %v67, 50
    %v478 = vpop.permute.xlu0 %477
    %479 = vrot.lane.b32.xlu0 %v73, 50
    %v480 = vpop.permute.xlu0 %479
    %481 = vrot.lane.b32.xlu0 %v75, 50
    %v482 = vpop.permute.xlu0 %481
    %483 = vrot.lane.b32.xlu0 %v77, 50
    %v484 = vpop.permute.xlu0 %483
    %485 = vrot.lane.b32.xlu0 %v79, 50
    %v486 = vpop.permute.xlu0 %485
    %487 = vrot.lane.b32.xlu0 %v81, 50
    %v488 = vpop.permute.xlu0 %487
    %489 = vrot.lane.b32.xlu0 %v83, 50
    %v490 = vpop.permute.xlu0 %489
    %491 = vrot.lane.b32.xlu0 %v85, 50
    %v492 = vpop.permute.xlu0 %491
    %493 = vrot.lane.b32.xlu0 %v87, 50
    %v494 = vpop.permute.xlu0 %493
    %v513 = vrot.slane %v67, 1
    %v514 = vrot.slane %v68, 1
    %v515 = vsel %vm123, %v513, %v514
    %v516 = vrot.slane %v87, 1
    %v517 = vrot.slane %v88, 1
    %v518 = vsel %vm123, %v516, %v517
    %519 = vrot.lane.b32.xlu0 %v129, 60
    %v520 = vpop.permute.xlu0 %519
    %521 = vrot.lane.b32.xlu0 %v132, 60
    %v522 = vpop.permute.xlu0 %521
    %523 = vrot.lane.b32.xlu0 %v135, 60
    %v524 = vpop.permute.xlu0 %523
    %525 = vrot.lane.b32.xlu0 %v138, 60
    %v526 = vpop.permute.xlu0 %525
    %527 = vrot.lane.b32.xlu0 %v141, 60
    %v528 = vpop.permute.xlu0 %527
    %529 = vrot.lane.b32.xlu0 %v144, 60
    %v530 = vpop.permute.xlu0 %529
    %531 = vrot.lane.b32.xlu0 %v147, 60
    %v532 = vpop.permute.xlu0 %531
    %533 = vrot.lane.b32.xlu0 %v515, 60
    %v534 = vpop.permute.xlu0 %533
    %535 = vrot.lane.b32.xlu0 %v153, 60
    %v536 = vpop.permute.xlu0 %535
    %537 = vrot.lane.b32.xlu0 %v156, 60
    %v538 = vpop.permute.xlu0 %537
    %539 = vrot.lane.b32.xlu0 %v159, 60
    %v540 = vpop.permute.xlu0 %539
    %541 = vrot.lane.b32.xlu0 %v162, 60
    %v542 = vpop.permute.xlu0 %541
    %543 = vrot.lane.b32.xlu0 %v165, 60
    %v544 = vpop.permute.xlu0 %543
    %545 = vrot.lane.b32.xlu0 %v168, 60
    %v546 = vpop.permute.xlu0 %545
    %547 = vrot.lane.b32.xlu0 %v171, 60
    %v548 = vpop.permute.xlu0 %547
    %549 = vrot.lane.b32.xlu0 %v518, 60
    %v550 = vpop.permute.xlu0 %549
    %v567 = vrot.slane %v67, 2
    %v568 = vrot.slane %v68, 2
    %v569 = vsel %vm220, %v567, %v568
    %v570 = vrot.slane %v87, 2
    %v571 = vrot.slane %v88, 2
    %v572 = vsel %vm220, %v570, %v571
    %573 = vrot.lane.b32.xlu0 %v226, 70
    %v574 = vpop.permute.xlu0 %573
    %575 = vrot.lane.b32.xlu0 %v229, 70
    %v576 = vpop.permute.xlu0 %575
    %577 = vrot.lane.b32.xlu0 %v232, 70
    %v578 = vpop.permute.xlu0 %577
    %579 = vrot.lane.b32.xlu0 %v235, 70
    %v580 = vpop.permute.xlu0 %579
    %581 = vrot.lane.b32.xlu0 %v238, 70
    %v582 = vpop.permute.xlu0 %581
    %583 = vrot.lane.b32.xlu0 %v241, 70
    %v584 = vpop.permute.xlu0 %583
    %585 = vrot.lane.b32.xlu0 %v244, 70
    %v586 = vpop.permute.xlu0 %585
    %587 = vrot.lane.b32.xlu0 %v569, 70
    %v588 = vpop.permute.xlu0 %587
    %589 = vrot.lane.b32.xlu0 %v250, 70
    %v590 = vpop.permute.xlu0 %589
    %591 = vrot.lane.b32.xlu0 %v253, 70
    %v592 = vpop.permute.xlu0 %591
    %593 = vrot.lane.b32.xlu0 %v256, 70
    %v594 = vpop.permute.xlu0 %593
    %595 = vrot.lane.b32.xlu0 %v259, 70
    %v596 = vpop.permute.xlu0 %595
    %597 = vrot.lane.b32.xlu0 %v262, 70
    %v598 = vpop.permute.xlu0 %597
    %599 = vrot.lane.b32.xlu0 %v265, 70
    %v600 = vpop.permute.xlu0 %599
    %601 = vrot.lane.b32.xlu0 %v268, 70
    %v602 = vpop.permute.xlu0 %601
    %603 = vrot.lane.b32.xlu0 %v572, 70
    %v604 = vpop.permute.xlu0 %603
    %621 = vrot.lane.b32.xlu0 %v53, 65
    %v622 = vpop.permute.xlu0 %621
    %623 = vrot.lane.b32.xlu0 %v55, 65
    %v624 = vpop.permute.xlu0 %623
    %625 = vrot.lane.b32.xlu0 %v57, 65
    %v626 = vpop.permute.xlu0 %625
    %627 = vrot.lane.b32.xlu0 %v59, 65
    %v628 = vpop.permute.xlu0 %627
    %629 = vrot.lane.b32.xlu0 %v61, 65
    %v630 = vpop.permute.xlu0 %629
    %631 = vrot.lane.b32.xlu0 %v63, 65
    %v632 = vpop.permute.xlu0 %631
    %633 = vrot.lane.b32.xlu0 %v65, 65
    %v634 = vpop.permute.xlu0 %633
    %635 = vrot.lane.b32.xlu0 %v67, 65
    %v636 = vpop.permute.xlu0 %635
    %637 = vrot.lane.b32.xlu0 %v73, 65
    %v638 = vpop.permute.xlu0 %637
    %639 = vrot.lane.b32.xlu0 %v75, 65
    %v640 = vpop.permute.xlu0 %639
    %641 = vrot.lane.b32.xlu0 %v77, 65
    %v642 = vpop.permute.xlu0 %641
    %643 = vrot.lane.b32.xlu0 %v79, 65
    %v644 = vpop.permute.xlu0 %643
    %645 = vrot.lane.b32.xlu0 %v81, 65
    %v646 = vpop.permute.xlu0 %645
    %647 = vrot.lane.b32.xlu0 %v83, 65
    %v648 = vpop.permute.xlu0 %647
    %649 = vrot.lane.b32.xlu0 %v85, 65
    %v650 = vpop.permute.xlu0 %649
    %651 = vrot.lane.b32.xlu0 %v87, 65
    %v652 = vpop.permute.xlu0 %651
    %vm669 = vcmask 80896
    %v670 = vsel %vm669, %v51, %v173
    %v671 = vsel %vm669, %v53, %v175
    %v672 = vsel %vm669, %v55, %v177
    %v673 = vsel %vm669, %v57, %v179
    %v674 = vsel %vm669, %v59, %v181
    %v675 = vsel %vm669, %v61, %v183
    %v676 = vsel %vm669, %v63, %v185
    %v677 = vsel %vm669, %v65, %v187
    %v678 = vsel %vm669, %v71, %v189
    %v679 = vsel %vm669, %v73, %v191
    %v680 = vsel %vm669, %v75, %v193
    %v681 = vsel %vm669, %v77, %v195
    %v682 = vsel %vm669, %v79, %v197
    %v683 = vsel %vm669, %v81, %v199
    %v684 = vsel %vm669, %v83, %v201
    %v685 = vsel %vm669, %v85, %v203
    %vm686 = vcmask 121856
    %v687 = vsel %vm686, %v670, %v173
    %v688 = vsel %vm686, %v671, %v175
    %v689 = vsel %vm686, %v672, %v177
    %v690 = vsel %vm686, %v673, %v179
    %v691 = vsel %vm686, %v674, %v181
    %v692 = vsel %vm686, %v675, %v183
    %v693 = vsel %vm686, %v676, %v185
    %v694 = vsel %vm686, %v677, %v187
    %v695 = vsel %vm686, %v678, %v189
    %v696 = vsel %vm686, %v679, %v191
    %v697 = vsel %vm686, %v680, %v193
    %v698 = vsel %vm686, %v681, %v195
    %v699 = vsel %vm686, %v682, %v197
    %v700 = vsel %vm686, %v683, %v199
    %v701 = vsel %vm686, %v684, %v201
    %v702 = vsel %vm686, %v685, %v203
    %vm703 = vcmask 162816
    %v704 = vsel %vm703, %v687, %v270
    %v705 = vsel %vm703, %v688, %v272
    %v706 = vsel %vm703, %v689, %v274
    %v707 = vsel %vm703, %v690, %v276
    %v708 = vsel %vm703, %v691, %v278
    %v709 = vsel %vm703, %v692, %v280
    %v710 = vsel %vm703, %v693, %v282
    %v711 = vsel %vm703, %v694, %v284
    %v712 = vsel %vm703, %v695, %v286
    %v713 = vsel %vm703, %v696, %v288
    %v714 = vsel %vm703, %v697, %v290
    %v715 = vsel %vm703, %v698, %v292
    %v716 = vsel %vm703, %v699, %v294
    %v717 = vsel %vm703, %v700, %v296
    %v718 = vsel %vm703, %v701, %v298
    %v719 = vsel %vm703, %v702, %v300
    %vm720 = vcmask 203776
    %v721 = vsel %vm720, %v704, %v318
    %v722 = vsel %vm720, %v705, %v320
    %v723 = vsel %vm720, %v706, %v322
    %v724 = vsel %vm720, %v707, %v324
    %v725 = vsel %vm720, %v708, %v326
    %v726 = vsel %vm720, %v709, %v328
    %v727 = vsel %vm720, %v710, %v330
    %v728 = vsel %vm720, %v711, %v332
    %v729 = vsel %vm720, %v712, %v334
    %v730 = vsel %vm720, %v713, %v336
    %v731 = vsel %vm720, %v714, %v338
    %v732 = vsel %vm720, %v715, %v340
    %v733 = vsel %vm720, %v716, %v342
    %v734 = vsel %vm720, %v717, %v344
    %v735 = vsel %vm720, %v718, %v346
    %v736 = vsel %vm720, %v719, %v348
    %vm737 = vcmask 244736
    %v738 = vsel %vm737, %v721, %v318
    %v739 = vsel %vm737, %v722, %v320
    %v740 = vsel %vm737, %v723, %v322
    %v741 = vsel %vm737, %v724, %v324
    %v742 = vsel %vm737, %v725, %v326
    %v743 = vsel %vm737, %v726, %v328
    %v744 = vsel %vm737, %v727, %v330
    %v745 = vsel %vm737, %v728, %v332
    %v746 = vsel %vm737, %v729, %v334
    %v747 = vsel %vm737, %v730, %v336
    %v748 = vsel %vm737, %v731, %v338
    %v749 = vsel %vm737, %v732, %v340
    %v750 = vsel %vm737, %v733, %v342
    %v751 = vsel %vm737, %v734, %v344
    %v752 = vsel %vm737, %v735, %v346
    %v753 = vsel %vm737, %v736, %v348
    %vm754 = vcmask 285696
    %v755 = vsel %vm754, %v738, %v366
    %v756 = vsel %vm754, %v739, %v368
    %v757 = vsel %vm754, %v740, %v370
    %v758 = vsel %vm754, %v741, %v372
    %v759 = vsel %vm754, %v742, %v374
    %v760 = vsel %vm754, %v743, %v376
    %v761 = vsel %vm754, %v744, %v378
    %v762 = vsel %vm754, %v745, %v380
    %v763 = vsel %vm754, %v746, %v382
    %v764 = vsel %vm754, %v747, %v384
    %v765 = vsel %vm754, %v748, %v386
    %v766 = vsel %vm754, %v749, %v388
    %v767 = vsel %vm754, %v750, %v390
    %v768 = vsel %vm754, %v751, %v392
    %v769 = vsel %vm754, %v752, %v394
    %v770 = vsel %vm754, %v753, %v396
    %vm771 = vcmask 326656
    %v772 = vsel %vm771, %v755, %v366
    %v773 = vsel %vm771, %v756, %v368
    %v774 = vsel %vm771, %v757, %v370
    %v775 = vsel %vm771, %v758, %v372
    %v776 = vsel %vm771, %v759, %v374
    %v777 = vsel %vm771, %v760, %v376
    %v778 = vsel %vm771, %v761, %v378
    %v779 = vsel %vm771, %v762, %v380
    %v780 = vsel %vm771, %v763, %v382
    %v781 = vsel %vm771, %v764, %v384
    %v782 = vsel %vm771, %v765, %v386
    %v783 = vsel %vm771, %v766, %v388
    %v784 = vsel %vm771, %v767, %v390
    %v785 = vsel %vm771, %v768, %v392
    %v786 = vsel %vm771, %v769, %v394
    %v787 = vsel %vm771, %v770, %v396
    %vm788 = vcmask 367616
    %v789 = vsel %vm788, %v772, %v414
    %v790 = vsel %vm788, %v773, %v416
    %v791 = vsel %vm788, %v774, %v418
    %v792 = vsel %vm788, %v775, %v420
    %v793 = vsel %vm788, %v776, %v422
    %v794 = vsel %vm788, %v777, %v424
    %v795 = vsel %vm788, %v778, %v426
    %v796 = vsel %vm788, %v779, %v428
    %v797 = vsel %vm788, %v780, %v430
    %v798 = vsel %vm788, %v781, %v432
    %v799 = vsel %vm788, %v782, %v434
    %v800 = vsel %vm788, %v783, %v436
    %v801 = vsel %vm788, %v784, %v438
    %v802 = vsel %vm788, %v785, %v440
    %v803 = vsel %vm788, %v786, %v442
    %v804 = vsel %vm788, %v787, %v444
    %vm805 = vcmask 408576
    %v806 = vsel %vm805, %v789, %v464
    %v807 = vsel %vm805, %v790, %v466
    %v808 = vsel %vm805, %v791, %v468
    %v809 = vsel %vm805, %v792, %v470
    %v810 = vsel %vm805, %v793, %v472
    %v811 = vsel %vm805, %v794, %v474
    %v812 = vsel %vm805, %v795, %v476
    %v813 = vsel %vm805, %v796, %v478
    %v814 = vsel %vm805, %v797, %v480
    %v815 = vsel %vm805, %v798, %v482
    %v816 = vsel %vm805, %v799, %v484
    %v817 = vsel %vm805, %v800, %v486
    %v818 = vsel %vm805, %v801, %v488
    %v819 = vsel %vm805, %v802, %v490
    %v820 = vsel %vm805, %v803, %v492
    %v821 = vsel %vm805, %v804, %v494
    %vm822 = vcmask 449536
    %v823 = vsel %vm822, %v806, %v464
    %v824 = vsel %vm822, %v807, %v466
    %v825 = vsel %vm822, %v808, %v468
    %v826 = vsel %vm822, %v809, %v470
    %v827 = vsel %vm822, %v810, %v472
    %v828 = vsel %vm822, %v811, %v474
    %v829 = vsel %vm822, %v812, %v476
    %v830 = vsel %vm822, %v813, %v478
    %v831 = vsel %vm822, %v814, %v480
    %v832 = vsel %vm822, %v815, %v482
    %v833 = vsel %vm822, %v816, %v484
    %v834 = vsel %vm822, %v817, %v486
    %v835 = vsel %vm822, %v818, %v488
    %v836 = vsel %vm822, %v819, %v490
    %v837 = vsel %vm822, %v820, %v492
    %v838 = vsel %vm822, %v821, %v494
    %vm839 = vcmask 490496
    %v840 = vsel %vm839, %v823, %v520
    %v841 = vsel %vm839, %v824, %v522
    %v842 = vsel %vm839, %v825, %v524
    %v843 = vsel %vm839, %v826, %v526
    %v844 = vsel %vm839, %v827, %v528
    %v845 = vsel %vm839, %v828, %v530
    %v846 = vsel %vm839, %v829, %v532
    %v847 = vsel %vm839, %v830, %v534
    %v848 = vsel %vm839, %v831, %v536
    %v849 = vsel %vm839, %v832, %v538
    %v850 = vsel %vm839, %v833, %v540
    %v851 = vsel %vm839, %v834, %v542
    %v852 = vsel %vm839, %v835, %v544
    %v853 = vsel %vm839, %v836, %v546
    %v854 = vsel %vm839, %v837, %v548
    %v855 = vsel %vm839, %v838, %v550
    %vm856 = vcmask 531456
    %v857 = vsel %vm856, %v840, %v520
    %v858 = vsel %vm856, %v841, %v522
    %v859 = vsel %vm856, %v842, %v524
    %v860 = vsel %vm856, %v843, %v526
    %v861 = vsel %vm856, %v844, %v528
    %v862 = vsel %vm856, %v845, %v530
    %v863 = vsel %vm856, %v846, %v532
    %v864 = vsel %vm856, %v847, %v534
    %v865 = vsel %vm856, %v848, %v536
    %v866 = vsel %vm856, %v849, %v538
    %v867 = vsel %vm856, %v850, %v540
    %v868 = vsel %vm856, %v851, %v542
    %v869 = vsel %vm856, %v852, %v544
    %v870 = vsel %vm856, %v853, %v546
    %v871 = vsel %vm856, %v854, %v548
    %v872 = vsel %vm856, %v855, %v550
    %vm873 = vcmask 572416
    %v874 = vsel %vm873, %v857, %v574
    %v875 = vsel %vm873, %v858, %v576
    %v876 = vsel %vm873, %v859, %v578
    %v877 = vsel %vm873, %v860, %v580
    %v878 = vsel %vm873, %v861, %v582
    %v879 = vsel %vm873, %v862, %v584
    %v880 = vsel %vm873, %v863, %v586
    %v881 = vsel %vm873, %v864, %v588
    %v882 = vsel %vm873, %v865, %v590
    %v883 = vsel %vm873, %v866, %v592
    %v884 = vsel %vm873, %v867, %v594
    %v885 = vsel %vm873, %v868, %v596
    %v886 = vsel %vm873, %v869, %v598
    %v887 = vsel %vm873, %v870, %v600
    %v888 = vsel %vm873, %v871, %v602
    %v889 = vsel %vm873, %v872, %v604
    %vm890 = vcmask 613376
    %v891 = vsel %vm890, %v874, %v622
    %v892 = vsel %vm890, %v875, %v624
    %v893 = vsel %vm890, %v876, %v626
    %v894 = vsel %vm890, %v877, %v628
    %v895 = vsel %vm890, %v878, %v630
    %v896 = vsel %vm890, %v879, %v632
    %v897 = vsel %vm890, %v880, %v634
    %v898 = vsel %vm890, %v881, %v636
    %v899 = vsel %vm890, %v882, %v638
    %v900 = vsel %vm890, %v883, %v640
    %v901 = vsel %vm890, %v884, %v642
    %v902 = vsel %vm890, %v885, %v644
    %v903 = vsel %vm890, %v886, %v646
    %v904 = vsel %vm890, %v887, %v648
    %v905 = vsel %vm890, %v888, %v650
    %v906 = vsel %vm890, %v889, %v652
    %907 = vrot.lane.b32.xlu0 %v53, 113
    %v908 = vpop.permute.xlu0 %907
    %909 = vrot.lane.b32.xlu0 %v55, 113
    %v910 = vpop.permute.xlu0 %909
    %911 = vrot.lane.b32.xlu0 %v57, 113
    %v912 = vpop.permute.xlu0 %911
    %913 = vrot.lane.b32.xlu0 %v59, 113
    %v914 = vpop.permute.xlu0 %913
    %915 = vrot.lane.b32.xlu0 %v61, 113
    %v916 = vpop.permute.xlu0 %915
    %917 = vrot.lane.b32.xlu0 %v63, 113
    %v918 = vpop.permute.xlu0 %917
    %919 = vrot.lane.b32.xlu0 %v65, 113
    %v920 = vpop.permute.xlu0 %919
    %921 = vrot.lane.b32.xlu0 %v67, 113
    %v922 = vpop.permute.xlu0 %921
    %923 = vrot.lane.b32.xlu0 %v73, 113
    %v924 = vpop.permute.xlu0 %923
    %925 = vrot.lane.b32.xlu0 %v75, 113
    %v926 = vpop.permute.xlu0 %925
    %927 = vrot.lane.b32.xlu0 %v77, 113
    %v928 = vpop.permute.xlu0 %927
    %929 = vrot.lane.b32.xlu0 %v79, 113
    %v930 = vpop.permute.xlu0 %929
    %931 = vrot.lane.b32.xlu0 %v81, 113
    %v932 = vpop.permute.xlu0 %931
    %933 = vrot.lane.b32.xlu0 %v83, 113
    %v934 = vpop.permute.xlu0 %933
    %935 = vrot.lane.b32.xlu0 %v85, 113
    %v936 = vpop.permute.xlu0 %935
    %937 = vrot.lane.b32.xlu0 %v87, 113
    %v938 = vpop.permute.xlu0 %937
    %955 = vrot.lane.b32.xlu0 %v129, 123
    %v956 = vpop.permute.xlu0 %955
    %957 = vrot.lane.b32.xlu0 %v132, 123
    %v958 = vpop.permute.xlu0 %957
    %959 = vrot.lane.b32.xlu0 %v135, 123
    %v960 = vpop.permute.xlu0 %959
    %961 = vrot.lane.b32.xlu0 %v138, 123
    %v962 = vpop.permute.xlu0 %961
    %963 = vrot.lane.b32.xlu0 %v141, 123
    %v964 = vpop.permute.xlu0 %963
    %965 = vrot.lane.b32.xlu0 %v144, 123
    %v966 = vpop.permute.xlu0 %965
    %967 = vrot.lane.b32.xlu0 %v147, 123
    %v968 = vpop.permute.xlu0 %967
    %969 = vrot.lane.b32.xlu0 %v515, 123
    %v970 = vpop.permute.xlu0 %969
    %971 = vrot.lane.b32.xlu0 %v153, 123
    %v972 = vpop.permute.xlu0 %971
    %973 = vrot.lane.b32.xlu0 %v156, 123
    %v974 = vpop.permute.xlu0 %973
    %975 = vrot.lane.b32.xlu0 %v159, 123
    %v976 = vpop.permute.xlu0 %975
    %977 = vrot.lane.b32.xlu0 %v162, 123
    %v978 = vpop.permute.xlu0 %977
    %979 = vrot.lane.b32.xlu0 %v165, 123
    %v980 = vpop.permute.xlu0 %979
    %981 = vrot.lane.b32.xlu0 %v168, 123
    %v982 = vpop.permute.xlu0 %981
    %983 = vrot.lane.b32.xlu0 %v171, 123
    %v984 = vpop.permute.xlu0 %983
    %985 = vrot.lane.b32.xlu0 %v518, 123
    %v986 = vpop.permute.xlu0 %985
    %1003 = vrot.lane.b32.xlu0 %v226, 5
    %v1004 = vpop.permute.xlu0 %1003
    %1005 = vrot.lane.b32.xlu0 %v229, 5
    %v1006 = vpop.permute.xlu0 %1005
    %1007 = vrot.lane.b32.xlu0 %v232, 5
    %v1008 = vpop.permute.xlu0 %1007
    %1009 = vrot.lane.b32.xlu0 %v235, 5
    %v1010 = vpop.permute.xlu0 %1009
    %1011 = vrot.lane.b32.xlu0 %v238, 5
    %v1012 = vpop.permute.xlu0 %1011
    %1013 = vrot.lane.b32.xlu0 %v241, 5
    %v1014 = vpop.permute.xlu0 %1013
    %1015 = vrot.lane.b32.xlu0 %v244, 5
    %v1016 = vpop.permute.xlu0 %1015
    %1017 = vrot.lane.b32.xlu0 %v569, 5
    %v1018 = vpop.permute.xlu0 %1017
    %1019 = vrot.lane.b32.xlu0 %v250, 5
    %v1020 = vpop.permute.xlu0 %1019
    %1021 = vrot.lane.b32.xlu0 %v253, 5
    %v1022 = vpop.permute.xlu0 %1021
    %1023 = vrot.lane.b32.xlu0 %v256, 5
    %v1024 = vpop.permute.xlu0 %1023
    %1025 = vrot.lane.b32.xlu0 %v259, 5
    %v1026 = vpop.permute.xlu0 %1025
    %1027 = vrot.lane.b32.xlu0 %v262, 5
    %v1028 = vpop.permute.xlu0 %1027
    %1029 = vrot.lane.b32.xlu0 %v265, 5
    %v1030 = vpop.permute.xlu0 %1029
    %1031 = vrot.lane.b32.xlu0 %v268, 5
    %v1032 = vpop.permute.xlu0 %1031
    %1033 = vrot.lane.b32.xlu0 %v572, 5
    %v1034 = vpop.permute.xlu0 %1033
    %1053 = vrot.lane.b32.xlu0 %v55, 20
    %v1054 = vpop.permute.xlu0 %1053
    %1055 = vrot.lane.b32.xlu0 %v57, 20
    %v1056 = vpop.permute.xlu0 %1055
    %1057 = vrot.lane.b32.xlu0 %v59, 20
    %v1058 = vpop.permute.xlu0 %1057
    %1059 = vrot.lane.b32.xlu0 %v61, 20
    %v1060 = vpop.permute.xlu0 %1059
    %1061 = vrot.lane.b32.xlu0 %v63, 20
    %v1062 = vpop.permute.xlu0 %1061
    %1063 = vrot.lane.b32.xlu0 %v65, 20
    %v1064 = vpop.permute.xlu0 %1063
    %1065 = vrot.lane.b32.xlu0 %v67, 20
    %v1066 = vpop.permute.xlu0 %1065
    %1067 = vrot.lane.b32.xlu0 %v69, 20
    %v1068 = vpop.permute.xlu0 %1067
    %1069 = vrot.lane.b32.xlu0 %v75, 20
    %v1070 = vpop.permute.xlu0 %1069
    %1071 = vrot.lane.b32.xlu0 %v77, 20
    %v1072 = vpop.permute.xlu0 %1071
    %1073 = vrot.lane.b32.xlu0 %v79, 20
    %v1074 = vpop.permute.xlu0 %1073
    %1075 = vrot.lane.b32.xlu0 %v81, 20
    %v1076 = vpop.permute.xlu0 %1075
    %1077 = vrot.lane.b32.xlu0 %v83, 20
    %v1078 = vpop.permute.xlu0 %1077
    %1079 = vrot.lane.b32.xlu0 %v85, 20
    %v1080 = vpop.permute.xlu0 %1079
    %1081 = vrot.lane.b32.xlu0 %v87, 20
    %v1082 = vpop.permute.xlu0 %1081
    %1083 = vrot.lane.b32.xlu0 %v89, 20
    %v1084 = vpop.permute.xlu0 %1083
    %v1103 = vrot.slane %v69, 1
    %v1104 = vrot.slane %v70, 1
    %v1105 = vsel %vm123, %v1103, %v1104
    %v1106 = vrot.slane %v89, 1
    %v1107 = vrot.slane %v90, 1
    %v1108 = vsel %vm123, %v1106, %v1107
    %1109 = vrot.lane.b32.xlu0 %v132, 30
    %v1110 = vpop.permute.xlu0 %1109
    %1111 = vrot.lane.b32.xlu0 %v135, 30
    %v1112 = vpop.permute.xlu0 %1111
    %1113 = vrot.lane.b32.xlu0 %v138, 30
    %v1114 = vpop.permute.xlu0 %1113
    %1115 = vrot.lane.b32.xlu0 %v141, 30
    %v1116 = vpop.permute.xlu0 %1115
    %1117 = vrot.lane.b32.xlu0 %v144, 30
    %v1118 = vpop.permute.xlu0 %1117
    %1119 = vrot.lane.b32.xlu0 %v147, 30
    %v1120 = vpop.permute.xlu0 %1119
    %1121 = vrot.lane.b32.xlu0 %v515, 30
    %v1122 = vpop.permute.xlu0 %1121
    %1123 = vrot.lane.b32.xlu0 %v1105, 30
    %v1124 = vpop.permute.xlu0 %1123
    %1125 = vrot.lane.b32.xlu0 %v156, 30
    %v1126 = vpop.permute.xlu0 %1125
    %1127 = vrot.lane.b32.xlu0 %v159, 30
    %v1128 = vpop.permute.xlu0 %1127
    %1129 = vrot.lane.b32.xlu0 %v162, 30
    %v1130 = vpop.permute.xlu0 %1129
    %1131 = vrot.lane.b32.xlu0 %v165, 30
    %v1132 = vpop.permute.xlu0 %1131
    %1133 = vrot.lane.b32.xlu0 %v168, 30
    %v1134 = vpop.permute.xlu0 %1133
    %1135 = vrot.lane.b32.xlu0 %v171, 30
    %v1136 = vpop.permute.xlu0 %1135
    %1137 = vrot.lane.b32.xlu0 %v518, 30
    %v1138 = vpop.permute.xlu0 %1137
    %1139 = vrot.lane.b32.xlu0 %v1108, 30
    %v1140 = vpop.permute.xlu0 %1139
    %v1157 = vrot.slane %v69, 2
    %v1158 = vrot.slane %v70, 2
    %v1159 = vsel %vm220, %v1157, %v1158
    %v1160 = vrot.slane %v89, 2
    %v1161 = vrot.slane %v90, 2
    %v1162 = vsel %vm220, %v1160, %v1161
    %1163 = vrot.lane.b32.xlu0 %v229, 40
    %v1164 = vpop.permute.xlu0 %1163
    %1165 = vrot.lane.b32.xlu0 %v232, 40
    %v1166 = vpop.permute.xlu0 %1165
    %1167 = vrot.lane.b32.xlu0 %v235, 40
    %v1168 = vpop.permute.xlu0 %1167
    %1169 = vrot.lane.b32.xlu0 %v238, 40
    %v1170 = vpop.permute.xlu0 %1169
    %1171 = vrot.lane.b32.xlu0 %v241, 40
    %v1172 = vpop.permute.xlu0 %1171
    %1173 = vrot.lane.b32.xlu0 %v244, 40
    %v1174 = vpop.permute.xlu0 %1173
    %1175 = vrot.lane.b32.xlu0 %v569, 40
    %v1176 = vpop.permute.xlu0 %1175
    %1177 = vrot.lane.b32.xlu0 %v1159, 40
    %v1178 = vpop.permute.xlu0 %1177
    %1179 = vrot.lane.b32.xlu0 %v253, 40
    %v1180 = vpop.permute.xlu0 %1179
    %1181 = vrot.lane.b32.xlu0 %v256, 40
    %v1182 = vpop.permute.xlu0 %1181
    %1183 = vrot.lane.b32.xlu0 %v259, 40
    %v1184 = vpop.permute.xlu0 %1183
    %1185 = vrot.lane.b32.xlu0 %v262, 40
    %v1186 = vpop.permute.xlu0 %1185
    %1187 = vrot.lane.b32.xlu0 %v265, 40
    %v1188 = vpop.permute.xlu0 %1187
    %1189 = vrot.lane.b32.xlu0 %v268, 40
    %v1190 = vpop.permute.xlu0 %1189
    %1191 = vrot.lane.b32.xlu0 %v572, 40
    %v1192 = vpop.permute.xlu0 %1191
    %1193 = vrot.lane.b32.xlu0 %v1162, 40
    %v1194 = vpop.permute.xlu0 %1193
    %vm1211 = vcmask 39936
    %v1212 = vsel %vm1211, %v908, %v956
    %v1213 = vsel %vm1211, %v910, %v958
    %v1214 = vsel %vm1211, %v912, %v960
    %v1215 = vsel %vm1211, %v914, %v962
    %v1216 = vsel %vm1211, %v916, %v964
    %v1217 = vsel %vm1211, %v918, %v966
    %v1218 = vsel %vm1211, %v920, %v968
    %v1219 = vsel %vm1211, %v922, %v970
    %v1220 = vsel %vm1211, %v924, %v972
    %v1221 = vsel %vm1211, %v926, %v974
    %v1222 = vsel %vm1211, %v928, %v976
    %v1223 = vsel %vm1211, %v930, %v978
    %v1224 = vsel %vm1211, %v932, %v980
    %v1225 = vsel %vm1211, %v934, %v982
    %v1226 = vsel %vm1211, %v936, %v984
    %v1227 = vsel %vm1211, %v938, %v986
    %v1228 = vsel %vm669, %v1212, %v956
    %v1229 = vsel %vm669, %v1213, %v958
    %v1230 = vsel %vm669, %v1214, %v960
    %v1231 = vsel %vm669, %v1215, %v962
    %v1232 = vsel %vm669, %v1216, %v964
    %v1233 = vsel %vm669, %v1217, %v966
    %v1234 = vsel %vm669, %v1218, %v968
    %v1235 = vsel %vm669, %v1219, %v970
    %v1236 = vsel %vm669, %v1220, %v972
    %v1237 = vsel %vm669, %v1221, %v974
    %v1238 = vsel %vm669, %v1222, %v976
    %v1239 = vsel %vm669, %v1223, %v978
    %v1240 = vsel %vm669, %v1224, %v980
    %v1241 = vsel %vm669, %v1225, %v982
    %v1242 = vsel %vm669, %v1226, %v984
    %v1243 = vsel %vm669, %v1227, %v986
    %v1244 = vsel %vm686, %v1228, %v1004
    %v1245 = vsel %vm686, %v1229, %v1006
    %v1246 = vsel %vm686, %v1230, %v1008
    %v1247 = vsel %vm686, %v1231, %v1010
    %v1248 = vsel %vm686, %v1232, %v1012
    %v1249 = vsel %vm686, %v1233, %v1014
    %v1250 = vsel %vm686, %v1234, %v1016
    %v1251 = vsel %vm686, %v1235, %v1018
    %v1252 = vsel %vm686, %v1236, %v1020
    %v1253 = vsel %vm686, %v1237, %v1022
    %v1254 = vsel %vm686, %v1238, %v1024
    %v1255 = vsel %vm686, %v1239, %v1026
    %v1256 = vsel %vm686, %v1240, %v1028
    %v1257 = vsel %vm686, %v1241, %v1030
    %v1258 = vsel %vm686, %v1242, %v1032
    %v1259 = vsel %vm686, %v1243, %v1034
    %v1260 = vsel %vm703, %v1244, %v1054
    %v1261 = vsel %vm703, %v1245, %v1056
    %v1262 = vsel %vm703, %v1246, %v1058
    %v1263 = vsel %vm703, %v1247, %v1060
    %v1264 = vsel %vm703, %v1248, %v1062
    %v1265 = vsel %vm703, %v1249, %v1064
    %v1266 = vsel %vm703, %v1250, %v1066
    %v1267 = vsel %vm703, %v1251, %v1068
    %v1268 = vsel %vm703, %v1252, %v1070
    %v1269 = vsel %vm703, %v1253, %v1072
    %v1270 = vsel %vm703, %v1254, %v1074
    %v1271 = vsel %vm703, %v1255, %v1076
    %v1272 = vsel %vm703, %v1256, %v1078
    %v1273 = vsel %vm703, %v1257, %v1080
    %v1274 = vsel %vm703, %v1258, %v1082
    %v1275 = vsel %vm703, %v1259, %v1084
    %v1276 = vsel %vm720, %v1260, %v1054
    %v1277 = vsel %vm720, %v1261, %v1056
    %v1278 = vsel %vm720, %v1262, %v1058
    %v1279 = vsel %vm720, %v1263, %v1060
    %v1280 = vsel %vm720, %v1264, %v1062
    %v1281 = vsel %vm720, %v1265, %v1064
    %v1282 = vsel %vm720, %v1266, %v1066
    %v1283 = vsel %vm720, %v1267, %v1068
    %v1284 = vsel %vm720, %v1268, %v1070
    %v1285 = vsel %vm720, %v1269, %v1072
    %v1286 = vsel %vm720, %v1270, %v1074
    %v1287 = vsel %vm720, %v1271, %v1076
    %v1288 = vsel %vm720, %v1272, %v1078
    %v1289 = vsel %vm720, %v1273, %v1080
    %v1290 = vsel %vm720, %v1274, %v1082
    %v1291 = vsel %vm720, %v1275, %v1084
    %v1292 = vsel %vm737, %v1276, %v1110
    %v1293 = vsel %vm737, %v1277, %v1112
    %v1294 = vsel %vm737, %v1278, %v1114
    %v1295 = vsel %vm737, %v1279, %v1116
    %v1296 = vsel %vm737, %v1280, %v1118
    %v1297 = vsel %vm737, %v1281, %v1120
    %v1298 = vsel %vm737, %v1282, %v1122
    %v1299 = vsel %vm737, %v1283, %v1124
    %v1300 = vsel %vm737, %v1284, %v1126
    %v1301 = vsel %vm737, %v1285, %v1128
    %v1302 = vsel %vm737, %v1286, %v1130
    %v1303 = vsel %vm737, %v1287, %v1132
    %v1304 = vsel %vm737, %v1288, %v1134
    %v1305 = vsel %vm737, %v1289, %v1136
    %v1306 = vsel %vm737, %v1290, %v1138
    %v1307 = vsel %vm737, %v1291, %v1140
    %v1308 = vsel %vm754, %v1292, %v1110
    %v1309 = vsel %vm754, %v1293, %v1112
    %v1310 = vsel %vm754, %v1294, %v1114
    %v1311 = vsel %vm754, %v1295, %v1116
    %v1312 = vsel %vm754, %v1296, %v1118
    %v1313 = vsel %vm754, %v1297, %v1120
    %v1314 = vsel %vm754, %v1298, %v1122
    %v1315 = vsel %vm754, %v1299, %v1124
    %v1316 = vsel %vm754, %v1300, %v1126
    %v1317 = vsel %vm754, %v1301, %v1128
    %v1318 = vsel %vm754, %v1302, %v1130
    %v1319 = vsel %vm754, %v1303, %v1132
    %v1320 = vsel %vm754, %v1304, %v1134
    %v1321 = vsel %vm754, %v1305, %v1136
    %v1322 = vsel %vm754, %v1306, %v1138
    %v1323 = vsel %vm754, %v1307, %v1140
    %v1324 = vsel %vm771, %v1308, %v1164
    %v1325 = vsel %vm771, %v1309, %v1166
    %v1326 = vsel %vm771, %v1310, %v1168
    %v1327 = vsel %vm771, %v1311, %v1170
    %v1328 = vsel %vm771, %v1312, %v1172
    %v1329 = vsel %vm771, %v1313, %v1174
    %v1330 = vsel %vm771, %v1314, %v1176
    %v1331 = vsel %vm771, %v1315, %v1178
    %v1332 = vsel %vm771, %v1316, %v1180
    %v1333 = vsel %vm771, %v1317, %v1182
    %v1334 = vsel %vm771, %v1318, %v1184
    %v1335 = vsel %vm771, %v1319, %v1186
    %v1336 = vsel %vm771, %v1320, %v1188
    %v1337 = vsel %vm771, %v1321, %v1190
    %v1338 = vsel %vm771, %v1322, %v1192
    %v1339 = vsel %vm771, %v1323, %v1194
    %1356 = vrot.lane.b32.xlu0 %v1324, 80
    %v1357 = vpop.permute.xlu0 %1356
    %1358 = vrot.lane.b32.xlu0 %v1325, 80
    %v1359 = vpop.permute.xlu0 %1358
    %1360 = vrot.lane.b32.xlu0 %v1326, 80
    %v1361 = vpop.permute.xlu0 %1360
    %1362 = vrot.lane.b32.xlu0 %v1327, 80
    %v1363 = vpop.permute.xlu0 %1362
    %1364 = vrot.lane.b32.xlu0 %v1328, 80
    %v1365 = vpop.permute.xlu0 %1364
    %1366 = vrot.lane.b32.xlu0 %v1329, 80
    %v1367 = vpop.permute.xlu0 %1366
    %1368 = vrot.lane.b32.xlu0 %v1330, 80
    %v1369 = vpop.permute.xlu0 %1368
    %1370 = vrot.lane.b32.xlu0 %v1331, 80
    %v1371 = vpop.permute.xlu0 %1370
    %1372 = vrot.lane.b32.xlu0 %v1332, 80
    %v1373 = vpop.permute.xlu0 %1372
    %1374 = vrot.lane.b32.xlu0 %v1333, 80
    %v1375 = vpop.permute.xlu0 %1374
    %1376 = vrot.lane.b32.xlu0 %v1334, 80
    %v1377 = vpop.permute.xlu0 %1376
    %1378 = vrot.lane.b32.xlu0 %v1335, 80
    %v1379 = vpop.permute.xlu0 %1378
    %1380 = vrot.lane.b32.xlu0 %v1336, 80
    %v1381 = vpop.permute.xlu0 %1380
    %1382 = vrot.lane.b32.xlu0 %v1337, 80
    %v1383 = vpop.permute.xlu0 %1382
    %1384 = vrot.lane.b32.xlu0 %v1338, 80
    %v1385 = vpop.permute.xlu0 %1384
    %1386 = vrot.lane.b32.xlu0 %v1339, 80
    %v1387 = vpop.permute.xlu0 %1386
    %vm1404 = vcmask 654336
    %v1405 = vsel %vm1404, %v891, %v1357
    %v1406 = vsel %vm1404, %v892, %v1359
    %v1407 = vsel %vm1404, %v893, %v1361
    %v1408 = vsel %vm1404, %v894, %v1363
    %v1409 = vsel %vm1404, %v895, %v1365
    %v1410 = vsel %vm1404, %v896, %v1367
    %v1411 = vsel %vm1404, %v897, %v1369
    %v1412 = vsel %vm1404, %v898, %v1371
    %v1413 = vsel %vm1404, %v899, %v1373
    %v1414 = vsel %vm1404, %v900, %v1375
    %v1415 = vsel %vm1404, %v901, %v1377
    %v1416 = vsel %vm1404, %v902, %v1379
    %v1417 = vsel %vm1404, %v903, %v1381
    %v1418 = vsel %vm1404, %v904, %v1383
    %v1419 = vsel %vm1404, %v905, %v1385
    %v1420 = vsel %vm1404, %v906, %v1387
    %v1421 = vld [vmem:[%s1] sm:$0xff]
    %v1422 = vld [vmem:[%s1 + $0x8] sm:$0xff]
    %v1423 = vld [vmem:[%s1 + $0x10] sm:$0xff]
    %v1424 = vld [vmem:[%s1 + $0x18] sm:$0xff]
    %v1425 = vld [vmem:[%s1 + $0x20] sm:$0xff]
    %v1426 = vld [vmem:[%s1 + $0x28] sm:$0xff]
    %v1427 = vld [vmem:[%s1 + $0x30] sm:$0xff]
    %v1428 = vld [vmem:[%s1 + $0x38] sm:$0xff]
    %v1429 = vld [vmem:[%s1 + $0x40] sm:$0xff]
    %v1430 = vld [vmem:[%s1 + $0x48] sm:$0xff]
    %v1431 = vld [vmem:[%s1 + $0x50] sm:$0xff]
    %v1432 = vld [vmem:[%s1 + $0x58] sm:$0xff]
    %v1433 = vld [vmem:[%s1 + $0x60] sm:$0xff]
    %v1434 = vld [vmem:[%s1 + $0x68] sm:$0xff]
    %v1435 = vld [vmem:[%s1 + $0x70] sm:$0xff]
    %v1436 = vld [vmem:[%s1 + $0x78] sm:$0x1f]
    %v1437 = vld [vmem:[%s2] sm:$0x1]
    %v1439 = vperm.slane %v1437, 0
    %vm1441 = vcmask 1022976
    %v1443 = vsel %vm1441, %v1405, 0
    %v1446 = vsel %vm1441, %v1406, 0
    %v1449 = vsel %vm1441, %v1407, 0
    %v1452 = vsel %vm1441, %v1408, 0
    %v1455 = vsel %vm1441, %v1409, 0
    %v1458 = vsel %vm1441, %v1410, 0
    %v1461 = vsel %vm1441, %v1411, 0
    %v1464 = vsel %vm1441, %v1412, 0
    %v1467 = vsel %vm1441, %v1413, 0
    %v1470 = vsel %vm1441, %v1414, 0
    %v1473 = vsel %vm1441, %v1415, 0
    %v1476 = vsel %vm1441, %v1416, 0
    %v1479 = vsel %vm1441, %v1417, 0
    %v1482 = vsel %vm1441, %v1418, 0
    %v1485 = vsel %vm1441, %v1419, 0
    %v1488 = vsel %vm1441, %v1420, 0
    %vm1490 = vcmask 1044480
    %v1492 = vsel %vm1490, %v1436, 0
    %1494 = vmatpush.msra.mxu0 %v1492
    %1495 = vmatpush.msra.mxu0 %v1435
    %1496 = vmatpush.msra.mxu0 %v1434
    %1497 = vmatpush.msra.mxu0 %v1433
    %1498 = vmatpush.msra.mxu0 %v1432
    %1499 = vmatpush.msra.mxu0 %v1431
    %1500 = vmatpush.msra.mxu0 %v1430
    %1501 = vmatpush.msra.mxu0 %v1429
    %1502 = vmatpush.msra.mxu0 %v1428
    %1503 = vmatpush.msra.mxu0 %v1427
    %1504 = vmatpush.msra.mxu0 %v1426
    %1505 = vmatpush.msra.mxu0 %v1425
    %1506 = vmatpush.msra.mxu0 %v1424
    %1507 = vmatpush.msra.mxu0 %v1423
    %1508 = vmatpush.msra.mxu0 %v1422
    %1509 = vmatpush.msra.mxu0 %v1421
    %1510 = vmatmul.f32.gmra.mxu0 %v1443
    %v1511 = vpop.f32.mrf.mxu0
    %v1512 = vadd.f32 %v1439, %v1511
    %1513 = vmatmul.f32.gmra.mxu0 %v1446
    %v1514 = vpop.f32.mrf.mxu0
    %v1515 = vadd.f32 %v1439, %v1514
    %1516 = vmatmul.f32.gmra.mxu0 %v1449
    %v1517 = vpop.f32.mrf.mxu0
    %v1518 = vadd.f32 %v1439, %v1517
    %1519 = vmatmul.f32.gmra.mxu0 %v1452
    %v1520 = vpop.f32.mrf.mxu0
    %v1521 = vadd.f32 %v1439, %v1520
    %1522 = vmatmul.f32.gmra.mxu0 %v1455
    %v1523 = vpop.f32.mrf.mxu0
    %v1524 = vadd.f32 %v1439, %v1523
    %1525 = vmatmul.f32.gmra.mxu0 %v1458
    %v1526 = vpop.f32.mrf.mxu0
    %v1527 = vadd.f32 %v1439, %v1526
    %1528 = vmatmul.f32.gmra.mxu0 %v1461
    %v1529 = vpop.f32.mrf.mxu0
    %v1530 = vadd.f32 %v1439, %v1529
    %1531 = vmatmul.f32.gmra.mxu0 %v1464
    %v1532 = vpop.f32.mrf.mxu0
    %v1533 = vadd.f32 %v1439, %v1532
    %1534 = vmatmul.f32.gmra.mxu0 %v1467
    %v1535 = vpop.f32.mrf.mxu0
    %v1536 = vadd.f32 %v1439, %v1535
    %1537 = vmatmul.f32.gmra.mxu0 %v1470
    %v1538 = vpop.f32.mrf.mxu0
    %v1539 = vadd.f32 %v1439, %v1538
    %1540 = vmatmul.f32.gmra.mxu0 %v1473
    %v1541 = vpop.f32.mrf.mxu0
    %v1542 = vadd.f32 %v1439, %v1541
    %1543 = vmatmul.f32.gmra.mxu0 %v1476
    %v1544 = vpop.f32.mrf.mxu0
    %v1545 = vadd.f32 %v1439, %v1544
    %1546 = vmatmul.f32.gmra.mxu0 %v1479
    %v1547 = vpop.f32.mrf.mxu0
    %v1548 = vadd.f32 %v1439, %v1547
    %1549 = vmatmul.f32.gmra.mxu0 %v1482
    %v1550 = vpop.f32.mrf.mxu0
    %v1551 = vadd.f32 %v1439, %v1550
    %1552 = vmatmul.f32.gmra.mxu0 %v1485
    %v1553 = vpop.f32.mrf.mxu0
    %v1554 = vadd.f32 %v1439, %v1553
    %1555 = vmatmul.f32.gmra.mxu0 %v1488
    %v1556 = vpop.f32.mrf.mxu0
    %v1557 = vadd.f32 %v1439, %v1556
    %1558 = vdwg.mxu0
    %v1559 = vmax.f32 %v1512, 0.0
    %v1560 = vmax.f32 %v1515, 0.0
    %v1561 = vmax.f32 %v1518, 0.0
    %v1562 = vmax.f32 %v1521, 0.0
    %v1563 = vmax.f32 %v1524, 0.0
    %v1564 = vmax.f32 %v1527, 0.0
    %v1565 = vmax.f32 %v1530, 0.0
    %v1566 = vmax.f32 %v1533, 0.0
    %v1567 = vmax.f32 %v1536, 0.0
    %v1568 = vmax.f32 %v1539, 0.0
    %v1569 = vmax.f32 %v1542, 0.0
    %v1570 = vmax.f32 %v1545, 0.0
    %v1571 = vmax.f32 %v1548, 0.0
    %v1572 = vmax.f32 %v1551, 0.0
    %v1573 = vmax.f32 %v1554, 0.0
    %v1574 = vmax.f32 %v1557, 0.0
    %v1592 = vrot.slane 0.0, 6
    %v1593 = vrot.slane %v1559, 6
    %v1594 = vrot.slane %v1560, 6
    %v1595 = vrot.slane %v1561, 6
    %v1596 = vrot.slane %v1562, 6
    %v1597 = vrot.slane %v1563, 6
    %v1598 = vrot.slane %v1564, 6
    %v1599 = vrot.slane %v1565, 6
    %v1600 = vrot.slane %v1566, 6
    %v1601 = vrot.slane %v1567, 6
    %v1602 = vrot.slane %v1568, 6
    %v1603 = vrot.slane %v1569, 6
    %v1604 = vrot.slane %v1570, 6
    %v1605 = vrot.slane %v1571, 6
    %v1606 = vrot.slane %v1572, 6
    %v1607 = vrot.slane %v1573, 6
    %v1608 = vrot.slane %v1574, 6
    %vm1626 = vcmask 1041408
    %v1627 = vsel %vm1626, 0.0, %v1592
    %v1628 = vsel %vm1626, 0.0, %v1593
    %v1629 = vsel %vm1626, 0.0, %v1594
    %v1630 = vsel %vm1626, 0.0, %v1595
    %v1631 = vsel %vm1626, 0.0, %v1596
    %v1632 = vsel %vm1626, 0.0, %v1597
    %v1633 = vsel %vm1626, 0.0, %v1598
    %v1634 = vsel %vm1626, 0.0, %v1599
    %v1635 = vsel %vm1626, 0.0, %v1600
    %v1636 = vsel %vm1626, 0.0, %v1601
    %v1637 = vsel %vm1626, 0.0, %v1602
    %v1638 = vsel %vm1626, 0.0, %v1603
    %v1639 = vsel %vm1626, 0.0, %v1604
    %v1640 = vsel %vm1626, 0.0, %v1605
    %v1641 = vsel %vm1626, 0.0, %v1606
    %v1642 = vsel %vm1626, 0.0, %v1607
    %v1643 = vsel %vm1626, 0.0, %v1608
    %v1644 = vsel %vm1626, %v1592, 0.0
    %v1645 = vsel %vm1626, %v1593, 0.0
    %v1646 = vsel %vm1626, %v1594, 0.0
    %v1647 = vsel %vm1626, %v1595, 0.0
    %v1648 = vsel %vm1626, %v1596, 0.0
    %v1649 = vsel %vm1626, %v1597, 0.0
    %v1650 = vsel %vm1626, %v1598, 0.0
    %v1651 = vsel %vm1626, %v1599, 0.0
    %v1652 = vsel %vm1626, %v1600, 0.0
    %v1653 = vsel %vm1626, %v1601, 0.0
    %v1654 = vsel %vm1626, %v1602, 0.0
    %v1655 = vsel %vm1626, %v1603, 0.0
    %v1656 = vsel %vm1626, %v1604, 0.0
    %v1657 = vsel %vm1626, %v1605, 0.0
    %v1658 = vsel %vm1626, %v1606, 0.0
    %v1659 = vsel %vm1626, %v1607, 0.0
    %v1660 = vsel %vm1626, %v1608, 0.0
    %v1687 = vrot.slane %v1627, 1
    %v1688 = vrot.slane %v1644, 1
    %v1689 = vsel %vm123, %v1687, %v1688
    %v1690 = vrot.slane %v1628, 1
    %v1691 = vrot.slane %v1645, 1
    %v1692 = vsel %vm123, %v1690, %v1691
    %v1693 = vrot.slane %v1629, 1
    %v1694 = vrot.slane %v1646, 1
    %v1695 = vsel %vm123, %v1693, %v1694
    %v1696 = vrot.slane %v1630, 1
    %v1697 = vrot.slane %v1647, 1
    %v1698 = vsel %vm123, %v1696, %v1697
    %v1699 = vrot.slane %v1631, 1
    %v1700 = vrot.slane %v1648, 1
    %v1701 = vsel %vm123, %v1699, %v1700
    %v1702 = vrot.slane %v1632, 1
    %v1703 = vrot.slane %v1649, 1
    %v1704 = vsel %vm123, %v1702, %v1703
    %v1705 = vrot.slane %v1633, 1
    %v1706 = vrot.slane %v1650, 1
    %v1707 = vsel %vm123, %v1705, %v1706
    %v1708 = vrot.slane %v1636, 1
    %v1709 = vrot.slane %v1653, 1
    %v1710 = vsel %vm123, %v1708, %v1709
    %v1711 = vrot.slane %v1637, 1
    %v1712 = vrot.slane %v1654, 1
    %v1713 = vsel %vm123, %v1711, %v1712
    %v1714 = vrot.slane %v1638, 1
    %v1715 = vrot.slane %v1655, 1
    %v1716 = vsel %vm123, %v1714, %v1715
    %v1717 = vrot.slane %v1639, 1
    %v1718 = vrot.slane %v1656, 1
    %v1719 = vsel %vm123, %v1717, %v1718
    %v1720 = vrot.slane %v1640, 1
    %v1721 = vrot.slane %v1657, 1
    %v1722 = vsel %vm123, %v1720, %v1721
    %v1723 = vrot.slane %v1641, 1
    %v1724 = vrot.slane %v1658, 1
    %v1725 = vsel %vm123, %v1723, %v1724
    %1726 = vrot.lane.b32.xlu0 %v1689, 16
    %v1727 = vpop.permute.xlu0 %1726
    %1728 = vrot.lane.b32.xlu0 %v1692, 16
    %v1729 = vpop.permute.xlu0 %1728
    %1730 = vrot.lane.b32.xlu0 %v1695, 16
    %v1731 = vpop.permute.xlu0 %1730
    %1732 = vrot.lane.b32.xlu0 %v1698, 16
    %v1733 = vpop.permute.xlu0 %1732
    %1734 = vrot.lane.b32.xlu0 %v1701, 16
    %v1735 = vpop.permute.xlu0 %1734
    %1736 = vrot.lane.b32.xlu0 %v1704, 16
    %v1737 = vpop.permute.xlu0 %1736
    %1738 = vrot.lane.b32.xlu0 %v1707, 16
    %v1739 = vpop.permute.xlu0 %1738
    %1740 = vrot.lane.b32.xlu0 %v1710, 16
    %v1741 = vpop.permute.xlu0 %1740
    %1742 = vrot.lane.b32.xlu0 %v1713, 16
    %v1743 = vpop.permute.xlu0 %1742
    %1744 = vrot.lane.b32.xlu0 %v1716, 16
    %v1745 = vpop.permute.xlu0 %1744
    %1746 = vrot.lane.b32.xlu0 %v1719, 16
    %v1747 = vpop.permute.xlu0 %1746
    %1748 = vrot.lane.b32.xlu0 %v1722, 16
    %v1749 = vpop.permute.xlu0 %1748
    %1750 = vrot.lane.b32.xlu0 %v1725, 16
    %v1751 = vpop.permute.xlu0 %1750
    %v1765 = vrot.slane %v1627, 2
    %v1766 = vrot.slane %v1644, 2
    %v1767 = vsel %vm220, %v1765, %v1766
    %v1768 = vrot.slane %v1628, 2
    %v1769 = vrot.slane %v1645, 2
    %v1770 = vsel %vm220, %v1768, %v1769
    %v1771 = vrot.slane %v1629, 2
    %v1772 = vrot.slane %v1646, 2
    %v1773 = vsel %vm220, %v1771, %v1772
    %v1774 = vrot.slane %v1630, 2
    %v1775 = vrot.slane %v1647, 2
    %v1776 = vsel %vm220, %v1774, %v1775
    %v1777 = vrot.slane %v1631, 2
    %v1778 = vrot.slane %v1648, 2
    %v1779 = vsel %vm220, %v1777, %v1778
    %v1780 = vrot.slane %v1632, 2
    %v1781 = vrot.slane %v1649, 2
    %v1782 = vsel %vm220, %v1780, %v1781
    %v1783 = vrot.slane %v1633, 2
    %v1784 = vrot.slane %v1650, 2
    %v1785 = vsel %vm220, %v1783, %v1784
    %v1786 = vrot.slane %v1636, 2
    %v1787 = vrot.slane %v1653, 2
    %v1788 = vsel %vm220, %v1786, %v1787
    %v1789 = vrot.slane %v1637, 2
    %v1790 = vrot.slane %v1654, 2
    %v1791 = vsel %vm220, %v1789, %v1790
    %v1792 = vrot.slane %v1638, 2
    %v1793 = vrot.slane %v1655, 2
    %v1794 = vsel %vm220, %v1792, %v1793
    %v1795 = vrot.slane %v1639, 2
    %v1796 = vrot.slane %v1656, 2
    %v1797 = vsel %vm220, %v1795, %v1796
    %v1798 = vrot.slane %v1640, 2
    %v1799 = vrot.slane %v1657, 2
    %v1800 = vsel %vm220, %v1798, %v1799
    %v1801 = vrot.slane %v1641, 2
    %v1802 = vrot.slane %v1658, 2
    %v1803 = vsel %vm220, %v1801, %v1802
    %1804 = vrot.lane.b32.xlu0 %v1767, 32
    %v1805 = vpop.permute.xlu0 %1804
    %1806 = vrot.lane.b32.xlu0 %v1770, 32
    %v1807 = vpop.permute.xlu0 %1806
    %1808 = vrot.lane.b32.xlu0 %v1773, 32
    %v1809 = vpop.permute.xlu0 %1808
    %1810 = vrot.lane.b32.xlu0 %v1776, 32
    %v1811 = vpop.permute.xlu0 %1810
    %1812 = vrot.lane.b32.xlu0 %v1779, 32
    %v1813 = vpop.permute.xlu0 %1812
    %1814 = vrot.lane.b32.xlu0 %v1782, 32
    %v1815 = vpop.permute.xlu0 %1814
    %1816 = vrot.lane.b32.xlu0 %v1785, 32
    %v1817 = vpop.permute.xlu0 %1816
    %1818 = vrot.lane.b32.xlu0 %v1788, 32
    %v1819 = vpop.permute.xlu0 %1818
    %1820 = vrot.lane.b32.xlu0 %v1791, 32
    %v1821 = vpop.permute.xlu0 %1820
    %1822 = vrot.lane.b32.xlu0 %v1794, 32
    %v1823 = vpop.permute.xlu0 %1822
    %1824 = vrot.lane.b32.xlu0 %v1797, 32
    %v1825 = vpop.permute.xlu0 %1824
    %1826 = vrot.lane.b32.xlu0 %v1800, 32
    %v1827 = vpop.permute.xlu0 %1826
    %1828 = vrot.lane.b32.xlu0 %v1803, 32
    %v1829 = vpop.permute.xlu0 %1828
    %v1843 = vrot.slane %v1627, 3
    %v1844 = vrot.slane %v1644, 3
    %v1845 = vsel %vm1490, %v1843, %v1844
    %v1846 = vrot.slane %v1628, 3
    %v1847 = vrot.slane %v1645, 3
    %v1848 = vsel %vm1490, %v1846, %v1847
    %v1849 = vrot.slane %v1629, 3
    %v1850 = vrot.slane %v1646, 3
    %v1851 = vsel %vm1490, %v1849, %v1850
    %v1852 = vrot.slane %v1630, 3
    %v1853 = vrot.slane %v1647, 3
    %v1854 = vsel %vm1490, %v1852, %v1853
    %v1855 = vrot.slane %v1631, 3
    %v1856 = vrot.slane %v1648, 3
    %v1857 = vsel %vm1490, %v1855, %v1856
    %v1858 = vrot.slane %v1632, 3
    %v1859 = vrot.slane %v1649, 3
    %v1860 = vsel %vm1490, %v1858, %v1859
    %v1861 = vrot.slane %v1633, 3
    %v1862 = vrot.slane %v1650, 3
    %v1863 = vsel %vm1490, %v1861, %v1862
    %v1864 = vrot.slane %v1636, 3
    %v1865 = vrot.slane %v1653, 3
    %v1866 = vsel %vm1490, %v1864, %v1865
    %v1867 = vrot.slane %v1637, 3
    %v1868 = vrot.slane %v1654, 3
    %v1869 = vsel %vm1490, %v1867, %v1868
    %v1870 = vrot.slane %v1638, 3
    %v1871 = vrot.slane %v1655, 3
    %v1872 = vsel %vm1490, %v1870, %v1871
    %v1873 = vrot.slane %v1639, 3
    %v1874 = vrot.slane %v1656, 3
    %v1875 = vsel %vm1490, %v1873, %v1874
    %v1876 = vrot.slane %v1640, 3
    %v1877 = vrot.slane %v1657, 3
    %v1878 = vsel %vm1490, %v1876, %v1877
    %v1879 = vrot.slane %v1641, 3
    %v1880 = vrot.slane %v1658, 3
    %v1881 = vsel %vm1490, %v1879, %v1880
    %1882 = vrot.lane.b32.xlu0 %v1845, 48
    %v1883 = vpop.permute.xlu0 %1882
    %1884 = vrot.lane.b32.xlu0 %v1848, 48
    %v1885 = vpop.permute.xlu0 %1884
    %1886 = vrot.lane.b32.xlu0 %v1851, 48
    %v1887 = vpop.permute.xlu0 %1886
    %1888 = vrot.lane.b32.xlu0 %v1854, 48
    %v1889 = vpop.permute.xlu0 %1888
    %1890 = vrot.lane.b32.xlu0 %v1857, 48
    %v1891 = vpop.permute.xlu0 %1890
    %1892 = vrot.lane.b32.xlu0 %v1860, 48
    %v1893 = vpop.permute.xlu0 %1892
    %1894 = vrot.lane.b32.xlu0 %v1863, 48
    %v1895 = vpop.permute.xlu0 %1894
    %1896 = vrot.lane.b32.xlu0 %v1866, 48
    %v1897 = vpop.permute.xlu0 %1896
    %1898 = vrot.lane.b32.xlu0 %v1869, 48
    %v1899 = vpop.permute.xlu0 %1898
    %1900 = vrot.lane.b32.xlu0 %v1872, 48
    %v1901 = vpop.permute.xlu0 %1900
    %1902 = vrot.lane.b32.xlu0 %v1875, 48
    %v1903 = vpop.permute.xlu0 %1902
    %1904 = vrot.lane.b32.xlu0 %v1878, 48
    %v1905 = vpop.permute.xlu0 %1904
    %1906 = vrot.lane.b32.xlu0 %v1881, 48
    %v1907 = vpop.permute.xlu0 %1906
    %vm1921 = vcmask 1043456
    %v1922 = vrot.slane %v1627, 4
    %v1923 = vrot.slane %v1644, 4
    %v1924 = vsel %vm1921, %v1922, %v1923
    %v1925 = vrot.slane %v1628, 4
    %v1926 = vrot.slane %v1645, 4
    %v1927 = vsel %vm1921, %v1925, %v1926
    %v1928 = vrot.slane %v1629, 4
    %v1929 = vrot.slane %v1646, 4
    %v1930 = vsel %vm1921, %v1928, %v1929
    %v1931 = vrot.slane %v1630, 4
    %v1932 = vrot.slane %v1647, 4
    %v1933 = vsel %vm1921, %v1931, %v1932
    %v1934 = vrot.slane %v1631, 4
    %v1935 = vrot.slane %v1648, 4
    %v1936 = vsel %vm1921, %v1934, %v1935
    %v1937 = vrot.slane %v1632, 4
    %v1938 = vrot.slane %v1649, 4
    %v1939 = vsel %vm1921, %v1937, %v1938
    %v1940 = vrot.slane %v1633, 4
    %v1941 = vrot.slane %v1650, 4
    %v1942 = vsel %vm1921, %v1940, %v1941
    %v1943 = vrot.slane %v1636, 4
    %v1944 = vrot.slane %v1653, 4
    %v1945 = vsel %vm1921, %v1943, %v1944
    %v1946 = vrot.slane %v1637, 4
    %v1947 = vrot.slane %v1654, 4
    %v1948 = vsel %vm1921, %v1946, %v1947
    %v1949 = vrot.slane %v1638, 4
    %v1950 = vrot.slane %v1655, 4
    %v1951 = vsel %vm1921, %v1949, %v1950
    %v1952 = vrot.slane %v1639, 4
    %v1953 = vrot.slane %v1656, 4
    %v1954 = vsel %vm1921, %v1952, %v1953
    %v1955 = vrot.slane %v1640, 4
    %v1956 = vrot.slane %v1657, 4
    %v1957 = vsel %vm1921, %v1955, %v1956
    %v1958 = vrot.slane %v1641, 4
    %v1959 = vrot.slane %v1658, 4
    %v1960 = vsel %vm1921, %v1958, %v1959
    %1961 = vrot.lane.b32.xlu0 %v1924, 64
    %v1962 = vpop.permute.xlu0 %1961
    %1963 = vrot.lane.b32.xlu0 %v1927, 64
    %v1964 = vpop.permute.xlu0 %1963
    %1965 = vrot.lane.b32.xlu0 %v1930, 64
    %v1966 = vpop.permute.xlu0 %1965
    %1967 = vrot.lane.b32.xlu0 %v1933, 64
    %v1968 = vpop.permute.xlu0 %1967
    %1969 = vrot.lane.b32.xlu0 %v1936, 64
    %v1970 = vpop.permute.xlu0 %1969
    %1971 = vrot.lane.b32.xlu0 %v1939, 64
    %v1972 = vpop.permute.xlu0 %1971
    %1973 = vrot.lane.b32.xlu0 %v1942, 64
    %v1974 = vpop.permute.xlu0 %1973
    %1975 = vrot.lane.b32.xlu0 %v1945, 64
    %v1976 = vpop.permute.xlu0 %1975
    %1977 = vrot.lane.b32.xlu0 %v1948, 64
    %v1978 = vpop.permute.xlu0 %1977
    %1979 = vrot.lane.b32.xlu0 %v1951, 64
    %v1980 = vpop.permute.xlu0 %1979
    %1981 = vrot.lane.b32.xlu0 %v1954, 64
    %v1982 = vpop.permute.xlu0 %1981
    %1983 = vrot.lane.b32.xlu0 %v1957, 64
    %v1984 = vpop.permute.xlu0 %1983
    %1985 = vrot.lane.b32.xlu0 %v1960, 64
    %v1986 = vpop.permute.xlu0 %1985
    %2002 = vrot.lane.b32.xlu0 %v1627, 80
    %v2003 = vpop.permute.xlu0 %2002
    %2004 = vrot.lane.b32.xlu0 %v1628, 80
    %v2005 = vpop.permute.xlu0 %2004
    %2006 = vrot.lane.b32.xlu0 %v1629, 80
    %v2007 = vpop.permute.xlu0 %2006
    %2008 = vrot.lane.b32.xlu0 %v1630, 80
    %v2009 = vpop.permute.xlu0 %2008
    %2010 = vrot.lane.b32.xlu0 %v1631, 80
    %v2011 = vpop.permute.xlu0 %2010
    %2012 = vrot.lane.b32.xlu0 %v1632, 80
    %v2013 = vpop.permute.xlu0 %2012
    %2014 = vrot.lane.b32.xlu0 %v1633, 80
    %v2015 = vpop.permute.xlu0 %2014
    %2016 = vrot.lane.b32.xlu0 %v1634, 80
    %v2017 = vpop.permute.xlu0 %2016
    %2018 = vrot.lane.b32.xlu0 %v1636, 80
    %v2019 = vpop.permute.xlu0 %2018
    %2020 = vrot.lane.b32.xlu0 %v1637, 80
    %v2021 = vpop.permute.xlu0 %2020
    %2022 = vrot.lane.b32.xlu0 %v1638, 80
    %v2023 = vpop.permute.xlu0 %2022
    %2024 = vrot.lane.b32.xlu0 %v1639, 80
    %v2025 = vpop.permute.xlu0 %2024
    %2026 = vrot.lane.b32.xlu0 %v1640, 80
    %v2027 = vpop.permute.xlu0 %2026
    %2028 = vrot.lane.b32.xlu0 %v1641, 80
    %v2029 = vpop.permute.xlu0 %2028
    %2030 = vrot.lane.b32.xlu0 %v1642, 80
    %v2031 = vpop.permute.xlu0 %2030
    %v2049 = vrot.slane %v1634, 1
    %v2050 = vrot.slane %v1651, 1
    %v2051 = vsel %vm123, %v2049, %v2050
    %v2052 = vrot.slane %v1642, 1
    %v2053 = vrot.slane %v1659, 1
    %v2054 = vsel %vm123, %v2052, %v2053
    %2055 = vrot.lane.b32.xlu0 %v1689, 96
    %v2056 = vpop.permute.xlu0 %2055
    %2057 = vrot.lane.b32.xlu0 %v1692, 96
    %v2058 = vpop.permute.xlu0 %2057
    %2059 = vrot.lane.b32.xlu0 %v1695, 96
    %v2060 = vpop.permute.xlu0 %2059
    %2061 = vrot.lane.b32.xlu0 %v1698, 96
    %v2062 = vpop.permute.xlu0 %2061
    %2063 = vrot.lane.b32.xlu0 %v1701, 96
    %v2064 = vpop.permute.xlu0 %2063
    %2065 = vrot.lane.b32.xlu0 %v1704, 96
    %v2066 = vpop.permute.xlu0 %2065
    %2067 = vrot.lane.b32.xlu0 %v1707, 96
    %v2068 = vpop.permute.xlu0 %2067
    %2069 = vrot.lane.b32.xlu0 %v2051, 96
    %v2070 = vpop.permute.xlu0 %2069
    %2071 = vrot.lane.b32.xlu0 %v1710, 96
    %v2072 = vpop.permute.xlu0 %2071
    %2073 = vrot.lane.b32.xlu0 %v1713, 96
    %v2074 = vpop.permute.xlu0 %2073
    %2075 = vrot.lane.b32.xlu0 %v1716, 96
    %v2076 = vpop.permute.xlu0 %2075
    %2077 = vrot.lane.b32.xlu0 %v1719, 96
    %v2078 = vpop.permute.xlu0 %2077
    %2079 = vrot.lane.b32.xlu0 %v1722, 96
    %v2080 = vpop.permute.xlu0 %2079
    %2081 = vrot.lane.b32.xlu0 %v1725, 96
    %v2082 = vpop.permute.xlu0 %2081
    %2083 = vrot.lane.b32.xlu0 %v2054, 96
    %v2084 = vpop.permute.xlu0 %2083
    %v2100 = vrot.slane %v1634, 2
    %v2101 = vrot.slane %v1651, 2
    %v2102 = vsel %vm220, %v2100, %v2101
    %v2103 = vrot.slane %v1642, 2
    %v2104 = vrot.slane %v1659, 2
    %v2105 = vsel %vm220, %v2103, %v2104
    %2106 = vrot.lane.b32.xlu0 %v1767, 112
    %v2107 = vpop.permute.xlu0 %2106
    %2108 = vrot.lane.b32.xlu0 %v1770, 112
    %v2109 = vpop.permute.xlu0 %2108
    %2110 = vrot.lane.b32.xlu0 %v1773, 112
    %v2111 = vpop.permute.xlu0 %2110
    %2112 = vrot.lane.b32.xlu0 %v1776, 112
    %v2113 = vpop.permute.xlu0 %2112
    %2114 = vrot.lane.b32.xlu0 %v1779, 112
    %v2115 = vpop.permute.xlu0 %2114
    %2116 = vrot.lane.b32.xlu0 %v1782, 112
    %v2117 = vpop.permute.xlu0 %2116
    %2118 = vrot.lane.b32.xlu0 %v1785, 112
    %v2119 = vpop.permute.xlu0 %2118
    %2120 = vrot.lane.b32.xlu0 %v2102, 112
    %v2121 = vpop.permute.xlu0 %2120
    %2122 = vrot.lane.b32.xlu0 %v1788, 112
    %v2123 = vpop.permute.xlu0 %2122
    %2124 = vrot.lane.b32.xlu0 %v1791, 112
    %v2125 = vpop.permute.xlu0 %2124
    %2126 = vrot.lane.b32.xlu0 %v1794, 112
    %v2127 = vpop.permute.xlu0 %2126
    %2128 = vrot.lane.b32.xlu0 %v1797, 112
    %v2129 = vpop.permute.xlu0 %2128
    %2130 = vrot.lane.b32.xlu0 %v1800, 112
    %v2131 = vpop.permute.xlu0 %2130
    %2132 = vrot.lane.b32.xlu0 %v1803, 112
    %v2133 = vpop.permute.xlu0 %2132
    %2134 = vrot.lane.b32.xlu0 %v2105, 112
    %v2135 = vpop.permute.xlu0 %2134
    %v2151 = vrot.slane %v1634, 3
    %v2152 = vrot.slane %v1651, 3
    %v2153 = vsel %vm1490, %v2151, %v2152
    %v2154 = vrot.slane %v1642, 3
    %v2155 = vrot.slane %v1659, 3
    %v2156 = vsel %vm1490, %v2154, %v2155
    %v2172 = vrot.slane %v1634, 4
    %v2173 = vrot.slane %v1651, 4
    %v2174 = vsel %vm1921, %v2172, %v2173
    %v2175 = vrot.slane %v1642, 4
    %v2176 = vrot.slane %v1659, 4
    %v2177 = vsel %vm1921, %v2175, %v2176
    %2178 = vrot.lane.b32.xlu0 %v1924, 16
    %v2179 = vpop.permute.xlu0 %2178
    %2180 = vrot.lane.b32.xlu0 %v1927, 16
    %v2181 = vpop.permute.xlu0 %2180
    %2182 = vrot.lane.b32.xlu0 %v1930, 16
    %v2183 = vpop.permute.xlu0 %2182
    %2184 = vrot.lane.b32.xlu0 %v1933, 16
    %v2185 = vpop.permute.xlu0 %2184
    %2186 = vrot.lane.b32.xlu0 %v1936, 16
    %v2187 = vpop.permute.xlu0 %2186
    %2188 = vrot.lane.b32.xlu0 %v1939, 16
    %v2189 = vpop.permute.xlu0 %2188
    %2190 = vrot.lane.b32.xlu0 %v1942, 16
    %v2191 = vpop.permute.xlu0 %2190
    %2192 = vrot.lane.b32.xlu0 %v2174, 16
    %v2193 = vpop.permute.xlu0 %2192
    %2194 = vrot.lane.b32.xlu0 %v1945, 16
    %v2195 = vpop.permute.xlu0 %2194
    %2196 = vrot.lane.b32.xlu0 %v1948, 16
    %v2197 = vpop.permute.xlu0 %2196
    %2198 = vrot.lane.b32.xlu0 %v1951, 16
    %v2199 = vpop.permute.xlu0 %2198
    %2200 = vrot.lane.b32.xlu0 %v1954, 16
    %v2201 = vpop.permute.xlu0 %2200
    %2202 = vrot.lane.b32.xlu0 %v1957, 16
    %v2203 = vpop.permute.xlu0 %2202
    %2204 = vrot.lane.b32.xlu0 %v1960, 16
    %v2205 = vpop.permute.xlu0 %2204
    %2206 = vrot.lane.b32.xlu0 %v2177, 16
    %v2207 = vpop.permute.xlu0 %2206
    %2225 = vrot.lane.b32.xlu0 %v1628, 32
    %v2226 = vpop.permute.xlu0 %2225
    %2227 = vrot.lane.b32.xlu0 %v1629, 32
    %v2228 = vpop.permute.xlu0 %2227
    %2229 = vrot.lane.b32.xlu0 %v1630, 32
    %v2230 = vpop.permute.xlu0 %2229
    %2231 = vrot.lane.b32.xlu0 %v1631, 32
    %v2232 = vpop.permute.xlu0 %2231
    %2233 = vrot.lane.b32.xlu0 %v1632, 32
    %v2234 = vpop.permute.xlu0 %2233
    %2235 = vrot.lane.b32.xlu0 %v1633, 32
    %v2236 = vpop.permute.xlu0 %2235
    %2237 = vrot.lane.b32.xlu0 %v1634, 32
    %v2238 = vpop.permute.xlu0 %2237
    %2239 = vrot.lane.b32.xlu0 %v1635, 32
    %v2240 = vpop.permute.xlu0 %2239
    %2241 = vrot.lane.b32.xlu0 %v1636, 32
    %v2242 = vpop.permute.xlu0 %2241
    %2243 = vrot.lane.b32.xlu0 %v1637, 32
    %v2244 = vpop.permute.xlu0 %2243
    %2245 = vrot.lane.b32.xlu0 %v1638, 32
    %v2246 = vpop.permute.xlu0 %2245
    %2247 = vrot.lane.b32.xlu0 %v1639, 32
    %v2248 = vpop.permute.xlu0 %2247
    %2249 = vrot.lane.b32.xlu0 %v1640, 32
    %v2250 = vpop.permute.xlu0 %2249
    %2251 = vrot.lane.b32.xlu0 %v1641, 32
    %v2252 = vpop.permute.xlu0 %2251
    %2253 = vrot.lane.b32.xlu0 %v1642, 32
    %v2254 = vpop.permute.xlu0 %2253
    %2255 = vrot.lane.b32.xlu0 %v1643, 32
    %v2256 = vpop.permute.xlu0 %2255
    %v2275 = vrot.slane %v1635, 1
    %v2276 = vrot.slane %v1652, 1
    %v2277 = vsel %vm123, %v2275, %v2276
    %v2278 = vrot.slane %v1643, 1
    %v2279 = vrot.slane %v1660, 1
    %v2280 = vsel %vm123, %v2278, %v2279
    %2281 = vrot.lane.b32.xlu0 %v1692, 48
    %v2282 = vpop.permute.xlu0 %2281
    %2283 = vrot.lane.b32.xlu0 %v1695, 48
    %v2284 = vpop.permute.xlu0 %2283
    %2285 = vrot.lane.b32.xlu0 %v1698, 48
    %v2286 = vpop.permute.xlu0 %2285
    %2287 = vrot.lane.b32.xlu0 %v1701, 48
    %v2288 = vpop.permute.xlu0 %2287
    %2289 = vrot.lane.b32.xlu0 %v1704, 48
    %v2290 = vpop.permute.xlu0 %2289
    %2291 = vrot.lane.b32.xlu0 %v1707, 48
    %v2292 = vpop.permute.xlu0 %2291
    %2293 = vrot.lane.b32.xlu0 %v2051, 48
    %v2294 = vpop.permute.xlu0 %2293
    %2295 = vrot.lane.b32.xlu0 %v2277, 48
    %v2296 = vpop.permute.xlu0 %2295
    %2297 = vrot.lane.b32.xlu0 %v1710, 48
    %v2298 = vpop.permute.xlu0 %2297
    %2299 = vrot.lane.b32.xlu0 %v1713, 48
    %v2300 = vpop.permute.xlu0 %2299
    %2301 = vrot.lane.b32.xlu0 %v1716, 48
    %v2302 = vpop.permute.xlu0 %2301
    %2303 = vrot.lane.b32.xlu0 %v1719, 48
    %v2304 = vpop.permute.xlu0 %2303
    %2305 = vrot.lane.b32.xlu0 %v1722, 48
    %v2306 = vpop.permute.xlu0 %2305
    %2307 = vrot.lane.b32.xlu0 %v1725, 48
    %v2308 = vpop.permute.xlu0 %2307
    %2309 = vrot.lane.b32.xlu0 %v2054, 48
    %v2310 = vpop.permute.xlu0 %2309
    %2311 = vrot.lane.b32.xlu0 %v2280, 48
    %v2312 = vpop.permute.xlu0 %2311
    %v2329 = vrot.slane %v1635, 2
    %v2330 = vrot.slane %v1652, 2
    %v2331 = vsel %vm220, %v2329, %v2330
    %v2332 = vrot.slane %v1643, 2
    %v2333 = vrot.slane %v1660, 2
    %v2334 = vsel %vm220, %v2332, %v2333
    %2335 = vrot.lane.b32.xlu0 %v1770, 64
    %v2336 = vpop.permute.xlu0 %2335
    %2337 = vrot.lane.b32.xlu0 %v1773, 64
    %v2338 = vpop.permute.xlu0 %2337
    %2339 = vrot.lane.b32.xlu0 %v1776, 64
    %v2340 = vpop.permute.xlu0 %2339
    %2341 = vrot.lane.b32.xlu0 %v1779, 64
    %v2342 = vpop.permute.xlu0 %2341
    %2343 = vrot.lane.b32.xlu0 %v1782, 64
    %v2344 = vpop.permute.xlu0 %2343
    %2345 = vrot.lane.b32.xlu0 %v1785, 64
    %v2346 = vpop.permute.xlu0 %2345
    %2347 = vrot.lane.b32.xlu0 %v2102, 64
    %v2348 = vpop.permute.xlu0 %2347
    %2349 = vrot.lane.b32.xlu0 %v2331, 64
    %v2350 = vpop.permute.xlu0 %2349
    %2351 = vrot.lane.b32.xlu0 %v1788, 64
    %v2352 = vpop.permute.xlu0 %2351
    %2353 = vrot.lane.b32.xlu0 %v1791, 64
    %v2354 = vpop.permute.xlu0 %2353
    %2355 = vrot.lane.b32.xlu0 %v1794, 64
    %v2356 = vpop.permute.xlu0 %2355
    %2357 = vrot.lane.b32.xlu0 %v1797, 64
    %v2358 = vpop.permute.xlu0 %2357
    %2359 = vrot.lane.b32.xlu0 %v1800, 64
    %v2360 = vpop.permute.xlu0 %2359
    %2361 = vrot.lane.b32.xlu0 %v1803, 64
    %v2362 = vpop.permute.xlu0 %2361
    %2363 = vrot.lane.b32.xlu0 %v2105, 64
    %v2364 = vpop.permute.xlu0 %2363
    %2365 = vrot.lane.b32.xlu0 %v2334, 64
    %v2366 = vpop.permute.xlu0 %2365
    %v2383 = vrot.slane %v1635, 3
    %v2384 = vrot.slane %v1652, 3
    %v2385 = vsel %vm1490, %v2383, %v2384
    %v2386 = vrot.slane %v1643, 3
    %v2387 = vrot.slane %v1660, 3
    %v2388 = vsel %vm1490, %v2386, %v2387
    %2389 = vrot.lane.b32.xlu0 %v1848, 80
    %v2390 = vpop.permute.xlu0 %2389
    %2391 = vrot.lane.b32.xlu0 %v1851, 80
    %v2392 = vpop.permute.xlu0 %2391
    %2393 = vrot.lane.b32.xlu0 %v1854, 80
    %v2394 = vpop.permute.xlu0 %2393
    %2395 = vrot.lane.b32.xlu0 %v1857, 80
    %v2396 = vpop.permute.xlu0 %2395
    %2397 = vrot.lane.b32.xlu0 %v1860, 80
    %v2398 = vpop.permute.xlu0 %2397
    %2399 = vrot.lane.b32.xlu0 %v1863, 80
    %v2400 = vpop.permute.xlu0 %2399
    %2401 = vrot.lane.b32.xlu0 %v2153, 80
    %v2402 = vpop.permute.xlu0 %2401
    %2403 = vrot.lane.b32.xlu0 %v2385, 80
    %v2404 = vpop.permute.xlu0 %2403
    %2405 = vrot.lane.b32.xlu0 %v1866, 80
    %v2406 = vpop.permute.xlu0 %2405
    %2407 = vrot.lane.b32.xlu0 %v1869, 80
    %v2408 = vpop.permute.xlu0 %2407
    %2409 = vrot.lane.b32.xlu0 %v1872, 80
    %v2410 = vpop.permute.xlu0 %2409
    %2411 = vrot.lane.b32.xlu0 %v1875, 80
    %v2412 = vpop.permute.xlu0 %2411
    %2413 = vrot.lane.b32.xlu0 %v1878, 80
    %v2414 = vpop.permute.xlu0 %2413
    %2415 = vrot.lane.b32.xlu0 %v1881, 80
    %v2416 = vpop.permute.xlu0 %2415
    %2417 = vrot.lane.b32.xlu0 %v2156, 80
    %v2418 = vpop.permute.xlu0 %2417
    %2419 = vrot.lane.b32.xlu0 %v2388, 80
    %v2420 = vpop.permute.xlu0 %2419
    %v2437 = vrot.slane %v1635, 4
    %v2438 = vrot.slane %v1652, 4
    %v2439 = vsel %vm1921, %v2437, %v2438
    %v2440 = vrot.slane %v1643, 4
    %v2441 = vrot.slane %v1660, 4
    %v2442 = vsel %vm1921, %v2440, %v2441
    %2443 = vrot.lane.b32.xlu0 %v1927, 96
    %v2444 = vpop.permute.xlu0 %2443
    %2445 = vrot.lane.b32.xlu0 %v1930, 96
    %v2446 = vpop.permute.xlu0 %2445
    %2447 = vrot.lane.b32.xlu0 %v1933, 96
    %v2448 = vpop.permute.xlu0 %2447
    %2449 = vrot.lane.b32.xlu0 %v1936, 96
    %v2450 = vpop.permute.xlu0 %2449
    %2451 = vrot.lane.b32.xlu0 %v1939, 96
    %v2452 = vpop.permute.xlu0 %2451
    %2453 = vrot.lane.b32.xlu0 %v1942, 96
    %v2454 = vpop.permute.xlu0 %2453
    %2455 = vrot.lane.b32.xlu0 %v2174, 96
    %v2456 = vpop.permute.xlu0 %2455
    %2457 = vrot.lane.b32.xlu0 %v2439, 96
    %v2458 = vpop.permute.xlu0 %2457
    %2459 = vrot.lane.b32.xlu0 %v1945, 96
    %v2460 = vpop.permute.xlu0 %2459
    %2461 = vrot.lane.b32.xlu0 %v1948, 96
    %v2462 = vpop.permute.xlu0 %2461
    %2463 = vrot.lane.b32.xlu0 %v1951, 96
    %v2464 = vpop.permute.xlu0 %2463
    %2465 = vrot.lane.b32.xlu0 %v1954, 96
    %v2466 = vpop.permute.xlu0 %2465
    %2467 = vrot.lane.b32.xlu0 %v1957, 96
    %v2468 = vpop.permute.xlu0 %2467
    %2469 = vrot.lane.b32.xlu0 %v1960, 96
    %v2470 = vpop.permute.xlu0 %2469
    %2471 = vrot.lane.b32.xlu0 %v2177, 96
    %v2472 = vpop.permute.xlu0 %2471
    %2473 = vrot.lane.b32.xlu0 %v2442, 96
    %v2474 = vpop.permute.xlu0 %2473
    %2491 = vrot.lane.b32.xlu0 %v1629, 112
    %v2492 = vpop.permute.xlu0 %2491
    %2493 = vrot.lane.b32.xlu0 %v1630, 112
    %v2494 = vpop.permute.xlu0 %2493
    %2495 = vrot.lane.b32.xlu0 %v1631, 112
    %v2496 = vpop.permute.xlu0 %2495
    %2497 = vrot.lane.b32.xlu0 %v1632, 112
    %v2498 = vpop.permute.xlu0 %2497
    %2499 = vrot.lane.b32.xlu0 %v1633, 112
    %v2500 = vpop.permute.xlu0 %2499
    %2501 = vrot.lane.b32.xlu0 %v1634, 112
    %v2502 = vpop.permute.xlu0 %2501
    %2503 = vrot.lane.b32.xlu0 %v1635, 112
    %v2504 = vpop.permute.xlu0 %2503
    %2505 = vrot.lane.b32.xlu0 %v1627, 112
    %v2506 = vpop.permute.xlu0 %2505
    %2507 = vrot.lane.b32.xlu0 %v1637, 112
    %v2508 = vpop.permute.xlu0 %2507
    %2509 = vrot.lane.b32.xlu0 %v1638, 112
    %v2510 = vpop.permute.xlu0 %2509
    %2511 = vrot.lane.b32.xlu0 %v1639, 112
    %v2512 = vpop.permute.xlu0 %2511
    %2513 = vrot.lane.b32.xlu0 %v1640, 112
    %v2514 = vpop.permute.xlu0 %2513
    %2515 = vrot.lane.b32.xlu0 %v1641, 112
    %v2516 = vpop.permute.xlu0 %2515
    %2517 = vrot.lane.b32.xlu0 %v1642, 112
    %v2518 = vpop.permute.xlu0 %2517
    %2519 = vrot.lane.b32.xlu0 %v1643, 112
    %v2520 = vpop.permute.xlu0 %2519
    %vm2536 = vcmask 130048
    %v2537 = vsel %vm2536, %v1627, %v1727
    %v2538 = vsel %vm2536, %v1628, %v1729
    %v2539 = vsel %vm2536, %v1629, %v1731
    %v2540 = vsel %vm2536, %v1630, %v1733
    %v2541 = vsel %vm2536, %v1631, %v1735
    %v2542 = vsel %vm2536, %v1632, %v1737
    %v2543 = vsel %vm2536, %v1633, %v1739
    %v2544 = vsel %vm2536, %v1636, %v1741
    %v2545 = vsel %vm2536, %v1637, %v1743
    %v2546 = vsel %vm2536, %v1638, %v1745
    %v2547 = vsel %vm2536, %v1639, %v1747
    %v2548 = vsel %vm2536, %v1640, %v1749
    %v2549 = vsel %vm2536, %v1641, %v1751
    %vm2550 = vcmask 261120
    %v2551 = vsel %vm2550, %v2537, %v1805
    %v2552 = vsel %vm2550, %v2538, %v1807
    %v2553 = vsel %vm2550, %v2539, %v1809
    %v2554 = vsel %vm2550, %v2540, %v1811
    %v2555 = vsel %vm2550, %v2541, %v1813
    %v2556 = vsel %vm2550, %v2542, %v1815
    %v2557 = vsel %vm2550, %v2543, %v1817
    %v2558 = vsel %vm2550, %v2544, %v1819
    %v2559 = vsel %vm2550, %v2545, %v1821
    %v2560 = vsel %vm2550, %v2546, %v1823
    %v2561 = vsel %vm2550, %v2547, %v1825
    %v2562 = vsel %vm2550, %v2548, %v1827
    %v2563 = vsel %vm2550, %v2549, %v1829
    %vm2564 = vcmask 392192
    %v2565 = vsel %vm2564, %v2551, %v1883
    %v2566 = vsel %vm2564, %v2552, %v1885
    %v2567 = vsel %vm2564, %v2553, %v1887
    %v2568 = vsel %vm2564, %v2554, %v1889
    %v2569 = vsel %vm2564, %v2555, %v1891
    %v2570 = vsel %vm2564, %v2556, %v1893
    %v2571 = vsel %vm2564, %v2557, %v1895
    %v2572 = vsel %vm2564, %v2558, %v1897
    %v2573 = vsel %vm2564, %v2559, %v1899
    %v2574 = vsel %vm2564, %v2560, %v1901
    %v2575 = vsel %vm2564, %v2561, %v1903
    %v2576 = vsel %vm2564, %v2562, %v1905
    %v2577 = vsel %vm2564, %v2563, %v1907
    %vm2578 = vcmask 523264
    %v2579 = vsel %vm2578, %v2565, %v1962
    %v2580 = vsel %vm2578, %v2566, %v1964
    %v2581 = vsel %vm2578, %v2567, %v1966
    %v2582 = vsel %vm2578, %v2568, %v1968
    %v2583 = vsel %vm2578, %v2569, %v1970
    %v2584 = vsel %vm2578, %v2570, %v1972
    %v2585 = vsel %vm2578, %v2571, %v1974
    %v2586 = vsel %vm2578, %v2572, %v1976
    %v2587 = vsel %vm2578, %v2573, %v1978
    %v2588 = vsel %vm2578, %v2574, %v1980
    %v2589 = vsel %vm2578, %v2575, %v1982
    %v2590 = vsel %vm2578, %v2576, %v1984
    %v2591 = vsel %vm2578, %v2577, %v1986
    %v2592 = vsel %vm1404, %v2579, %v2003
    %v2593 = vsel %vm1404, %v2579, %v2005
    %v2594 = vsel %vm1404, %v2580, %v2007
    %v2595 = vsel %vm1404, %v2581, %v2009
    %v2596 = vsel %vm1404, %v2582, %v2011
    %v2597 = vsel %vm1404, %v2583, %v2013
    %v2598 = vsel %vm1404, %v2584, %v2015
    %v2599 = vsel %vm1404, %v2585, %v2017
    %v2600 = vsel %vm1404, %v2579, %v2019
    %v2601 = vsel %vm1404, %v2586, %v2021
    %v2602 = vsel %vm1404, %v2587, %v2023
    %v2603 = vsel %vm1404, %v2588, %v2025
    %v2604 = vsel %vm1404, %v2589, %v2027
    %v2605 = vsel %vm1404, %v2590, %v2029
    %v2606 = vsel %vm1404, %v2591, %v2031
    %vm2607 = vcmask 785408
    %v2608 = vsel %vm2607, %v2592, %v2056
    %v2609 = vsel %vm2607, %v2593, %v2058
    %v2610 = vsel %vm2607, %v2594, %v2060
    %v2611 = vsel %vm2607, %v2595, %v2062
    %v2612 = vsel %vm2607, %v2596, %v2064
    %v2613 = vsel %vm2607, %v2597, %v2066
    %v2614 = vsel %vm2607, %v2598, %v2068
    %v2615 = vsel %vm2607, %v2599, %v2070
    %v2616 = vsel %vm2607, %v2600, %v2072
    %v2617 = vsel %vm2607, %v2601, %v2074
    %v2618 = vsel %vm2607, %v2602, %v2076
    %v2619 = vsel %vm2607, %v2603, %v2078
    %v2620 = vsel %vm2607, %v2604, %v2080
    %v2621 = vsel %vm2607, %v2605, %v2082
    %v2622 = vsel %vm2607, %v2606, %v2084
    %vm2623 = vcmask 916480
    %v2624 = vsel %vm2623, %v2608, %v2107
    %v2625 = vsel %vm2623, %v2609, %v2109
    %v2626 = vsel %vm2623, %v2610, %v2111
    %v2627 = vsel %vm2623, %v2611, %v2113
    %v2628 = vsel %vm2623, %v2612, %v2115
    %v2629 = vsel %vm2623, %v2613, %v2117
    %v2630 = vsel %vm2623, %v2614, %v2119
    %v2631 = vsel %vm2623, %v2615, %v2121
    %v2632 = vsel %vm2623, %v2616, %v2123
    %v2633 = vsel %vm2623, %v2617, %v2125
    %v2634 = vsel %vm2623, %v2618, %v2127
    %v2635 = vsel %vm2623, %v2619, %v2129
    %v2636 = vsel %vm2623, %v2620, %v2131
    %v2637 = vsel %vm2623, %v2621, %v2133
    %v2638 = vsel %vm2623, %v2622, %v2135
    %v2639 = vsel %vm2536, %v1845, %v2179
    %v2640 = vsel %vm2536, %v1848, %v2181
    %v2641 = vsel %vm2536, %v1851, %v2183
    %v2642 = vsel %vm2536, %v1854, %v2185
    %v2643 = vsel %vm2536, %v1857, %v2187
    %v2644 = vsel %vm2536, %v1860, %v2189
    %v2645 = vsel %vm2536, %v1863, %v2191
    %v2646 = vsel %vm2536, %v2153, %v2193
    %v2647 = vsel %vm2536, %v1866, %v2195
    %v2648 = vsel %vm2536, %v1869, %v2197
    %v2649 = vsel %vm2536, %v1872, %v2199
    %v2650 = vsel %vm2536, %v1875, %v2201
    %v2651 = vsel %vm2536, %v1878, %v2203
    %v2652 = vsel %vm2536, %v1881, %v2205
    %v2653 = vsel %vm2536, %v2156, %v2207
    %v2654 = vsel %vm2550, %v2639, %v2226
    %v2655 = vsel %vm2550, %v2640, %v2228
    %v2656 = vsel %vm2550, %v2641, %v2230
    %v2657 = vsel %vm2550, %v2642, %v2232
    %v2658 = vsel %vm2550, %v2643, %v2234
    %v2659 = vsel %vm2550, %v2644, %v2236
    %v2660 = vsel %vm2550, %v2645, %v2238
    %v2661 = vsel %vm2550, %v2646, %v2240
    %v2662 = vsel %vm2550, %v2639, %v2242
    %v2663 = vsel %vm2550, %v2647, %v2244
    %v2664 = vsel %vm2550, %v2648, %v2246
    %v2665 = vsel %vm2550, %v2649, %v2248
    %v2666 = vsel %vm2550, %v2650, %v2250
    %v2667 = vsel %vm2550, %v2651, %v2252
    %v2668 = vsel %vm2550, %v2652, %v2254
    %v2669 = vsel %vm2550, %v2653, %v2256
    %v2670 = vsel %vm2564, %v2654, %v2282
    %v2671 = vsel %vm2564, %v2655, %v2284
    %v2672 = vsel %vm2564, %v2656, %v2286
    %v2673 = vsel %vm2564, %v2657, %v2288
    %v2674 = vsel %vm2564, %v2658, %v2290
    %v2675 = vsel %vm2564, %v2659, %v2292
    %v2676 = vsel %vm2564, %v2660, %v2294
    %v2677 = vsel %vm2564, %v2661, %v2296
    %v2678 = vsel %vm2564, %v2662, %v2298
    %v2679 = vsel %vm2564, %v2663, %v2300
    %v2680 = vsel %vm2564, %v2664, %v2302
    %v2681 = vsel %vm2564, %v2665, %v2304
    %v2682 = vsel %vm2564, %v2666, %v2306
    %v2683 = vsel %vm2564, %v2667, %v2308
    %v2684 = vsel %vm2564, %v2668, %v2310
    %v2685 = vsel %vm2564, %v2669, %v2312
    %v2686 = vsel %vm2578, %v2670, %v2336
    %v2687 = vsel %vm2578, %v2671, %v2338
    %v2688 = vsel %vm2578, %v2672, %v2340
    %v2689 = vsel %vm2578, %v2673, %v2342
    %v2690 = vsel %vm2578, %v2674, %v2344
    %v2691 = vsel %vm2578, %v2675, %v2346
    %v2692 = vsel %vm2578, %v2676, %v2348
    %v2693 = vsel %vm2578, %v2677, %v2350
    %v2694 = vsel %vm2578, %v2678, %v2352
    %v2695 = vsel %vm2578, %v2679, %v2354
    %v2696 = vsel %vm2578, %v2680, %v2356
    %v2697 = vsel %vm2578, %v2681, %v2358
    %v2698 = vsel %vm2578, %v2682, %v2360
    %v2699 = vsel %vm2578, %v2683, %v2362
    %v2700 = vsel %vm2578, %v2684, %v2364
    %v2701 = vsel %vm2578, %v2685, %v2366
    %v2702 = vsel %vm1404, %v2686, %v2390
    %v2703 = vsel %vm1404, %v2687, %v2392
    %v2704 = vsel %vm1404, %v2688, %v2394
    %v2705 = vsel %vm1404, %v2689, %v2396
    %v2706 = vsel %vm1404, %v2690, %v2398
    %v2707 = vsel %vm1404, %v2691, %v2400
    %v2708 = vsel %vm1404, %v2692, %v2402
    %v2709 = vsel %vm1404, %v2693, %v2404
    %v2710 = vsel %vm1404, %v2694, %v2406
    %v2711 = vsel %vm1404, %v2695, %v2408
    %v2712 = vsel %vm1404, %v2696, %v2410
    %v2713 = vsel %vm1404, %v2697, %v2412
    %v2714 = vsel %vm1404, %v2698, %v2414
    %v2715 = vsel %vm1404, %v2699, %v2416
    %v2716 = vsel %vm1404, %v2700, %v2418
    %v2717 = vsel %vm1404, %v2701, %v2420
    %v2718 = vsel %vm2607, %v2702, %v2444
    %v2719 = vsel %vm2607, %v2703, %v2446
    %v2720 = vsel %vm2607, %v2704, %v2448
    %v2721 = vsel %vm2607, %v2705, %v2450
    %v2722 = vsel %vm2607, %v2706, %v2452
    %v2723 = vsel %vm2607, %v2707, %v2454
    %v2724 = vsel %vm2607, %v2708, %v2456
    %v2725 = vsel %vm2607, %v2709, %v2458
    %v2726 = vsel %vm2607, %v2710, %v2460
    %v2727 = vsel %vm2607, %v2711, %v2462
    %v2728 = vsel %vm2607, %v2712, %v2464
    %v2729 = vsel %vm2607, %v2713, %v2466
    %v2730 = vsel %vm2607, %v2714, %v2468
    %v2731 = vsel %vm2607, %v2715, %v2470
    %v2732 = vsel %vm2607, %v2716, %v2472
    %v2733 = vsel %vm2607, %v2717, %v2474
    %v2734 = vsel %vm2623, %v2718, %v2492
    %v2735 = vsel %vm2623, %v2719, %v2494
    %v2736 = vsel %vm2623, %v2720, %v2496
    %v2737 = vsel %vm2623, %v2721, %v2498
    %v2738 = vsel %vm2623, %v2722, %v2500
    %v2739 = vsel %vm2623, %v2723, %v2502
    %v2740 = vsel %vm2623, %v2724, %v2504
    %v2741 = vsel %vm2623, %v2725, %v2506
    %v2742 = vsel %vm2623, %v2726, %v2508
    %v2743 = vsel %vm2623, %v2727, %v2510
    %v2744 = vsel %vm2623, %v2728, %v2512
    %v2745 = vsel %vm2623, %v2729, %v2514
    %v2746 = vsel %vm2623, %v2730, %v2516
    %v2747 = vsel %vm2623, %v2731, %v2518
    %v2748 = vsel %vm2623, %v2732, %v2520
    %v2749 = vsel %vm2623, %v2733, %v2506
    %2750 = vrot.lane.b32.xlu0 %v1694, 16
    %v2751 = vpop.permute.xlu0 %2750
    %2752 = vrot.lane.b32.xlu0 %v1697, 16
    %v2753 = vpop.permute.xlu0 %2752
    %2754 = vrot.lane.b32.xlu0 %v1700, 16
    %v2755 = vpop.permute.xlu0 %2754
    %2756 = vrot.lane.b32.xlu0 %v1703, 16
    %v2757 = vpop.permute.xlu0 %2756
    %2758 = vrot.lane.b32.xlu0 %v1706, 16
    %v2759 = vpop.permute.xlu0 %2758
    %2760 = vrot.lane.b32.xlu0 %v2051, 16
    %v2761 = vpop.permute.xlu0 %2760
    %2762 = vrot.lane.b32.xlu0 %v2050, 16
    %v2763 = vpop.permute.xlu0 %2762
    %2764 = vrot.lane.b32.xlu0 %v2277, 16
    %v2765 = vpop.permute.xlu0 %2764
    %2766 = vrot.lane.b32.xlu0 %v2276, 16
    %v2767 = vpop.permute.xlu0 %2766
    %2768 = vrot.lane.b32.xlu0 %v1688, 16
    %v2769 = vpop.permute.xlu0 %2768
    %2770 = vrot.lane.b32.xlu0 %v1712, 16
    %v2771 = vpop.permute.xlu0 %2770
    %2772 = vrot.lane.b32.xlu0 %v1715, 16
    %v2773 = vpop.permute.xlu0 %2772
    %2774 = vrot.lane.b32.xlu0 %v1718, 16
    %v2775 = vpop.permute.xlu0 %2774
    %2776 = vrot.lane.b32.xlu0 %v1721, 16
    %v2777 = vpop.permute.xlu0 %2776
    %2778 = vrot.lane.b32.xlu0 %v1724, 16
    %v2779 = vpop.permute.xlu0 %2778
    %2780 = vrot.lane.b32.xlu0 %v2054, 16
    %v2781 = vpop.permute.xlu0 %2780
    %2782 = vrot.lane.b32.xlu0 %v2053, 16
    %v2783 = vpop.permute.xlu0 %2782
    %2784 = vrot.lane.b32.xlu0 %v2280, 16
    %v2785 = vpop.permute.xlu0 %2784
    %2786 = vrot.lane.b32.xlu0 %v2279, 16
    %v2787 = vpop.permute.xlu0 %2786
    %2807 = vrot.lane.b32.xlu0 %v1772, 32
    %v2808 = vpop.permute.xlu0 %2807
    %2809 = vrot.lane.b32.xlu0 %v1775, 32
    %v2810 = vpop.permute.xlu0 %2809
    %2811 = vrot.lane.b32.xlu0 %v1778, 32
    %v2812 = vpop.permute.xlu0 %2811
    %2813 = vrot.lane.b32.xlu0 %v1781, 32
    %v2814 = vpop.permute.xlu0 %2813
    %2815 = vrot.lane.b32.xlu0 %v1784, 32
    %v2816 = vpop.permute.xlu0 %2815
    %2817 = vrot.lane.b32.xlu0 %v2102, 32
    %v2818 = vpop.permute.xlu0 %2817
    %2819 = vrot.lane.b32.xlu0 %v2101, 32
    %v2820 = vpop.permute.xlu0 %2819
    %2821 = vrot.lane.b32.xlu0 %v2331, 32
    %v2822 = vpop.permute.xlu0 %2821
    %2823 = vrot.lane.b32.xlu0 %v2330, 32
    %v2824 = vpop.permute.xlu0 %2823
    %2825 = vrot.lane.b32.xlu0 %v1766, 32
    %v2826 = vpop.permute.xlu0 %2825
    %2827 = vrot.lane.b32.xlu0 %v1790, 32
    %v2828 = vpop.permute.xlu0 %2827
    %2829 = vrot.lane.b32.xlu0 %v1793, 32
    %v2830 = vpop.permute.xlu0 %2829
    %2831 = vrot.lane.b32.xlu0 %v1796, 32
    %v2832 = vpop.permute.xlu0 %2831
    %2833 = vrot.lane.b32.xlu0 %v1799, 32
    %v2834 = vpop.permute.xlu0 %2833
    %2835 = vrot.lane.b32.xlu0 %v1802, 32
    %v2836 = vpop.permute.xlu0 %2835
    %2837 = vrot.lane.b32.xlu0 %v2105, 32
    %v2838 = vpop.permute.xlu0 %2837
    %2839 = vrot.lane.b32.xlu0 %v2104, 32
    %v2840 = vpop.permute.xlu0 %2839
    %2841 = vrot.lane.b32.xlu0 %v2334, 32
    %v2842 = vpop.permute.xlu0 %2841
    %2843 = vrot.lane.b32.xlu0 %v2333, 32
    %v2844 = vpop.permute.xlu0 %2843
    %2864 = vrot.lane.b32.xlu0 %v1850, 48
    %v2865 = vpop.permute.xlu0 %2864
    %2866 = vrot.lane.b32.xlu0 %v1853, 48
    %v2867 = vpop.permute.xlu0 %2866
    %2868 = vrot.lane.b32.xlu0 %v1856, 48
    %v2869 = vpop.permute.xlu0 %2868
    %2870 = vrot.lane.b32.xlu0 %v1859, 48
    %v2871 = vpop.permute.xlu0 %2870
    %2872 = vrot.lane.b32.xlu0 %v1862, 48
    %v2873 = vpop.permute.xlu0 %2872
    %2874 = vrot.lane.b32.xlu0 %v2153, 48
    %v2875 = vpop.permute.xlu0 %2874
    %2876 = vrot.lane.b32.xlu0 %v2152, 48
    %v2877 = vpop.permute.xlu0 %2876
    %2878 = vrot.lane.b32.xlu0 %v2385, 48
    %v2879 = vpop.permute.xlu0 %2878
    %2880 = vrot.lane.b32.xlu0 %v2384, 48
    %v2881 = vpop.permute.xlu0 %2880
    %2882 = vrot.lane.b32.xlu0 %v1844, 48
    %v2883 = vpop.permute.xlu0 %2882
    %2884 = vrot.lane.b32.xlu0 %v1868, 48
    %v2885 = vpop.permute.xlu0 %2884
    %2886 = vrot.lane.b32.xlu0 %v1871, 48
    %v2887 = vpop.permute.xlu0 %2886
    %2888 = vrot.lane.b32.xlu0 %v1874, 48
    %v2889 = vpop.permute.xlu0 %2888
    %2890 = vrot.lane.b32.xlu0 %v1877, 48
    %v2891 = vpop.permute.xlu0 %2890
    %2892 = vrot.lane.b32.xlu0 %v1880, 48
    %v2893 = vpop.permute.xlu0 %2892
    %2894 = vrot.lane.b32.xlu0 %v2156, 48
    %v2895 = vpop.permute.xlu0 %2894
    %2896 = vrot.lane.b32.xlu0 %v2155, 48
    %v2897 = vpop.permute.xlu0 %2896
    %2898 = vrot.lane.b32.xlu0 %v2388, 48
    %v2899 = vpop.permute.xlu0 %2898
    %2900 = vrot.lane.b32.xlu0 %v2387, 48
    %v2901 = vpop.permute.xlu0 %2900
    %v2921 = vrot.slane %v1630, 7
    %v2922 = vrot.slane %v1631, 7
    %v2923 = vrot.slane %v1632, 7
    %v2924 = vrot.slane %v1633, 7
    %v2925 = vrot.slane %v1634, 7
    %v2926 = vrot.slane %v1635, 7
    %v2927 = vrot.slane %v1627, 7
    %v2928 = vrot.slane %v1638, 7
    %v2929 = vrot.slane %v1639, 7
    %v2930 = vrot.slane %v1640, 7
    %v2931 = vrot.slane %v1641, 7
    %v2932 = vrot.slane %v1642, 7
    %v2933 = vrot.slane %v1643, 7
    %2934 = vrot.lane.b32.xlu0 %v2921, 64
    %v2935 = vpop.permute.xlu0 %2934
    %2936 = vrot.lane.b32.xlu0 %v2922, 64
    %v2937 = vpop.permute.xlu0 %2936
    %2938 = vrot.lane.b32.xlu0 %v2923, 64
    %v2939 = vpop.permute.xlu0 %2938
    %2940 = vrot.lane.b32.xlu0 %v2924, 64
    %v2941 = vpop.permute.xlu0 %2940
    %2942 = vrot.lane.b32.xlu0 %v2925, 64
    %v2943 = vpop.permute.xlu0 %2942
    %2944 = vrot.lane.b32.xlu0 %v2926, 64
    %v2945 = vpop.permute.xlu0 %2944
    %2946 = vrot.lane.b32.xlu0 %v2927, 64
    %v2947 = vpop.permute.xlu0 %2946
    %2948 = vrot.lane.b32.xlu0 %v2928, 64
    %v2949 = vpop.permute.xlu0 %2948
    %2950 = vrot.lane.b32.xlu0 %v2929, 64
    %v2951 = vpop.permute.xlu0 %2950
    %2952 = vrot.lane.b32.xlu0 %v2930, 64
    %v2953 = vpop.permute.xlu0 %2952
    %2954 = vrot.lane.b32.xlu0 %v2931, 64
    %v2955 = vpop.permute.xlu0 %2954
    %2956 = vrot.lane.b32.xlu0 %v2932, 64
    %v2957 = vpop.permute.xlu0 %2956
    %2958 = vrot.lane.b32.xlu0 %v2933, 64
    %v2959 = vpop.permute.xlu0 %2958
    %2973 = vrot.lane.b32.xlu0 %v1647, 80
    %v2974 = vpop.permute.xlu0 %2973
    %2975 = vrot.lane.b32.xlu0 %v1648, 80
    %v2976 = vpop.permute.xlu0 %2975
    %2977 = vrot.lane.b32.xlu0 %v1649, 80
    %v2978 = vpop.permute.xlu0 %2977
    %2979 = vrot.lane.b32.xlu0 %v1650, 80
    %v2980 = vpop.permute.xlu0 %2979
    %2981 = vrot.lane.b32.xlu0 %v1651, 80
    %v2982 = vpop.permute.xlu0 %2981
    %2983 = vrot.lane.b32.xlu0 %v1635, 80
    %v2984 = vpop.permute.xlu0 %2983
    %2985 = vrot.lane.b32.xlu0 %v1652, 80
    %v2986 = vpop.permute.xlu0 %2985
    %2987 = vrot.lane.b32.xlu0 %v1644, 80
    %v2988 = vpop.permute.xlu0 %2987
    %2989 = vrot.lane.b32.xlu0 %v1655, 80
    %v2990 = vpop.permute.xlu0 %2989
    %2991 = vrot.lane.b32.xlu0 %v1656, 80
    %v2992 = vpop.permute.xlu0 %2991
    %2993 = vrot.lane.b32.xlu0 %v1657, 80
    %v2994 = vpop.permute.xlu0 %2993
    %2995 = vrot.lane.b32.xlu0 %v1658, 80
    %v2996 = vpop.permute.xlu0 %2995
    %2997 = vrot.lane.b32.xlu0 %v1659, 80
    %v2998 = vpop.permute.xlu0 %2997
    %2999 = vrot.lane.b32.xlu0 %v1643, 80
    %v3000 = vpop.permute.xlu0 %2999
    %3001 = vrot.lane.b32.xlu0 %v1660, 80
    %v3002 = vpop.permute.xlu0 %3001
    %3018 = vrot.lane.b32.xlu0 %v1697, 96
    %v3019 = vpop.permute.xlu0 %3018
    %3020 = vrot.lane.b32.xlu0 %v1700, 96
    %v3021 = vpop.permute.xlu0 %3020
    %3022 = vrot.lane.b32.xlu0 %v1703, 96
    %v3023 = vpop.permute.xlu0 %3022
    %3024 = vrot.lane.b32.xlu0 %v1706, 96
    %v3025 = vpop.permute.xlu0 %3024
    %3026 = vrot.lane.b32.xlu0 %v2050, 96
    %v3027 = vpop.permute.xlu0 %3026
    %3028 = vrot.lane.b32.xlu0 %v2277, 96
    %v3029 = vpop.permute.xlu0 %3028
    %3030 = vrot.lane.b32.xlu0 %v2276, 96
    %v3031 = vpop.permute.xlu0 %3030
    %3032 = vrot.lane.b32.xlu0 %v1688, 96
    %v3033 = vpop.permute.xlu0 %3032
    %3034 = vrot.lane.b32.xlu0 %v1715, 96
    %v3035 = vpop.permute.xlu0 %3034
    %3036 = vrot.lane.b32.xlu0 %v1718, 96
    %v3037 = vpop.permute.xlu0 %3036
    %3038 = vrot.lane.b32.xlu0 %v1721, 96
    %v3039 = vpop.permute.xlu0 %3038
    %3040 = vrot.lane.b32.xlu0 %v1724, 96
    %v3041 = vpop.permute.xlu0 %3040
    %3042 = vrot.lane.b32.xlu0 %v2053, 96
    %v3043 = vpop.permute.xlu0 %3042
    %3044 = vrot.lane.b32.xlu0 %v2280, 96
    %v3045 = vpop.permute.xlu0 %3044
    %3046 = vrot.lane.b32.xlu0 %v2279, 96
    %v3047 = vpop.permute.xlu0 %3046
    %3063 = vrot.lane.b32.xlu0 %v1775, 112
    %v3064 = vpop.permute.xlu0 %3063
    %3065 = vrot.lane.b32.xlu0 %v1778, 112
    %v3066 = vpop.permute.xlu0 %3065
    %3067 = vrot.lane.b32.xlu0 %v1781, 112
    %v3068 = vpop.permute.xlu0 %3067
    %3069 = vrot.lane.b32.xlu0 %v1784, 112
    %v3070 = vpop.permute.xlu0 %3069
    %3071 = vrot.lane.b32.xlu0 %v2101, 112
    %v3072 = vpop.permute.xlu0 %3071
    %3073 = vrot.lane.b32.xlu0 %v2331, 112
    %v3074 = vpop.permute.xlu0 %3073
    %3075 = vrot.lane.b32.xlu0 %v2330, 112
    %v3076 = vpop.permute.xlu0 %3075
    %3077 = vrot.lane.b32.xlu0 %v1766, 112
    %v3078 = vpop.permute.xlu0 %3077
    %3079 = vrot.lane.b32.xlu0 %v1793, 112
    %v3080 = vpop.permute.xlu0 %3079
    %3081 = vrot.lane.b32.xlu0 %v1796, 112
    %v3082 = vpop.permute.xlu0 %3081
    %3083 = vrot.lane.b32.xlu0 %v1799, 112
    %v3084 = vpop.permute.xlu0 %3083
    %3085 = vrot.lane.b32.xlu0 %v1802, 112
    %v3086 = vpop.permute.xlu0 %3085
    %3087 = vrot.lane.b32.xlu0 %v2104, 112
    %v3088 = vpop.permute.xlu0 %3087
    %3089 = vrot.lane.b32.xlu0 %v2334, 112
    %v3090 = vpop.permute.xlu0 %3089
    %3091 = vrot.lane.b32.xlu0 %v2333, 112
    %v3092 = vpop.permute.xlu0 %3091
    %v3108 = vsel %vm2536, %v1646, %v2751
    %v3109 = vsel %vm2536, %v1647, %v2753
    %v3110 = vsel %vm2536, %v1648, %v2755
    %v3111 = vsel %vm2536, %v1649, %v2757
    %v3112 = vsel %vm2536, %v1650, %v2759
    %v3113 = vsel %vm2536, %v1634, %v2761
    %v3114 = vsel %vm2536, %v1651, %v2763
    %v3115 = vsel %vm2536, %v1635, %v2765
    %v3116 = vsel %vm2536, %v1652, %v2767
    %v3117 = vsel %vm2536, %v1644, %v2769
    %v3118 = vsel %vm2536, %v1654, %v2771
    %v3119 = vsel %vm2536, %v1655, %v2773
    %v3120 = vsel %vm2536, %v1656, %v2775
    %v3121 = vsel %vm2536, %v1657, %v2777
    %v3122 = vsel %vm2536, %v1658, %v2779
    %v3123 = vsel %vm2536, %v1642, %v2781
    %v3124 = vsel %vm2536, %v1659, %v2783
    %v3125 = vsel %vm2536, %v1643, %v2785
    %v3126 = vsel %vm2536, %v1660, %v2787
    %v3127 = vsel %vm2550, %v3108, %v2808
    %v3128 = vsel %vm2550, %v3109, %v2810
    %v3129 = vsel %vm2550, %v3110, %v2812
    %v3130 = vsel %vm2550, %v3111, %v2814
    %v3131 = vsel %vm2550, %v3112, %v2816
    %v3132 = vsel %vm2550, %v3113, %v2818
    %v3133 = vsel %vm2550, %v3114, %v2820
    %v3134 = vsel %vm2550, %v3115, %v2822
    %v3135 = vsel %vm2550, %v3116, %v2824
    %v3136 = vsel %vm2550, %v3117, %v2826
    %v3137 = vsel %vm2550, %v3118, %v2828
    %v3138 = vsel %vm2550, %v3119, %v2830
    %v3139 = vsel %vm2550, %v3120, %v2832
    %v3140 = vsel %vm2550, %v3121, %v2834
    %v3141 = vsel %vm2550, %v3122, %v2836
    %v3142 = vsel %vm2550, %v3123, %v2838
    %v3143 = vsel %vm2550, %v3124, %v2840
    %v3144 = vsel %vm2550, %v3125, %v2842
    %v3145 = vsel %vm2550, %v3126, %v2844
    %v3146 = vsel %vm2564, %v3127, %v2865
    %v3147 = vsel %vm2564, %v3128, %v2867
    %v3148 = vsel %vm2564, %v3129, %v2869
    %v3149 = vsel %vm2564, %v3130, %v2871
    %v3150 = vsel %vm2564, %v3131, %v2873
    %v3151 = vsel %vm2564, %v3132, %v2875
    %v3152 = vsel %vm2564, %v3133, %v2877
    %v3153 = vsel %vm2564, %v3134, %v2879
    %v3154 = vsel %vm2564, %v3135, %v2881
    %v3155 = vsel %vm2564, %v3136, %v2883
    %v3156 = vsel %vm2564, %v3137, %v2885
    %v3157 = vsel %vm2564, %v3138, %v2887
    %v3158 = vsel %vm2564, %v3139, %v2889
    %v3159 = vsel %vm2564, %v3140, %v2891
    %v3160 = vsel %vm2564, %v3141, %v2893
    %v3161 = vsel %vm2564, %v3142, %v2895
    %v3162 = vsel %vm2564, %v3143, %v2897
    %v3163 = vsel %vm2564, %v3144, %v2899
    %v3164 = vsel %vm2564, %v3145, %v2901
    %v3165 = vsel %vm2578, %v2567, %v2935
    %v3166 = vsel %vm2578, %v3146, %v2935
    %v3167 = vsel %vm2578, %v2568, %v2937
    %v3168 = vsel %vm2578, %v3147, %v2937
    %v3169 = vsel %vm2578, %v2569, %v2939
    %v3170 = vsel %vm2578, %v3148, %v2939
    %v3171 = vsel %vm2578, %v2570, %v2941
    %v3172 = vsel %vm2578, %v3149, %v2941
    %v3173 = vsel %vm2578, %v2571, %v2943
    %v3174 = vsel %vm2578, %v3150, %v2943
    %v3175 = vsel %vm2578, %v3151, %v2945
    %v3176 = vsel %vm2578, %v3152, %v2945
    %v3177 = vsel %vm2578, %v3153, %v2947
    %v3178 = vsel %vm2578, %v3154, %v2947
    %v3179 = vsel %vm2578, %v2565, %v2947
    %v3180 = vsel %vm2578, %v3155, %v2947
    %v3181 = vsel %vm2578, %v2573, %v2949
    %v3182 = vsel %vm2578, %v3156, %v2949
    %v3183 = vsel %vm2578, %v2574, %v2951
    %v3184 = vsel %vm2578, %v3157, %v2951
    %v3185 = vsel %vm2578, %v2575, %v2953
    %v3186 = vsel %vm2578, %v3158, %v2953
    %v3187 = vsel %vm2578, %v2576, %v2955
    %v3188 = vsel %vm2578, %v3159, %v2955
    %v3189 = vsel %vm2578, %v2577, %v2957
    %v3190 = vsel %vm2578, %v3160, %v2957
    %v3191 = vsel %vm2578, %v3161, %v2959
    %v3192 = vsel %vm2578, %v3162, %v2959
    %v3193 = vsel %vm2578, %v3163, %v2947
    %v3194 = vsel %vm2578, %v3164, %v2947
    %v3195 = vsel %vm1404, %v3165, %v2009
    %v3196 = vsel %vm1404, %v3166, %v2974
    %v3197 = vsel %vm1404, %v3167, %v2011
    %v3198 = vsel %vm1404, %v3168, %v2976
    %v3199 = vsel %vm1404, %v3169, %v2013
    %v3200 = vsel %vm1404, %v3170, %v2978
    %v3201 = vsel %vm1404, %v3171, %v2015
    %v3202 = vsel %vm1404, %v3172, %v2980
    %v3203 = vsel %vm1404, %v3173, %v2017
    %v3204 = vsel %vm1404, %v3174, %v2982
    %v3205 = vsel %vm1404, %v3175, %v2984
    %v3206 = vsel %vm1404, %v3176, %v2986
    %v3207 = vsel %vm1404, %v3177, %v2003
    %v3208 = vsel %vm1404, %v3178, %v2988
    %v3209 = vsel %vm1404, %v3179, %v2003
    %v3210 = vsel %vm1404, %v3180, %v2988
    %v3211 = vsel %vm1404, %v3181, %v2023
    %v3212 = vsel %vm1404, %v3182, %v2990
    %v3213 = vsel %vm1404, %v3183, %v2025
    %v3214 = vsel %vm1404, %v3184, %v2992
    %v3215 = vsel %vm1404, %v3185, %v2027
    %v3216 = vsel %vm1404, %v3186, %v2994
    %v3217 = vsel %vm1404, %v3187, %v2029
    %v3218 = vsel %vm1404, %v3188, %v2996
    %v3219 = vsel %vm1404, %v3189, %v2031
    %v3220 = vsel %vm1404, %v3190, %v2998
    %v3221 = vsel %vm1404, %v3191, %v3000
    %v3222 = vsel %vm1404, %v3192, %v3002
    %v3223 = vsel %vm1404, %v3193, %v2003
    %v3224 = vsel %vm1404, %v3194, %v2988
    %v3225 = vsel %vm2607, %v3195, %v2062
    %v3226 = vsel %vm2607, %v3196, %v3019
    %v3227 = vsel %vm2607, %v3197, %v2064
    %v3228 = vsel %vm2607, %v3198, %v3021
    %v3229 = vsel %vm2607, %v3199, %v2066
    %v3230 = vsel %vm2607, %v3200, %v3023
    %v3231 = vsel %vm2607, %v3201, %v2068
    %v3232 = vsel %vm2607, %v3202, %v3025
    %v3233 = vsel %vm2607, %v3203, %v2070
    %v3234 = vsel %vm2607, %v3204, %v3027
    %v3235 = vsel %vm2607, %v3205, %v3029
    %v3236 = vsel %vm2607, %v3206, %v3031
    %v3237 = vsel %vm2607, %v3207, %v2056
    %v3238 = vsel %vm2607, %v3208, %v3033
    %v3239 = vsel %vm2607, %v3209, %v2056
    %v3240 = vsel %vm2607, %v3210, %v3033
    %v3241 = vsel %vm2607, %v3211, %v2076
    %v3242 = vsel %vm2607, %v3212, %v3035
    %v3243 = vsel %vm2607, %v3213, %v2078
    %v3244 = vsel %vm2607, %v3214, %v3037
    %v3245 = vsel %vm2607, %v3215, %v2080
    %v3246 = vsel %vm2607, %v3216, %v3039
    %v3247 = vsel %vm2607, %v3217, %v2082
    %v3248 = vsel %vm2607, %v3218, %v3041
    %v3249 = vsel %vm2607, %v3219, %v2084
    %v3250 = vsel %vm2607, %v3220, %v3043
    %v3251 = vsel %vm2607, %v3221, %v3045
    %v3252 = vsel %vm2607, %v3222, %v3047
    %v3253 = vsel %vm2607, %v3223, %v2056
    %v3254 = vsel %vm2607, %v3224, %v3033
    %v3255 = vsel %vm2623, %v3225, %v2113
    %v3256 = vsel %vm2623, %v3226, %v3064
    %v3257 = vsel %vm2623, %v3227, %v2115
    %v3258 = vsel %vm2623, %v3228, %v3066
    %v3259 = vsel %vm2623, %v3229, %v2117
    %v3260 = vsel %vm2623, %v3230, %v3068
    %v3261 = vsel %vm2623, %v3231, %v2119
    %v3262 = vsel %vm2623, %v3232, %v3070
    %v3263 = vsel %vm2623, %v3233, %v2121
    %v3264 = vsel %vm2623, %v3234, %v3072
    %v3265 = vsel %vm2623, %v3235, %v3074
    %v3266 = vsel %vm2623, %v3236, %v3076
    %v3267 = vsel %vm2623, %v3237, %v2107
    %v3268 = vsel %vm2623, %v3238, %v3078
    %v3269 = vsel %vm2623, %v3239, %v2107
    %v3270 = vsel %vm2623, %v3240, %v3078
    %v3271 = vsel %vm2623, %v3241, %v2127
    %v3272 = vsel %vm2623, %v3242, %v3080
    %v3273 = vsel %vm2623, %v3243, %v2129
    %v3274 = vsel %vm2623, %v3244, %v3082
    %v3275 = vsel %vm2623, %v3245, %v2131
    %v3276 = vsel %vm2623, %v3246, %v3084
    %v3277 = vsel %vm2623, %v3247, %v2133
    %v3278 = vsel %vm2623, %v3248, %v3086
    %v3279 = vsel %vm2623, %v3249, %v2135
    %v3280 = vsel %vm2623, %v3250, %v3088
    %v3281 = vsel %vm2623, %v3251, %v3090
    %v3282 = vsel %vm2623, %v3252, %v3092
    %v3283 = vsel %vm2623, %v3253, %v2107
    %v3284 = vsel %vm2623, %v3254, %v3078
    %v3315 = vrot.slane %v3255, 1
    %v3316 = vrot.slane %v3256, 1
    %v3317 = vsel %vm123, %v3315, %v3316
    %v3318 = vrot.slane %v1854, 1
    %v3319 = vrot.slane %v1853, 1
    %v3320 = vsel %vm123, %v3318, %v3319
    %v3321 = vrot.slane %v3257, 1
    %v3322 = vrot.slane %v3258, 1
    %v3323 = vsel %vm123, %v3321, %v3322
    %v3324 = vrot.slane %v1857, 1
    %v3325 = vrot.slane %v1856, 1
    %v3326 = vsel %vm123, %v3324, %v3325
    %v3327 = vrot.slane %v3259, 1
    %v3328 = vrot.slane %v3260, 1
    %v3329 = vsel %vm123, %v3327, %v3328
    %v3330 = vrot.slane %v1860, 1
    %v3331 = vrot.slane %v1859, 1
    %v3332 = vsel %vm123, %v3330, %v3331
    %v3333 = vrot.slane %v3261, 1
    %v3334 = vrot.slane %v3262, 1
    %v3335 = vsel %vm123, %v3333, %v3334
    %v3336 = vrot.slane %v1863, 1
    %v3337 = vrot.slane %v1862, 1
    %v3338 = vsel %vm123, %v3336, %v3337
    %v3339 = vrot.slane %v3263, 1
    %v3340 = vrot.slane %v3264, 1
    %v3341 = vsel %vm123, %v3339, %v3340
    %v3342 = vrot.slane %v2153, 1
    %v3343 = vrot.slane %v2152, 1
    %v3344 = vsel %vm123, %v3342, %v3343
    %v3345 = vrot.slane %v3265, 1
    %v3346 = vrot.slane %v3266, 1
    %v3347 = vsel %vm123, %v3345, %v3346
    %v3348 = vrot.slane %v2385, 1
    %v3349 = vrot.slane %v2384, 1
    %v3350 = vsel %vm123, %v3348, %v3349
    %v3351 = vrot.slane %v3267, 1
    %v3352 = vrot.slane %v3268, 1
    %v3353 = vsel %vm123, %v3351, %v3352
    %v3354 = vrot.slane %v1845, 1
    %v3355 = vrot.slane %v1844, 1
    %v3356 = vsel %vm123, %v3354, %v3355
    %v3357 = vrot.slane %v3269, 1
    %v3358 = vrot.slane %v3270, 1
    %v3359 = vsel %vm123, %v3357, %v3358
    %v3360 = vrot.slane %v3271, 1
    %v3361 = vrot.slane %v3272, 1
    %v3362 = vsel %vm123, %v3360, %v3361
    %v3363 = vrot.slane %v1872, 1
    %v3364 = vrot.slane %v1871, 1
    %v3365 = vsel %vm123, %v3363, %v3364
    %v3366 = vrot.slane %v3273, 1
    %v3367 = vrot.slane %v3274, 1
    %v3368 = vsel %vm123, %v3366, %v3367
    %v3369 = vrot.slane %v1875, 1
    %v3370 = vrot.slane %v1874, 1
    %v3371 = vsel %vm123, %v3369, %v3370
    %v3372 = vrot.slane %v3275, 1
    %v3373 = vrot.slane %v3276, 1
    %v3374 = vsel %vm123, %v3372, %v3373
    %v3375 = vrot.slane %v1878, 1
    %v3376 = vrot.slane %v1877, 1
    %v3377 = vsel %vm123, %v3375, %v3376
    %v3378 = vrot.slane %v3277, 1
    %v3379 = vrot.slane %v3278, 1
    %v3380 = vsel %vm123, %v3378, %v3379
    %v3381 = vrot.slane %v1881, 1
    %v3382 = vrot.slane %v1880, 1
    %v3383 = vsel %vm123, %v3381, %v3382
    %v3384 = vrot.slane %v3279, 1
    %v3385 = vrot.slane %v3280, 1
    %v3386 = vsel %vm123, %v3384, %v3385
    %v3387 = vrot.slane %v2156, 1
    %v3388 = vrot.slane %v2155, 1
    %v3389 = vsel %vm123, %v3387, %v3388
    %v3390 = vrot.slane %v3281, 1
    %v3391 = vrot.slane %v3282, 1
    %v3392 = vsel %vm123, %v3390, %v3391
    %v3393 = vrot.slane %v2388, 1
    %v3394 = vrot.slane %v2387, 1
    %v3395 = vsel %vm123, %v3393, %v3394
    %v3396 = vrot.slane %v3283, 1
    %v3397 = vrot.slane %v3284, 1
    %v3398 = vsel %vm123, %v3396, %v3397
    %v3414 = vld [vmem:[%s3] sm:$0xff]
    %v3415 = vld [vmem:[%s3 + $0x8] sm:$0xff]
    %v3416 = vld [vmem:[%s3 + $0x10] sm:$0xff]
    %v3417 = vld [vmem:[%s3 + $0x18] sm:$0xff]
    %v3418 = vld [vmem:[%s3 + $0x20] sm:$0xff]
    %v3419 = vld [vmem:[%s3 + $0x28] sm:$0xff]
    %v3420 = vld [vmem:[%s3 + $0x30] sm:$0xff]
    %v3421 = vld [vmem:[%s3 + $0x38] sm:$0xff]
    %v3422 = vld [vmem:[%s3 + $0x40] sm:$0xff]
    %v3423 = vld [vmem:[%s3 + $0x48] sm:$0xff]
    %v3424 = vld [vmem:[%s3 + $0x50] sm:$0xff]
    %v3425 = vld [vmem:[%s3 + $0x58] sm:$0xff]
    %v3426 = vld [vmem:[%s3 + $0x60] sm:$0xff]
    %v3427 = vld [vmem:[%s3 + $0x68] sm:$0xff]
    %v3428 = vld [vmem:[%s3 + $0x70] sm:$0xff]
    %v3429 = vld [vmem:[%s3 + $0x78] sm:$0xff]
    %v3430 = vld [vmem:[%s3 + $0x80] sm:$0xff]
    %v3431 = vld [vmem:[%s3 + $0x88] sm:$0xff]
    %v3432 = vld [vmem:[%s3 + $0x90] sm:$0xff]
    %v3433 = vld [vmem:[%s3 + $0x98] sm:$0xff]
    %v3434 = vld [vmem:[%s3 + $0xa0] sm:$0xff]
    %v3435 = vld [vmem:[%s3 + $0xa8] sm:$0xff]
    %v3436 = vld [vmem:[%s3 + $0xb0] sm:$0xff]
    %v3437 = vld [vmem:[%s3 + $0xb8] sm:$0xff]
    %v3438 = vld [vmem:[%s3 + $0xc0] sm:$0xff]
    %v3439 = vld [vmem:[%s3 + $0xc8] sm:$0xff]
    %v3440 = vld [vmem:[%s3 + $0xd0] sm:$0xff]
    %v3441 = vld [vmem:[%s3 + $0xd8] sm:$0xff]
    %v3442 = vld [vmem:[%s3 + $0xe0] sm:$0xff]
    %v3443 = vld [vmem:[%s3 + $0xe8] sm:$0xff]
    %v3444 = vld [vmem:[%s3 + $0xf0] sm:$0xff]
    %v3445 = vld [vmem:[%s3 + $0xf8] sm:$0xff]
    %v3446 = vld [vmem:[%s3 + $0x100] sm:$0xff]
    %v3447 = vld [vmem:[%s3 + $0x108] sm:$0xff]
    %v3448 = vld [vmem:[%s3 + $0x110] sm:$0xff]
    %v3449 = vld [vmem:[%s3 + $0x118] sm:$0xff]
    %v3450 = vld [vmem:[%s3 + $0x120] sm:$0xff]
    %v3451 = vld [vmem:[%s3 + $0x128] sm:$0xff]
    %v3452 = vld [vmem:[%s3 + $0x130] sm:$0xff]
    %v3453 = vld [vmem:[%s3 + $0x138] sm:$0xff]
    %v3454 = vld [vmem:[%s3 + $0x140] sm:$0xff]
    %v3455 = vld [vmem:[%s3 + $0x148] sm:$0xff]
    %v3456 = vld [vmem:[%s3 + $0x150] sm:$0xff]
    %v3457 = vld [vmem:[%s3 + $0x158] sm:$0xff]
    %v3458 = vld [vmem:[%s3 + $0x160] sm:$0xff]
    %v3459 = vld [vmem:[%s3 + $0x168] sm:$0xff]
    %v3460 = vld [vmem:[%s3 + $0x170] sm:$0xff]
    %v3461 = vld [vmem:[%s3 + $0x178] sm:$0xff]
    %v3462 = vld [vmem:[%s3 + $0x180] sm:$0xff]
    %v3463 = vld [vmem:[%s3 + $0x188] sm:$0xff]
    %v3464 = vld [vmem:[%s4] sm:$0x1]
    %v3466 = vperm.slane %v3464, 0
    %v3468 = vsel %vm2536, %v3320, 0
    %v3470 = vsel %vm2536, %v3326, 0
    %v3472 = vsel %vm2536, %v3332, 0
    %v3474 = vsel %vm2536, %v3338, 0
    %v3476 = vsel %vm2536, %v3344, 0
    %v3478 = vsel %vm2536, %v3350, 0
    %v3480 = vsel %vm2536, %v3356, 0
    %v3482 = vsel %vm2536, %v3365, 0
    %v3484 = vsel %vm2536, %v3371, 0
    %v3486 = vsel %vm2536, %v3377, 0
    %v3488 = vsel %vm2536, %v3383, 0
    %v3490 = vsel %vm2536, %v3389, 0
    %v3492 = vsel %vm2536, %v3395, 0
    %3494 = vmatpush.msra.mxu0 %v3429
    %3495 = vmatpush.msra.mxu0 %v3428
    %3496 = vmatpush.msra.mxu0 %v3427
    %3497 = vmatpush.msra.mxu0 %v3426
    %3498 = vmatpush.msra.mxu0 %v3425
    %3499 = vmatpush.msra.mxu0 %v3424
    %3500 = vmatpush.msra.mxu0 %v3423
    %3501 = vmatpush.msra.mxu0 %v3422
    %3502 = vmatpush.msra.mxu0 %v3421
    %3503 = vmatpush.msra.mxu0 %v3420
    %3504 = vmatpush.msra.mxu0 %v3419
    %3505 = vmatpush.msra.mxu0 %v3418
    %3506 = vmatpush.msra.mxu0 %v3417
    %3507 = vmatpush.msra.mxu0 %v3416
    %3508 = vmatpush.msra.mxu0 %v3415
    %3509 = vmatpush.msra.mxu0 %v3414
    %3510 = vmatmul.f32.gmra.mxu0 %v2624
    %v3511 = vpop.f32.mrf.mxu0
    %v3512 = vadd.f32 %v3466, %v3511
    %3513 = vmatmul.f32.gmra.mxu0 %v2625
    %v3514 = vpop.f32.mrf.mxu0
    %v3515 = vadd.f32 %v3466, %v3514
    %3516 = vmatmul.f32.gmra.mxu0 %v2626
    %v3517 = vpop.f32.mrf.mxu0
    %v3518 = vadd.f32 %v3466, %v3517
    %3519 = vmatmul.f32.gmra.mxu0 %v2627
    %v3520 = vpop.f32.mrf.mxu0
    %v3521 = vadd.f32 %v3466, %v3520
    %3522 = vmatmul.f32.gmra.mxu0 %v2628
    %v3523 = vpop.f32.mrf.mxu0
    %v3524 = vadd.f32 %v3466, %v3523
    %3525 = vmatmul.f32.gmra.mxu0 %v2629
    %v3526 = vpop.f32.mrf.mxu0
    %v3527 = vadd.f32 %v3466, %v3526
    %3528 = vmatmul.f32.gmra.mxu0 %v2630
    %v3529 = vpop.f32.mrf.mxu0
    %v3530 = vadd.f32 %v3466, %v3529
    %3531 = vmatmul.f32.gmra.mxu0 %v2631
    %v3532 = vpop.f32.mrf.mxu0
    %v3533 = vadd.f32 %v3466, %v3532
    %3534 = vmatmul.f32.gmra.mxu0 %v2624
    %v3535 = vpop.f32.mrf.mxu0
    %v3536 = vadd.f32 %v3466, %v3535
    %3537 = vmatmul.f32.gmra.mxu0 %v2632
    %v3538 = vpop.f32.mrf.mxu0
    %v3539 = vadd.f32 %v3466, %v3538
    %3540 = vmatmul.f32.gmra.mxu0 %v2633
    %v3541 = vpop.f32.mrf.mxu0
    %v3542 = vadd.f32 %v3466, %v3541
    %3543 = vmatmul.f32.gmra.mxu0 %v2634
    %v3544 = vpop.f32.mrf.mxu0
    %v3545 = vadd.f32 %v3466, %v3544
    %3546 = vmatmul.f32.gmra.mxu0 %v2635
    %v3547 = vpop.f32.mrf.mxu0
    %v3548 = vadd.f32 %v3466, %v3547
    %3549 = vmatmul.f32.gmra.mxu0 %v2636
    %v3550 = vpop.f32.mrf.mxu0
    %v3551 = vadd.f32 %v3466, %v3550
    %3552 = vmatmul.f32.gmra.mxu0 %v2637
    %v3553 = vpop.f32.mrf.mxu0
    %v3554 = vadd.f32 %v3466, %v3553
    %3555 = vmatmul.f32.gmra.mxu0 %v2638
    %v3556 = vpop.f32.mrf.mxu0
    %v3557 = vadd.f32 %v3466, %v3556
    %3558 = vdwg.mxu0
    %3559 = vmatpush.msra.mxu0 %v3445
    %3560 = vmatpush.msra.mxu0 %v3444
    %3561 = vmatpush.msra.mxu0 %v3443
    %3562 = vmatpush.msra.mxu0 %v3442
    %3563 = vmatpush.msra.mxu0 %v3441
    %3564 = vmatpush.msra.mxu0 %v3440
    %3565 = vmatpush.msra.mxu0 %v3439
    %3566 = vmatpush.msra.mxu0 %v3438
    %3567 = vmatpush.msra.mxu0 %v3437
    %3568 = vmatpush.msra.mxu0 %v3436
    %3569 = vmatpush.msra.mxu0 %v3435
    %3570 = vmatpush.msra.mxu0 %v3434
    %3571 = vmatpush.msra.mxu0 %v3433
    %3572 = vmatpush.msra.mxu0 %v3432
    %3573 = vmatpush.msra.mxu0 %v3431
    %3574 = vmatpush.msra.mxu0 %v3430
    %3575 = vmatmul.f32.gmra.mxu0 %v2734
    %v3576 = vpop.f32.mrf.mxu0
    %v3577 = vadd.f32 %v3512, %v3576
    %3578 = vmatmul.f32.gmra.mxu0 %v2735
    %v3579 = vpop.f32.mrf.mxu0
    %v3580 = vadd.f32 %v3515, %v3579
    %3581 = vmatmul.f32.gmra.mxu0 %v2736
    %v3582 = vpop.f32.mrf.mxu0
    %v3583 = vadd.f32 %v3518, %v3582
    %3584 = vmatmul.f32.gmra.mxu0 %v2737
    %v3585 = vpop.f32.mrf.mxu0
    %v3586 = vadd.f32 %v3521, %v3585
    %3587 = vmatmul.f32.gmra.mxu0 %v2738
    %v3588 = vpop.f32.mrf.mxu0
    %v3589 = vadd.f32 %v3524, %v3588
    %3590 = vmatmul.f32.gmra.mxu0 %v2739
    %v3591 = vpop.f32.mrf.mxu0
    %v3592 = vadd.f32 %v3527, %v3591
    %3593 = vmatmul.f32.gmra.mxu0 %v2740
    %v3594 = vpop.f32.mrf.mxu0
    %v3595 = vadd.f32 %v3530, %v3594
    %3596 = vmatmul.f32.gmra.mxu0 %v2741
    %v3597 = vpop.f32.mrf.mxu0
    %v3598 = vadd.f32 %v3533, %v3597
    %3599 = vmatmul.f32.gmra.mxu0 %v2742
    %v3600 = vpop.f32.mrf.mxu0
    %v3601 = vadd.f32 %v3536, %v3600
    %3602 = vmatmul.f32.gmra.mxu0 %v2743
    %v3603 = vpop.f32.mrf.mxu0
    %v3604 = vadd.f32 %v3539, %v3603
    %3605 = vmatmul.f32.gmra.mxu0 %v2744
    %v3606 = vpop.f32.mrf.mxu0
    %v3607 = vadd.f32 %v3542, %v3606
    %3608 = vmatmul.f32.gmra.mxu0 %v2745
    %v3609 = vpop.f32.mrf.mxu0
    %v3610 = vadd.f32 %v3545, %v3609
    %3611 = vmatmul.f32.gmra.mxu0 %v2746
    %v3612 = vpop.f32.mrf.mxu0
    %v3613 = vadd.f32 %v3548, %v3612
    %3614 = vmatmul.f32.gmra.mxu0 %v2747
    %v3615 = vpop.f32.mrf.mxu0
    %v3616 = vadd.f32 %v3551, %v3615
    %3617 = vmatmul.f32.gmra.mxu0 %v2748
    %v3618 = vpop.f32.mrf.mxu0
    %v3619 = vadd.f32 %v3554, %v3618
    %3620 = vmatmul.f32.gmra.mxu0 %v2749
    %v3621 = vpop.f32.mrf.mxu0
    %v3622 = vadd.f32 %v3557, %v3621
    %3623 = vdwg.mxu0
    %3624 = vmatpush.msra.mxu0 %v3461
    %3625 = vmatpush.msra.mxu0 %v3460
    %3626 = vmatpush.msra.mxu0 %v3459
    %3627 = vmatpush.msra.mxu0 %v3458
    %3628 = vmatpush.msra.mxu0 %v3457
    %3629 = vmatpush.msra.mxu0 %v3456
    %3630 = vmatpush.msra.mxu0 %v3455
    %3631 = vmatpush.msra.mxu0 %v3454
    %3632 = vmatpush.msra.mxu0 %v3453
    %3633 = vmatpush.msra.mxu0 %v3452
    %3634 = vmatpush.msra.mxu0 %v3451
    %3635 = vmatpush.msra.mxu0 %v3450
    %3636 = vmatpush.msra.mxu0 %v3449
    %3637 = vmatpush.msra.mxu0 %v3448
    %3638 = vmatpush.msra.mxu0 %v3447
    %3639 = vmatpush.msra.mxu0 %v3446
    %3640 = vmatmul.f32.gmra.mxu0 %v3317
    %v3641 = vpop.f32.mrf.mxu0
    %v3642 = vadd.f32 %v3577, %v3641
    %3643 = vmatmul.f32.gmra.mxu0 %v3323
    %v3644 = vpop.f32.mrf.mxu0
    %v3645 = vadd.f32 %v3580, %v3644
    %3646 = vmatmul.f32.gmra.mxu0 %v3329
    %v3647 = vpop.f32.mrf.mxu0
    %v3648 = vadd.f32 %v3583, %v3647
    %3649 = vmatmul.f32.gmra.mxu0 %v3335
    %v3650 = vpop.f32.mrf.mxu0
    %v3651 = vadd.f32 %v3586, %v3650
    %3652 = vmatmul.f32.gmra.mxu0 %v3341
    %v3653 = vpop.f32.mrf.mxu0
    %v3654 = vadd.f32 %v3589, %v3653
    %3655 = vmatmul.f32.gmra.mxu0 %v3347
    %v3656 = vpop.f32.mrf.mxu0
    %v3657 = vadd.f32 %v3592, %v3656
    %3658 = vmatmul.f32.gmra.mxu0 %v3353
    %v3659 = vpop.f32.mrf.mxu0
    %v3660 = vadd.f32 %v3595, %v3659
    %3661 = vmatmul.f32.gmra.mxu0 %v3359
    %v3662 = vpop.f32.mrf.mxu0
    %v3663 = vadd.f32 %v3598, %v3662
    %3664 = vmatmul.f32.gmra.mxu0 %v3362
    %v3665 = vpop.f32.mrf.mxu0
    %v3666 = vadd.f32 %v3601, %v3665
    %3667 = vmatmul.f32.gmra.mxu0 %v3368
    %v3668 = vpop.f32.mrf.mxu0
    %v3669 = vadd.f32 %v3604, %v3668
    %3670 = vmatmul.f32.gmra.mxu0 %v3374
    %v3671 = vpop.f32.mrf.mxu0
    %v3672 = vadd.f32 %v3607, %v3671
    %3673 = vmatmul.f32.gmra.mxu0 %v3380
    %v3674 = vpop.f32.mrf.mxu0
    %v3675 = vadd.f32 %v3610, %v3674
    %3676 = vmatmul.f32.gmra.mxu0 %v3386
    %v3677 = vpop.f32.mrf.mxu0
    %v3678 = vadd.f32 %v3613, %v3677
    %3679 = vmatmul.f32.gmra.mxu0 %v3392
    %v3680 = vpop.f32.mrf.mxu0
    %v3681 = vadd.f32 %v3616, %v3680
    %3682 = vmatmul.f32.gmra.mxu0 %v3398
    %v3683 = vpop.f32.mrf.mxu0
    %v3684 = vadd.f32 %v3619, %v3683
    %3685 = vmatmul.f32.gmra.mxu0 %v3359
    %v3686 = vpop.f32.mrf.mxu0
    %v3687 = vadd.f32 %v3622, %v3686
    %3688 = vdwg.mxu0
    %3689 = vmatpush.msra.mxu0 0.0
    %3690 = vmatpush.msra.mxu0 0.0
    %3691 = vmatpush.msra.mxu0 0.0
    %3692 = vmatpush.msra.mxu0 0.0
    %3693 = vmatpush.msra.mxu0 0.0
    %3694 = vmatpush.msra.mxu0 0.0
    %3695 = vmatpush.msra.mxu0 0.0
    %3696 = vmatpush.msra.mxu0 0.0
    %3697 = vmatpush.msra.mxu0 0.0
    %3698 = vmatpush.msra.mxu0 0.0
    %3699 = vmatpush.msra.mxu0 0.0
    %3700 = vmatpush.msra.mxu0 0.0
    %3701 = vmatpush.msra.mxu0 0.0
    %3702 = vmatpush.msra.mxu0 0.0
    %3703 = vmatpush.msra.mxu0 %v3463
    %3704 = vmatpush.msra.mxu0 %v3462
    %3705 = vmatmul.f32.gmra.mxu0 %v3468
    %v3706 = vpop.f32.mrf.mxu0
    %v3707 = vadd.f32 %v3642, %v3706
    %3708 = vmatmul.f32.gmra.mxu0 %v3470
    %v3709 = vpop.f32.mrf.mxu0
    %v3710 = vadd.f32 %v3645, %v3709
    %3711 = vmatmul.f32.gmra.mxu0 %v3472
    %v3712 = vpop.f32.mrf.mxu0
    %v3713 = vadd.f32 %v3648, %v3712
    %3714 = vmatmul.f32.gmra.mxu0 %v3474
    %v3715 = vpop.f32.mrf.mxu0
    %v3716 = vadd.f32 %v3651, %v3715
    %3717 = vmatmul.f32.gmra.mxu0 %v3476
    %v3718 = vpop.f32.mrf.mxu0
    %v3719 = vadd.f32 %v3654, %v3718
    %3720 = vmatmul.f32.gmra.mxu0 %v3478
    %v3721 = vpop.f32.mrf.mxu0
    %v3722 = vadd.f32 %v3657, %v3721
    %3723 = vmatmul.f32.gmra.mxu0 %v3480
    %v3724 = vpop.f32.mrf.mxu0
    %v3725 = vadd.f32 %v3660, %v3724
    %3726 = vmatmul.f32.gmra.mxu0 %v3480
    %v3727 = vpop.f32.mrf.mxu0
    %v3728 = vadd.f32 %v3663, %v3727
    %3729 = vmatmul.f32.gmra.mxu0 %v3482
    %v3730 = vpop.f32.mrf.mxu0
    %v3731 = vadd.f32 %v3666, %v3730
    %3732 = vmatmul.f32.gmra.mxu0 %v3484
    %v3733 = vpop.f32.mrf.mxu0
    %v3734 = vadd.f32 %v3669, %v3733
    %3735 = vmatmul.f32.gmra.mxu0 %v3486
    %v3736 = vpop.f32.mrf.mxu0
    %v3737 = vadd.f32 %v3672, %v3736
    %3738 = vmatmul.f32.gmra.mxu0 %v3488
    %v3739 = vpop.f32.mrf.mxu0
    %v3740 = vadd.f32 %v3675, %v3739
    %3741 = vmatmul.f32.gmra.mxu0 %v3490
    %v3742 = vpop.f32.mrf.mxu0
    %v3743 = vadd.f32 %v3678, %v3742
    %3744 = vmatmul.f32.gmra.mxu0 %v3492
    %v3745 = vpop.f32.mrf.mxu0
    %v3746 = vadd.f32 %v3681, %v3745
    %3747 = vmatmul.f32.gmra.mxu0 %v3480
    %v3748 = vpop.f32.mrf.mxu0
    %v3749 = vadd.f32 %v3684, %v3748
    %3750 = vmatmul.f32.gmra.mxu0 %v3480
    %v3751 = vpop.f32.mrf.mxu0
    %v3752 = vadd.f32 %v3687, %v3751
    %3753 = vdwg.mxu0
    %v3754 = vmax.f32 %v3707, 0.0
    %v3755 = vmax.f32 %v3710, 0.0
    %v3756 = vmax.f32 %v3713, 0.0
    %v3757 = vmax.f32 %v3716, 0.0
    %v3758 = vmax.f32 %v3719, 0.0
    %v3759 = vmax.f32 %v3722, 0.0
    %v3760 = vmax.f32 %v3725, 0.0
    %v3761 = vmax.f32 %v3728, 0.0
    %v3762 = vmax.f32 %v3731, 0.0
    %v3763 = vmax.f32 %v3734, 0.0
    %v3764 = vmax.f32 %v3737, 0.0
    %v3765 = vmax.f32 %v3740, 0.0
    %v3766 = vmax.f32 %v3743, 0.0
    %v3767 = vmax.f32 %v3746, 0.0
    %v3768 = vmax.f32 %v3749, 0.0
    %v3769 = vmax.f32 %v3752, 0.0
    %v3786 = vrot.slane %v3754, 6
    %v3787 = vrot.slane %v3755, 6
    %v3788 = vrot.slane %v3756, 6
    %v3789 = vrot.slane %v3757, 6
    %v3790 = vrot.slane %v3758, 6
    %v3791 = vrot.slane %v3759, 6
    %v3792 = vrot.slane %v3760, 6
    %v3793 = vrot.slane %v3761, 6
    %v3794 = vrot.slane %v3762, 6
    %v3795 = vrot.slane %v3763, 6
    %v3796 = vrot.slane %v3764, 6
    %v3797 = vrot.slane %v3765, 6
    %v3798 = vrot.slane %v3766, 6
    %v3799 = vrot.slane %v3767, 6
    %v3800 = vrot.slane %v3768, 6
    %v3801 = vrot.slane %v3769, 6
    %v3818 = vsel %vm1626, 0.0, %v3786
    %v3819 = vsel %vm1626, 0.0, %v3787
    %v3820 = vsel %vm1626, 0.0, %v3788
    %v3821 = vsel %vm1626, 0.0, %v3789
    %v3822 = vsel %vm1626, 0.0, %v3790
    %v3823 = vsel %vm1626, 0.0, %v3791
    %v3824 = vsel %vm1626, 0.0, %v3792
    %v3825 = vsel %vm1626, 0.0, %v3793
    %v3826 = vsel %vm1626, 0.0, %v3794
    %v3827 = vsel %vm1626, 0.0, %v3795
    %v3828 = vsel %vm1626, 0.0, %v3796
    %v3829 = vsel %vm1626, 0.0, %v3797
    %v3830 = vsel %vm1626, 0.0, %v3798
    %v3831 = vsel %vm1626, 0.0, %v3799
    %v3832 = vsel %vm1626, 0.0, %v3800
    %v3833 = vsel %vm1626, 0.0, %v3801
    %v3834 = vsel %vm1626, %v3786, 0.0
    %v3835 = vsel %vm1626, %v3787, 0.0
    %v3836 = vsel %vm1626, %v3788, 0.0
    %v3837 = vsel %vm1626, %v3789, 0.0
    %v3838 = vsel %vm1626, %v3790, 0.0
    %v3839 = vsel %vm1626, %v3791, 0.0
    %v3840 = vsel %vm1626, %v3792, 0.0
    %v3841 = vsel %vm1626, %v3793, 0.0
    %v3842 = vsel %vm1626, %v3794, 0.0
    %v3843 = vsel %vm1626, %v3795, 0.0
    %v3844 = vsel %vm1626, %v3796, 0.0
    %v3845 = vsel %vm1626, %v3797, 0.0
    %v3846 = vsel %vm1626, %v3798, 0.0
    %v3847 = vsel %vm1626, %v3799, 0.0
    %v3848 = vsel %vm1626, %v3800, 0.0
    %v3849 = vsel %vm1626, %v3801, 0.0
    %v3874 = vrot.slane %v3818, 1
    %v3875 = vrot.slane %v3834, 1
    %v3876 = vsel %vm123, %v3874, %v3875
    %v3877 = vrot.slane %v3819, 1
    %v3878 = vrot.slane %v3835, 1
    %v3879 = vsel %vm123, %v3877, %v3878
    %v3880 = vrot.slane %v3820, 1
    %v3881 = vrot.slane %v3836, 1
    %v3882 = vsel %vm123, %v3880, %v3881
    %v3883 = vrot.slane %v3821, 1
    %v3884 = vrot.slane %v3837, 1
    %v3885 = vsel %vm123, %v3883, %v3884
    %v3886 = vrot.slane %v3822, 1
    %v3887 = vrot.slane %v3838, 1
    %v3888 = vsel %vm123, %v3886, %v3887
    %v3889 = vrot.slane %v3823, 1
    %v3890 = vrot.slane %v3839, 1
    %v3891 = vsel %vm123, %v3889, %v3890
    %v3892 = vrot.slane %v3826, 1
    %v3893 = vrot.slane %v3842, 1
    %v3894 = vsel %vm123, %v3892, %v3893
    %v3895 = vrot.slane %v3827, 1
    %v3896 = vrot.slane %v3843, 1
    %v3897 = vsel %vm123, %v3895, %v3896
    %v3898 = vrot.slane %v3828, 1
    %v3899 = vrot.slane %v3844, 1
    %v3900 = vsel %vm123, %v3898, %v3899
    %v3901 = vrot.slane %v3829, 1
    %v3902 = vrot.slane %v3845, 1
    %v3903 = vsel %vm123, %v3901, %v3902
    %v3904 = vrot.slane %v3830, 1
    %v3905 = vrot.slane %v3846, 1
    %v3906 = vsel %vm123, %v3904, %v3905
    %v3907 = vrot.slane %v3831, 1
    %v3908 = vrot.slane %v3847, 1
    %v3909 = vsel %vm123, %v3907, %v3908
    %3910 = vrot.lane.b32.xlu0 %v1689, 32
    %v3911 = vpop.permute.xlu0 %3910
    %3912 = vrot.lane.b32.xlu0 %v3876, 32
    %v3913 = vpop.permute.xlu0 %3912
    %3914 = vrot.lane.b32.xlu0 %v3879, 32
    %v3915 = vpop.permute.xlu0 %3914
    %3916 = vrot.lane.b32.xlu0 %v3882, 32
    %v3917 = vpop.permute.xlu0 %3916
    %3918 = vrot.lane.b32.xlu0 %v3885, 32
    %v3919 = vpop.permute.xlu0 %3918
    %3920 = vrot.lane.b32.xlu0 %v3888, 32
    %v3921 = vpop.permute.xlu0 %3920
    %3922 = vrot.lane.b32.xlu0 %v3891, 32
    %v3923 = vpop.permute.xlu0 %3922
    %3924 = vrot.lane.b32.xlu0 %v3894, 32
    %v3925 = vpop.permute.xlu0 %3924
    %3926 = vrot.lane.b32.xlu0 %v3897, 32
    %v3927 = vpop.permute.xlu0 %3926
    %3928 = vrot.lane.b32.xlu0 %v3900, 32
    %v3929 = vpop.permute.xlu0 %3928
    %3930 = vrot.lane.b32.xlu0 %v3903, 32
    %v3931 = vpop.permute.xlu0 %3930
    %3932 = vrot.lane.b32.xlu0 %v3906, 32
    %v3933 = vpop.permute.xlu0 %3932
    %3934 = vrot.lane.b32.xlu0 %v3909, 32
    %v3935 = vpop.permute.xlu0 %3934
    %v3949 = vrot.slane %v3818, 2
    %v3950 = vrot.slane %v3834, 2
    %v3951 = vsel %vm220, %v3949, %v3950
    %v3952 = vrot.slane %v3819, 2
    %v3953 = vrot.slane %v3835, 2
    %v3954 = vsel %vm220, %v3952, %v3953
    %v3955 = vrot.slane %v3820, 2
    %v3956 = vrot.slane %v3836, 2
    %v3957 = vsel %vm220, %v3955, %v3956
    %v3958 = vrot.slane %v3821, 2
    %v3959 = vrot.slane %v3837, 2
    %v3960 = vsel %vm220, %v3958, %v3959
    %v3961 = vrot.slane %v3822, 2
    %v3962 = vrot.slane %v3838, 2
    %v3963 = vsel %vm220, %v3961, %v3962
    %v3964 = vrot.slane %v3823, 2
    %v3965 = vrot.slane %v3839, 2
    %v3966 = vsel %vm220, %v3964, %v3965
    %v3967 = vrot.slane %v3826, 2
    %v3968 = vrot.slane %v3842, 2
    %v3969 = vsel %vm220, %v3967, %v3968
    %v3970 = vrot.slane %v3827, 2
    %v3971 = vrot.slane %v3843, 2
    %v3972 = vsel %vm220, %v3970, %v3971
    %v3973 = vrot.slane %v3828, 2
    %v3974 = vrot.slane %v3844, 2
    %v3975 = vsel %vm220, %v3973, %v3974
    %v3976 = vrot.slane %v3829, 2
    %v3977 = vrot.slane %v3845, 2
    %v3978 = vsel %vm220, %v3976, %v3977
    %v3979 = vrot.slane %v3830, 2
    %v3980 = vrot.slane %v3846, 2
    %v3981 = vsel %vm220, %v3979, %v3980
    %v3982 = vrot.slane %v3831, 2
    %v3983 = vrot.slane %v3847, 2
    %v3984 = vsel %vm220, %v3982, %v3983
    %3985 = vrot.lane.b32.xlu0 %v1767, 64
    %v3986 = vpop.permute.xlu0 %3985
    %3987 = vrot.lane.b32.xlu0 %v3951, 64
    %v3988 = vpop.permute.xlu0 %3987
    %3989 = vrot.lane.b32.xlu0 %v3954, 64
    %v3990 = vpop.permute.xlu0 %3989
    %3991 = vrot.lane.b32.xlu0 %v3957, 64
    %v3992 = vpop.permute.xlu0 %3991
    %3993 = vrot.lane.b32.xlu0 %v3960, 64
    %v3994 = vpop.permute.xlu0 %3993
    %3995 = vrot.lane.b32.xlu0 %v3963, 64
    %v3996 = vpop.permute.xlu0 %3995
    %3997 = vrot.lane.b32.xlu0 %v3966, 64
    %v3998 = vpop.permute.xlu0 %3997
    %3999 = vrot.lane.b32.xlu0 %v3969, 64
    %v4000 = vpop.permute.xlu0 %3999
    %4001 = vrot.lane.b32.xlu0 %v3972, 64
    %v4002 = vpop.permute.xlu0 %4001
    %4003 = vrot.lane.b32.xlu0 %v3975, 64
    %v4004 = vpop.permute.xlu0 %4003
    %4005 = vrot.lane.b32.xlu0 %v3978, 64
    %v4006 = vpop.permute.xlu0 %4005
    %4007 = vrot.lane.b32.xlu0 %v3981, 64
    %v4008 = vpop.permute.xlu0 %4007
    %4009 = vrot.lane.b32.xlu0 %v3984, 64
    %v4010 = vpop.permute.xlu0 %4009
    %v4024 = vrot.slane %v3818, 3
    %v4025 = vrot.slane %v3834, 3
    %v4026 = vsel %vm1490, %v4024, %v4025
    %v4027 = vrot.slane %v3819, 3
    %v4028 = vrot.slane %v3835, 3
    %v4029 = vsel %vm1490, %v4027, %v4028
    %v4030 = vrot.slane %v3820, 3
    %v4031 = vrot.slane %v3836, 3
    %v4032 = vsel %vm1490, %v4030, %v4031
    %v4033 = vrot.slane %v3821, 3
    %v4034 = vrot.slane %v3837, 3
    %v4035 = vsel %vm1490, %v4033, %v4034
    %v4036 = vrot.slane %v3822, 3
    %v4037 = vrot.slane %v3838, 3
    %v4038 = vsel %vm1490, %v4036, %v4037
    %v4039 = vrot.slane %v3823, 3
    %v4040 = vrot.slane %v3839, 3
    %v4041 = vsel %vm1490, %v4039, %v4040
    %v4042 = vrot.slane %v3826, 3
    %v4043 = vrot.slane %v3842, 3
    %v4044 = vsel %vm1490, %v4042, %v4043
    %v4045 = vrot.slane %v3827, 3
    %v4046 = vrot.slane %v3843, 3
    %v4047 = vsel %vm1490, %v4045, %v4046
    %v4048 = vrot.slane %v3828, 3
    %v4049 = vrot.slane %v3844, 3
    %v4050 = vsel %vm1490, %v4048, %v4049
    %v4051 = vrot.slane %v3829, 3
    %v4052 = vrot.slane %v3845, 3
    %v4053 = vsel %vm1490, %v4051, %v4052
    %v4054 = vrot.slane %v3830, 3
    %v4055 = vrot.slane %v3846, 3
    %v4056 = vsel %vm1490, %v4054, %v4055
    %v4057 = vrot.slane %v3831, 3
    %v4058 = vrot.slane %v3847, 3
    %v4059 = vsel %vm1490, %v4057, %v4058
    %4060 = vrot.lane.b32.xlu0 %v1845, 96
    %v4061 = vpop.permute.xlu0 %4060
    %4062 = vrot.lane.b32.xlu0 %v4026, 96
    %v4063 = vpop.permute.xlu0 %4062
    %4064 = vrot.lane.b32.xlu0 %v4029, 96
    %v4065 = vpop.permute.xlu0 %4064
    %4066 = vrot.lane.b32.xlu0 %v4032, 96
    %v4067 = vpop.permute.xlu0 %4066
    %4068 = vrot.lane.b32.xlu0 %v4035, 96
    %v4069 = vpop.permute.xlu0 %4068
    %4070 = vrot.lane.b32.xlu0 %v4038, 96
    %v4071 = vpop.permute.xlu0 %4070
    %4072 = vrot.lane.b32.xlu0 %v4041, 96
    %v4073 = vpop.permute.xlu0 %4072
    %4074 = vrot.lane.b32.xlu0 %v4044, 96
    %v4075 = vpop.permute.xlu0 %4074
    %4076 = vrot.lane.b32.xlu0 %v4047, 96
    %v4077 = vpop.permute.xlu0 %4076
    %4078 = vrot.lane.b32.xlu0 %v4050, 96
    %v4079 = vpop.permute.xlu0 %4078
    %4080 = vrot.lane.b32.xlu0 %v4053, 96
    %v4081 = vpop.permute.xlu0 %4080
    %4082 = vrot.lane.b32.xlu0 %v4056, 96
    %v4083 = vpop.permute.xlu0 %4082
    %4084 = vrot.lane.b32.xlu0 %v4059, 96
    %v4085 = vpop.permute.xlu0 %4084
    %v4099 = vrot.slane %v3818, 4
    %v4100 = vrot.slane %v3834, 4
    %v4101 = vsel %vm1921, %v4099, %v4100
    %v4102 = vrot.slane %v3819, 4
    %v4103 = vrot.slane %v3835, 4
    %v4104 = vsel %vm1921, %v4102, %v4103
    %v4105 = vrot.slane %v3820, 4
    %v4106 = vrot.slane %v3836, 4
    %v4107 = vsel %vm1921, %v4105, %v4106
    %v4108 = vrot.slane %v3821, 4
    %v4109 = vrot.slane %v3837, 4
    %v4110 = vsel %vm1921, %v4108, %v4109
    %v4111 = vrot.slane %v3822, 4
    %v4112 = vrot.slane %v3838, 4
    %v4113 = vsel %vm1921, %v4111, %v4112
    %v4114 = vrot.slane %v3823, 4
    %v4115 = vrot.slane %v3839, 4
    %v4116 = vsel %vm1921, %v4114, %v4115
    %v4117 = vrot.slane %v3826, 4
    %v4118 = vrot.slane %v3842, 4
    %v4119 = vsel %vm1921, %v4117, %v4118
    %v4120 = vrot.slane %v3827, 4
    %v4121 = vrot.slane %v3843, 4
    %v4122 = vsel %vm1921, %v4120, %v4121
    %v4123 = vrot.slane %v3828, 4
    %v4124 = vrot.slane %v3844, 4
    %v4125 = vsel %vm1921, %v4123, %v4124
    %v4126 = vrot.slane %v3829, 4
    %v4127 = vrot.slane %v3845, 4
    %v4128 = vsel %vm1921, %v4126, %v4127
    %v4129 = vrot.slane %v3830, 4
    %v4130 = vrot.slane %v3846, 4
    %v4131 = vsel %vm1921, %v4129, %v4130
    %v4132 = vrot.slane %v3831, 4
    %v4133 = vrot.slane %v3847, 4
    %v4134 = vsel %vm1921, %v4132, %v4133
    %4150 = vrot.lane.b32.xlu0 %v1627, 32
    %v4151 = vpop.permute.xlu0 %4150
    %4152 = vrot.lane.b32.xlu0 %v3818, 32
    %v4153 = vpop.permute.xlu0 %4152
    %4154 = vrot.lane.b32.xlu0 %v3819, 32
    %v4155 = vpop.permute.xlu0 %4154
    %4156 = vrot.lane.b32.xlu0 %v3820, 32
    %v4157 = vpop.permute.xlu0 %4156
    %4158 = vrot.lane.b32.xlu0 %v3821, 32
    %v4159 = vpop.permute.xlu0 %4158
    %4160 = vrot.lane.b32.xlu0 %v3822, 32
    %v4161 = vpop.permute.xlu0 %4160
    %4162 = vrot.lane.b32.xlu0 %v3823, 32
    %v4163 = vpop.permute.xlu0 %4162
    %4164 = vrot.lane.b32.xlu0 %v3824, 32
    %v4165 = vpop.permute.xlu0 %4164
    %4166 = vrot.lane.b32.xlu0 %v3826, 32
    %v4167 = vpop.permute.xlu0 %4166
    %4168 = vrot.lane.b32.xlu0 %v3827, 32
    %v4169 = vpop.permute.xlu0 %4168
    %4170 = vrot.lane.b32.xlu0 %v3828, 32
    %v4171 = vpop.permute.xlu0 %4170
    %4172 = vrot.lane.b32.xlu0 %v3829, 32
    %v4173 = vpop.permute.xlu0 %4172
    %4174 = vrot.lane.b32.xlu0 %v3830, 32
    %v4175 = vpop.permute.xlu0 %4174
    %4176 = vrot.lane.b32.xlu0 %v3831, 32
    %v4177 = vpop.permute.xlu0 %4176
    %4178 = vrot.lane.b32.xlu0 %v3832, 32
    %v4179 = vpop.permute.xlu0 %4178
    %v4197 = vrot.slane %v3824, 1
    %v4198 = vrot.slane %v3840, 1
    %v4199 = vsel %vm123, %v4197, %v4198
    %v4200 = vrot.slane %v3832, 1
    %v4201 = vrot.slane %v3848, 1
    %v4202 = vsel %vm123, %v4200, %v4201
    %4203 = vrot.lane.b32.xlu0 %v1689, 64
    %v4204 = vpop.permute.xlu0 %4203
    %4205 = vrot.lane.b32.xlu0 %v3876, 64
    %v4206 = vpop.permute.xlu0 %4205
    %4207 = vrot.lane.b32.xlu0 %v3879, 64
    %v4208 = vpop.permute.xlu0 %4207
    %4209 = vrot.lane.b32.xlu0 %v3882, 64
    %v4210 = vpop.permute.xlu0 %4209
    %4211 = vrot.lane.b32.xlu0 %v3885, 64
    %v4212 = vpop.permute.xlu0 %4211
    %4213 = vrot.lane.b32.xlu0 %v3888, 64
    %v4214 = vpop.permute.xlu0 %4213
    %4215 = vrot.lane.b32.xlu0 %v3891, 64
    %v4216 = vpop.permute.xlu0 %4215
    %4217 = vrot.lane.b32.xlu0 %v4199, 64
    %v4218 = vpop.permute.xlu0 %4217
    %4219 = vrot.lane.b32.xlu0 %v3894, 64
    %v4220 = vpop.permute.xlu0 %4219
    %4221 = vrot.lane.b32.xlu0 %v3897, 64
    %v4222 = vpop.permute.xlu0 %4221
    %4223 = vrot.lane.b32.xlu0 %v3900, 64
    %v4224 = vpop.permute.xlu0 %4223
    %4225 = vrot.lane.b32.xlu0 %v3903, 64
    %v4226 = vpop.permute.xlu0 %4225
    %4227 = vrot.lane.b32.xlu0 %v3906, 64
    %v4228 = vpop.permute.xlu0 %4227
    %4229 = vrot.lane.b32.xlu0 %v3909, 64
    %v4230 = vpop.permute.xlu0 %4229
    %4231 = vrot.lane.b32.xlu0 %v4202, 64
    %v4232 = vpop.permute.xlu0 %4231
    %v4248 = vrot.slane %v3824, 2
    %v4249 = vrot.slane %v3840, 2
    %v4250 = vsel %vm220, %v4248, %v4249
    %v4251 = vrot.slane %v3832, 2
    %v4252 = vrot.slane %v3848, 2
    %v4253 = vsel %vm220, %v4251, %v4252
    %4254 = vrot.lane.b32.xlu0 %v1767, 96
    %v4255 = vpop.permute.xlu0 %4254
    %4256 = vrot.lane.b32.xlu0 %v3951, 96
    %v4257 = vpop.permute.xlu0 %4256
    %4258 = vrot.lane.b32.xlu0 %v3954, 96
    %v4259 = vpop.permute.xlu0 %4258
    %4260 = vrot.lane.b32.xlu0 %v3957, 96
    %v4261 = vpop.permute.xlu0 %4260
    %4262 = vrot.lane.b32.xlu0 %v3960, 96
    %v4263 = vpop.permute.xlu0 %4262
    %4264 = vrot.lane.b32.xlu0 %v3963, 96
    %v4265 = vpop.permute.xlu0 %4264
    %4266 = vrot.lane.b32.xlu0 %v3966, 96
    %v4267 = vpop.permute.xlu0 %4266
    %4268 = vrot.lane.b32.xlu0 %v4250, 96
    %v4269 = vpop.permute.xlu0 %4268
    %4270 = vrot.lane.b32.xlu0 %v3969, 96
    %v4271 = vpop.permute.xlu0 %4270
    %4272 = vrot.lane.b32.xlu0 %v3972, 96
    %v4273 = vpop.permute.xlu0 %4272
    %4274 = vrot.lane.b32.xlu0 %v3975, 96
    %v4275 = vpop.permute.xlu0 %4274
    %4276 = vrot.lane.b32.xlu0 %v3978, 96
    %v4277 = vpop.permute.xlu0 %4276
    %4278 = vrot.lane.b32.xlu0 %v3981, 96
    %v4279 = vpop.permute.xlu0 %4278
    %4280 = vrot.lane.b32.xlu0 %v3984, 96
    %v4281 = vpop.permute.xlu0 %4280
    %4282 = vrot.lane.b32.xlu0 %v4253, 96
    %v4283 = vpop.permute.xlu0 %4282
    %v4299 = vrot.slane %v3824, 3
    %v4300 = vrot.slane %v3840, 3
    %v4301 = vsel %vm1490, %v4299, %v4300
    %v4302 = vrot.slane %v3832, 3
    %v4303 = vrot.slane %v3848, 3
    %v4304 = vsel %vm1490, %v4302, %v4303
    %v4319 = vrot.slane %v3824, 4
    %v4320 = vrot.slane %v3840, 4
    %v4321 = vsel %vm1921, %v4319, %v4320
    %v4322 = vrot.slane %v3832, 4
    %v4323 = vrot.slane %v3848, 4
    %v4324 = vsel %vm1921, %v4322, %v4323
    %4325 = vrot.lane.b32.xlu0 %v1924, 32
    %v4326 = vpop.permute.xlu0 %4325
    %4327 = vrot.lane.b32.xlu0 %v4101, 32
    %v4328 = vpop.permute.xlu0 %4327
    %4329 = vrot.lane.b32.xlu0 %v4104, 32
    %v4330 = vpop.permute.xlu0 %4329
    %4331 = vrot.lane.b32.xlu0 %v4107, 32
    %v4332 = vpop.permute.xlu0 %4331
    %4333 = vrot.lane.b32.xlu0 %v4110, 32
    %v4334 = vpop.permute.xlu0 %4333
    %4335 = vrot.lane.b32.xlu0 %v4113, 32
    %v4336 = vpop.permute.xlu0 %4335
    %4337 = vrot.lane.b32.xlu0 %v4116, 32
    %v4338 = vpop.permute.xlu0 %4337
    %4339 = vrot.lane.b32.xlu0 %v4321, 32
    %v4340 = vpop.permute.xlu0 %4339
    %4341 = vrot.lane.b32.xlu0 %v4119, 32
    %v4342 = vpop.permute.xlu0 %4341
    %4343 = vrot.lane.b32.xlu0 %v4122, 32
    %v4344 = vpop.permute.xlu0 %4343
    %4345 = vrot.lane.b32.xlu0 %v4125, 32
    %v4346 = vpop.permute.xlu0 %4345
    %4347 = vrot.lane.b32.xlu0 %v4128, 32
    %v4348 = vpop.permute.xlu0 %4347
    %4349 = vrot.lane.b32.xlu0 %v4131, 32
    %v4350 = vpop.permute.xlu0 %4349
    %4351 = vrot.lane.b32.xlu0 %v4134, 32
    %v4352 = vpop.permute.xlu0 %4351
    %4353 = vrot.lane.b32.xlu0 %v4324, 32
    %v4354 = vpop.permute.xlu0 %4353
    %4372 = vrot.lane.b32.xlu0 %v3818, 64
    %v4373 = vpop.permute.xlu0 %4372
    %4374 = vrot.lane.b32.xlu0 %v3819, 64
    %v4375 = vpop.permute.xlu0 %4374
    %4376 = vrot.lane.b32.xlu0 %v3820, 64
    %v4377 = vpop.permute.xlu0 %4376
    %4378 = vrot.lane.b32.xlu0 %v3821, 64
    %v4379 = vpop.permute.xlu0 %4378
    %4380 = vrot.lane.b32.xlu0 %v3822, 64
    %v4381 = vpop.permute.xlu0 %4380
    %4382 = vrot.lane.b32.xlu0 %v3823, 64
    %v4383 = vpop.permute.xlu0 %4382
    %4384 = vrot.lane.b32.xlu0 %v3824, 64
    %v4385 = vpop.permute.xlu0 %4384
    %4386 = vrot.lane.b32.xlu0 %v3825, 64
    %v4387 = vpop.permute.xlu0 %4386
    %4388 = vrot.lane.b32.xlu0 %v3826, 64
    %v4389 = vpop.permute.xlu0 %4388
    %4390 = vrot.lane.b32.xlu0 %v3827, 64
    %v4391 = vpop.permute.xlu0 %4390
    %4392 = vrot.lane.b32.xlu0 %v3828, 64
    %v4393 = vpop.permute.xlu0 %4392
    %4394 = vrot.lane.b32.xlu0 %v3829, 64
    %v4395 = vpop.permute.xlu0 %4394
    %4396 = vrot.lane.b32.xlu0 %v3830, 64
    %v4397 = vpop.permute.xlu0 %4396
    %4398 = vrot.lane.b32.xlu0 %v3831, 64
    %v4399 = vpop.permute.xlu0 %4398
    %4400 = vrot.lane.b32.xlu0 %v3832, 64
    %v4401 = vpop.permute.xlu0 %4400
    %4402 = vrot.lane.b32.xlu0 %v3833, 64
    %v4403 = vpop.permute.xlu0 %4402
    %v4422 = vrot.slane %v3825, 1
    %v4423 = vrot.slane %v3841, 1
    %v4424 = vsel %vm123, %v4422, %v4423
    %v4425 = vrot.slane %v3833, 1
    %v4426 = vrot.slane %v3849, 1
    %v4427 = vsel %vm123, %v4425, %v4426
    %4428 = vrot.lane.b32.xlu0 %v3876, 96
    %v4429 = vpop.permute.xlu0 %4428
    %4430 = vrot.lane.b32.xlu0 %v3879, 96
    %v4431 = vpop.permute.xlu0 %4430
    %4432 = vrot.lane.b32.xlu0 %v3882, 96
    %v4433 = vpop.permute.xlu0 %4432
    %4434 = vrot.lane.b32.xlu0 %v3885, 96
    %v4435 = vpop.permute.xlu0 %4434
    %4436 = vrot.lane.b32.xlu0 %v3888, 96
    %v4437 = vpop.permute.xlu0 %4436
    %4438 = vrot.lane.b32.xlu0 %v3891, 96
    %v4439 = vpop.permute.xlu0 %4438
    %4440 = vrot.lane.b32.xlu0 %v4199, 96
    %v4441 = vpop.permute.xlu0 %4440
    %4442 = vrot.lane.b32.xlu0 %v4424, 96
    %v4443 = vpop.permute.xlu0 %4442
    %4444 = vrot.lane.b32.xlu0 %v3894, 96
    %v4445 = vpop.permute.xlu0 %4444
    %4446 = vrot.lane.b32.xlu0 %v3897, 96
    %v4447 = vpop.permute.xlu0 %4446
    %4448 = vrot.lane.b32.xlu0 %v3900, 96
    %v4449 = vpop.permute.xlu0 %4448
    %4450 = vrot.lane.b32.xlu0 %v3903, 96
    %v4451 = vpop.permute.xlu0 %4450
    %4452 = vrot.lane.b32.xlu0 %v3906, 96
    %v4453 = vpop.permute.xlu0 %4452
    %4454 = vrot.lane.b32.xlu0 %v3909, 96
    %v4455 = vpop.permute.xlu0 %4454
    %4456 = vrot.lane.b32.xlu0 %v4202, 96
    %v4457 = vpop.permute.xlu0 %4456
    %4458 = vrot.lane.b32.xlu0 %v4427, 96
    %v4459 = vpop.permute.xlu0 %4458
    %v4476 = vrot.slane %v3825, 2
    %v4477 = vrot.slane %v3841, 2
    %v4478 = vsel %vm220, %v4476, %v4477
    %v4479 = vrot.slane %v3833, 2
    %v4480 = vrot.slane %v3849, 2
    %v4481 = vsel %vm220, %v4479, %v4480
    %v4498 = vrot.slane %v3825, 3
    %v4499 = vrot.slane %v3841, 3
    %v4500 = vsel %vm1490, %v4498, %v4499
    %v4501 = vrot.slane %v3833, 3
    %v4502 = vrot.slane %v3849, 3
    %v4503 = vsel %vm1490, %v4501, %v4502
    %4504 = vrot.lane.b32.xlu0 %v4026, 32
    %v4505 = vpop.permute.xlu0 %4504
    %4506 = vrot.lane.b32.xlu0 %v4029, 32
    %v4507 = vpop.permute.xlu0 %4506
    %4508 = vrot.lane.b32.xlu0 %v4032, 32
    %v4509 = vpop.permute.xlu0 %4508
    %4510 = vrot.lane.b32.xlu0 %v4035, 32
    %v4511 = vpop.permute.xlu0 %4510
    %4512 = vrot.lane.b32.xlu0 %v4038, 32
    %v4513 = vpop.permute.xlu0 %4512
    %4514 = vrot.lane.b32.xlu0 %v4041, 32
    %v4515 = vpop.permute.xlu0 %4514
    %4516 = vrot.lane.b32.xlu0 %v4301, 32
    %v4517 = vpop.permute.xlu0 %4516
    %4518 = vrot.lane.b32.xlu0 %v4500, 32
    %v4519 = vpop.permute.xlu0 %4518
    %4520 = vrot.lane.b32.xlu0 %v4044, 32
    %v4521 = vpop.permute.xlu0 %4520
    %4522 = vrot.lane.b32.xlu0 %v4047, 32
    %v4523 = vpop.permute.xlu0 %4522
    %4524 = vrot.lane.b32.xlu0 %v4050, 32
    %v4525 = vpop.permute.xlu0 %4524
    %4526 = vrot.lane.b32.xlu0 %v4053, 32
    %v4527 = vpop.permute.xlu0 %4526
    %4528 = vrot.lane.b32.xlu0 %v4056, 32
    %v4529 = vpop.permute.xlu0 %4528
    %4530 = vrot.lane.b32.xlu0 %v4059, 32
    %v4531 = vpop.permute.xlu0 %4530
    %4532 = vrot.lane.b32.xlu0 %v4304, 32
    %v4533 = vpop.permute.xlu0 %4532
    %4534 = vrot.lane.b32.xlu0 %v4503, 32
    %v4535 = vpop.permute.xlu0 %4534
    %v4552 = vrot.slane %v3825, 4
    %v4553 = vrot.slane %v3841, 4
    %v4554 = vsel %vm1921, %v4552, %v4553
    %v4555 = vrot.slane %v3833, 4
    %v4556 = vrot.slane %v3849, 4
    %v4557 = vsel %vm1921, %v4555, %v4556
    %4558 = vrot.lane.b32.xlu0 %v4101, 64
    %v4559 = vpop.permute.xlu0 %4558
    %4560 = vrot.lane.b32.xlu0 %v4104, 64
    %v4561 = vpop.permute.xlu0 %4560
    %4562 = vrot.lane.b32.xlu0 %v4107, 64
    %v4563 = vpop.permute.xlu0 %4562
    %4564 = vrot.lane.b32.xlu0 %v4110, 64
    %v4565 = vpop.permute.xlu0 %4564
    %4566 = vrot.lane.b32.xlu0 %v4113, 64
    %v4567 = vpop.permute.xlu0 %4566
    %4568 = vrot.lane.b32.xlu0 %v4116, 64
    %v4569 = vpop.permute.xlu0 %4568
    %4570 = vrot.lane.b32.xlu0 %v4321, 64
    %v4571 = vpop.permute.xlu0 %4570
    %4572 = vrot.lane.b32.xlu0 %v4554, 64
    %v4573 = vpop.permute.xlu0 %4572
    %4574 = vrot.lane.b32.xlu0 %v4119, 64
    %v4575 = vpop.permute.xlu0 %4574
    %4576 = vrot.lane.b32.xlu0 %v4122, 64
    %v4577 = vpop.permute.xlu0 %4576
    %4578 = vrot.lane.b32.xlu0 %v4125, 64
    %v4579 = vpop.permute.xlu0 %4578
    %4580 = vrot.lane.b32.xlu0 %v4128, 64
    %v4581 = vpop.permute.xlu0 %4580
    %4582 = vrot.lane.b32.xlu0 %v4131, 64
    %v4583 = vpop.permute.xlu0 %4582
    %4584 = vrot.lane.b32.xlu0 %v4134, 64
    %v4585 = vpop.permute.xlu0 %4584
    %4586 = vrot.lane.b32.xlu0 %v4324, 64
    %v4587 = vpop.permute.xlu0 %4586
    %4588 = vrot.lane.b32.xlu0 %v4557, 64
    %v4589 = vpop.permute.xlu0 %4588
    %4606 = vrot.lane.b32.xlu0 %v3819, 96
    %v4607 = vpop.permute.xlu0 %4606
    %4608 = vrot.lane.b32.xlu0 %v3820, 96
    %v4609 = vpop.permute.xlu0 %4608
    %4610 = vrot.lane.b32.xlu0 %v3821, 96
    %v4611 = vpop.permute.xlu0 %4610
    %4612 = vrot.lane.b32.xlu0 %v3822, 96
    %v4613 = vpop.permute.xlu0 %4612
    %4614 = vrot.lane.b32.xlu0 %v3823, 96
    %v4615 = vpop.permute.xlu0 %4614
    %4616 = vrot.lane.b32.xlu0 %v3824, 96
    %v4617 = vpop.permute.xlu0 %4616
    %4618 = vrot.lane.b32.xlu0 %v3825, 96
    %v4619 = vpop.permute.xlu0 %4618
    %4620 = vrot.lane.b32.xlu0 %v1627, 96
    %v4621 = vpop.permute.xlu0 %4620
    %4622 = vrot.lane.b32.xlu0 %v3827, 96
    %v4623 = vpop.permute.xlu0 %4622
    %4624 = vrot.lane.b32.xlu0 %v3828, 96
    %v4625 = vpop.permute.xlu0 %4624
    %4626 = vrot.lane.b32.xlu0 %v3829, 96
    %v4627 = vpop.permute.xlu0 %4626
    %4628 = vrot.lane.b32.xlu0 %v3830, 96
    %v4629 = vpop.permute.xlu0 %4628
    %4630 = vrot.lane.b32.xlu0 %v3831, 96
    %v4631 = vpop.permute.xlu0 %4630
    %4632 = vrot.lane.b32.xlu0 %v3832, 96
    %v4633 = vpop.permute.xlu0 %4632
    %4634 = vrot.lane.b32.xlu0 %v3833, 96
    %v4635 = vpop.permute.xlu0 %4634
    %v4651 = vsel %vm2550, %v1627, %v3911
    %v4652 = vsel %vm2550, %v3818, %v3913
    %v4653 = vsel %vm2550, %v3819, %v3915
    %v4654 = vsel %vm2550, %v3820, %v3917
    %v4655 = vsel %vm2550, %v3821, %v3919
    %v4656 = vsel %vm2550, %v3822, %v3921
    %v4657 = vsel %vm2550, %v3823, %v3923
    %v4658 = vsel %vm2550, %v3826, %v3925
    %v4659 = vsel %vm2550, %v3827, %v3927
    %v4660 = vsel %vm2550, %v3828, %v3929
    %v4661 = vsel %vm2550, %v3829, %v3931
    %v4662 = vsel %vm2550, %v3830, %v3933
    %v4663 = vsel %vm2550, %v3831, %v3935
    %v4664 = vsel %vm2578, %v4651, %v3986
    %v4665 = vsel %vm2578, %v4652, %v3988
    %v4666 = vsel %vm2578, %v4653, %v3990
    %v4667 = vsel %vm2578, %v4654, %v3992
    %v4668 = vsel %vm2578, %v4655, %v3994
    %v4669 = vsel %vm2578, %v4656, %v3996
    %v4670 = vsel %vm2578, %v4657, %v3998
    %v4671 = vsel %vm2578, %v4658, %v4000
    %v4672 = vsel %vm2578, %v4659, %v4002
    %v4673 = vsel %vm2578, %v4660, %v4004
    %v4674 = vsel %vm2578, %v4661, %v4006
    %v4675 = vsel %vm2578, %v4662, %v4008
    %v4676 = vsel %vm2578, %v4663, %v4010
    %v4677 = vsel %vm2607, %v4664, %v4061
    %v4678 = vsel %vm2607, %v4665, %v4063
    %v4679 = vsel %vm2607, %v4666, %v4065
    %v4680 = vsel %vm2607, %v4667, %v4067
    %v4681 = vsel %vm2607, %v4668, %v4069
    %v4682 = vsel %vm2607, %v4669, %v4071
    %v4683 = vsel %vm2607, %v4670, %v4073
    %v4684 = vsel %vm2607, %v4671, %v4075
    %v4685 = vsel %vm2607, %v4672, %v4077
    %v4686 = vsel %vm2607, %v4673, %v4079
    %v4687 = vsel %vm2607, %v4674, %v4081
    %v4688 = vsel %vm2607, %v4675, %v4083
    %v4689 = vsel %vm2607, %v4676, %v4085
    %v4690 = vsel %vm2550, %v1924, %v4151
    %v4691 = vsel %vm2550, %v1924, %v4153
    %v4692 = vsel %vm2550, %v4101, %v4155
    %v4693 = vsel %vm2550, %v4104, %v4157
    %v4694 = vsel %vm2550, %v4107, %v4159
    %v4695 = vsel %vm2550, %v4110, %v4161
    %v4696 = vsel %vm2550, %v4113, %v4163
    %v4697 = vsel %vm2550, %v4116, %v4165
    %v4698 = vsel %vm2550, %v1924, %v4167
    %v4699 = vsel %vm2550, %v4119, %v4169
    %v4700 = vsel %vm2550, %v4122, %v4171
    %v4701 = vsel %vm2550, %v4125, %v4173
    %v4702 = vsel %vm2550, %v4128, %v4175
    %v4703 = vsel %vm2550, %v4131, %v4177
    %v4704 = vsel %vm2550, %v4134, %v4179
    %v4705 = vsel %vm2578, %v4690, %v4204
    %v4706 = vsel %vm2578, %v4691, %v4206
    %v4707 = vsel %vm2578, %v4692, %v4208
    %v4708 = vsel %vm2578, %v4693, %v4210
    %v4709 = vsel %vm2578, %v4694, %v4212
    %v4710 = vsel %vm2578, %v4695, %v4214
    %v4711 = vsel %vm2578, %v4696, %v4216
    %v4712 = vsel %vm2578, %v4697, %v4218
    %v4713 = vsel %vm2578, %v4698, %v4220
    %v4714 = vsel %vm2578, %v4699, %v4222
    %v4715 = vsel %vm2578, %v4700, %v4224
    %v4716 = vsel %vm2578, %v4701, %v4226
    %v4717 = vsel %vm2578, %v4702, %v4228
    %v4718 = vsel %vm2578, %v4703, %v4230
    %v4719 = vsel %vm2578, %v4704, %v4232
    %v4720 = vsel %vm2607, %v4705, %v4255
    %v4721 = vsel %vm2607, %v4706, %v4257
    %v4722 = vsel %vm2607, %v4707, %v4259
    %v4723 = vsel %vm2607, %v4708, %v4261
    %v4724 = vsel %vm2607, %v4709, %v4263
    %v4725 = vsel %vm2607, %v4710, %v4265
    %v4726 = vsel %vm2607, %v4711, %v4267
    %v4727 = vsel %vm2607, %v4712, %v4269
    %v4728 = vsel %vm2607, %v4713, %v4271
    %v4729 = vsel %vm2607, %v4714, %v4273
    %v4730 = vsel %vm2607, %v4715, %v4275
    %v4731 = vsel %vm2607, %v4716, %v4277
    %v4732 = vsel %vm2607, %v4717, %v4279
    %v4733 = vsel %vm2607, %v4718, %v4281
    %v4734 = vsel %vm2607, %v4719, %v4283
    %v4735 = vsel %vm2550, %v1845, %v4326
    %v4736 = vsel %vm2550, %v4026, %v4328
    %v4737 = vsel %vm2550, %v4029, %v4330
    %v4738 = vsel %vm2550, %v4032, %v4332
    %v4739 = vsel %vm2550, %v4035, %v4334
    %v4740 = vsel %vm2550, %v4038, %v4336
    %v4741 = vsel %vm2550, %v4041, %v4338
    %v4742 = vsel %vm2550, %v4301, %v4340
    %v4743 = vsel %vm2550, %v4044, %v4342
    %v4744 = vsel %vm2550, %v4047, %v4344
    %v4745 = vsel %vm2550, %v4050, %v4346
    %v4746 = vsel %vm2550, %v4053, %v4348
    %v4747 = vsel %vm2550, %v4056, %v4350
    %v4748 = vsel %vm2550, %v4059, %v4352
    %v4749 = vsel %vm2550, %v4304, %v4354
    %v4750 = vsel %vm2578, %v4735, %v4373
    %v4751 = vsel %vm2578, %v4736, %v4375
    %v4752 = vsel %vm2578, %v4737, %v4377
    %v4753 = vsel %vm2578, %v4738, %v4379
    %v4754 = vsel %vm2578, %v4739, %v4381
    %v4755 = vsel %vm2578, %v4740, %v4383
    %v4756 = vsel %vm2578, %v4741, %v4385
    %v4757 = vsel %vm2578, %v4742, %v4387
    %v4758 = vsel %vm2578, %v4735, %v4389
    %v4759 = vsel %vm2578, %v4743, %v4391
    %v4760 = vsel %vm2578, %v4744, %v4393
    %v4761 = vsel %vm2578, %v4745, %v4395
    %v4762 = vsel %vm2578, %v4746, %v4397
    %v4763 = vsel %vm2578, %v4747, %v4399
    %v4764 = vsel %vm2578, %v4748, %v4401
    %v4765 = vsel %vm2578, %v4749, %v4403
    %v4766 = vsel %vm2607, %v4750, %v4429
    %v4767 = vsel %vm2607, %v4751, %v4431
    %v4768 = vsel %vm2607, %v4752, %v4433
    %v4769 = vsel %vm2607, %v4753, %v4435
    %v4770 = vsel %vm2607, %v4754, %v4437
    %v4771 = vsel %vm2607, %v4755, %v4439
    %v4772 = vsel %vm2607, %v4756, %v4441
    %v4773 = vsel %vm2607, %v4757, %v4443
    %v4774 = vsel %vm2607, %v4758, %v4445
    %v4775 = vsel %vm2607, %v4759, %v4447
    %v4776 = vsel %vm2607, %v4760, %v4449
    %v4777 = vsel %vm2607, %v4761, %v4451
    %v4778 = vsel %vm2607, %v4762, %v4453
    %v4779 = vsel %vm2607, %v4763, %v4455
    %v4780 = vsel %vm2607, %v4764, %v4457
    %v4781 = vsel %vm2607, %v4765, %v4459
    %v4782 = vsel %vm2550, %v3951, %v4505
    %v4783 = vsel %vm2550, %v3954, %v4507
    %v4784 = vsel %vm2550, %v3957, %v4509
    %v4785 = vsel %vm2550, %v3960, %v4511
    %v4786 = vsel %vm2550, %v3963, %v4513
    %v4787 = vsel %vm2550, %v3966, %v4515
    %v4788 = vsel %vm2550, %v4250, %v4517
    %v4789 = vsel %vm2550, %v4478, %v4519
    %v4790 = vsel %vm2550, %v3969, %v4521
    %v4791 = vsel %vm2550, %v3972, %v4523
    %v4792 = vsel %vm2550, %v3975, %v4525
    %v4793 = vsel %vm2550, %v3978, %v4527
    %v4794 = vsel %vm2550, %v3981, %v4529
    %v4795 = vsel %vm2550, %v3984, %v4531
    %v4796 = vsel %vm2550, %v4253, %v4533
    %v4797 = vsel %vm2550, %v4481, %v4535
    %v4798 = vsel %vm2578, %v4782, %v4559
    %v4799 = vsel %vm2578, %v4783, %v4561
    %v4800 = vsel %vm2578, %v4784, %v4563
    %v4801 = vsel %vm2578, %v4785, %v4565
    %v4802 = vsel %vm2578, %v4786, %v4567
    %v4803 = vsel %vm2578, %v4787, %v4569
    %v4804 = vsel %vm2578, %v4788, %v4571
    %v4805 = vsel %vm2578, %v4789, %v4573
    %v4806 = vsel %vm2578, %v4790, %v4575
    %v4807 = vsel %vm2578, %v4791, %v4577
    %v4808 = vsel %vm2578, %v4792, %v4579
    %v4809 = vsel %vm2578, %v4793, %v4581
    %v4810 = vsel %vm2578, %v4794, %v4583
    %v4811 = vsel %vm2578, %v4795, %v4585
    %v4812 = vsel %vm2578, %v4796, %v4587
    %v4813 = vsel %vm2578, %v4797, %v4589
    %v4814 = vsel %vm2607, %v4798, %v4607
    %v4815 = vsel %vm2607, %v4799, %v4609
    %v4816 = vsel %vm2607, %v4800, %v4611
    %v4817 = vsel %vm2607, %v4801, %v4613
    %v4818 = vsel %vm2607, %v4802, %v4615
    %v4819 = vsel %vm2607, %v4803, %v4617
    %v4820 = vsel %vm2607, %v4804, %v4619
    %v4821 = vsel %vm2607, %v4805, %v4621
    %v4822 = vsel %vm2607, %v4806, %v4623
    %v4823 = vsel %vm2607, %v4807, %v4625
    %v4824 = vsel %vm2607, %v4808, %v4627
    %v4825 = vsel %vm2607, %v4809, %v4629
    %v4826 = vsel %vm2607, %v4810, %v4631
    %v4827 = vsel %vm2607, %v4811, %v4633
    %v4828 = vsel %vm2607, %v4812, %v4635
    %v4829 = vsel %vm2607, %v4813, %v4621
    %4830 = vrot.lane.b32.xlu0 %v3878, 32
    %v4831 = vpop.permute.xlu0 %4830
    %4832 = vrot.lane.b32.xlu0 %v3881, 32
    %v4833 = vpop.permute.xlu0 %4832
    %4834 = vrot.lane.b32.xlu0 %v3884, 32
    %v4835 = vpop.permute.xlu0 %4834
    %4836 = vrot.lane.b32.xlu0 %v3887, 32
    %v4837 = vpop.permute.xlu0 %4836
    %4838 = vrot.lane.b32.xlu0 %v3890, 32
    %v4839 = vpop.permute.xlu0 %4838
    %4840 = vrot.lane.b32.xlu0 %v4199, 32
    %v4841 = vpop.permute.xlu0 %4840
    %4842 = vrot.lane.b32.xlu0 %v4198, 32
    %v4843 = vpop.permute.xlu0 %4842
    %4844 = vrot.lane.b32.xlu0 %v4424, 32
    %v4845 = vpop.permute.xlu0 %4844
    %4846 = vrot.lane.b32.xlu0 %v4423, 32
    %v4847 = vpop.permute.xlu0 %4846
    %4848 = vrot.lane.b32.xlu0 %v1688, 32
    %v4849 = vpop.permute.xlu0 %4848
    %4850 = vrot.lane.b32.xlu0 %v3896, 32
    %v4851 = vpop.permute.xlu0 %4850
    %4852 = vrot.lane.b32.xlu0 %v3899, 32
    %v4853 = vpop.permute.xlu0 %4852
    %4854 = vrot.lane.b32.xlu0 %v3902, 32
    %v4855 = vpop.permute.xlu0 %4854
    %4856 = vrot.lane.b32.xlu0 %v3905, 32
    %v4857 = vpop.permute.xlu0 %4856
    %4858 = vrot.lane.b32.xlu0 %v3908, 32
    %v4859 = vpop.permute.xlu0 %4858
    %4860 = vrot.lane.b32.xlu0 %v4202, 32
    %v4861 = vpop.permute.xlu0 %4860
    %4862 = vrot.lane.b32.xlu0 %v4201, 32
    %v4863 = vpop.permute.xlu0 %4862
    %4864 = vrot.lane.b32.xlu0 %v4427, 32
    %v4865 = vpop.permute.xlu0 %4864
    %4866 = vrot.lane.b32.xlu0 %v4426, 32
    %v4867 = vpop.permute.xlu0 %4866
    %4887 = vrot.lane.b32.xlu0 %v3953, 64
    %v4888 = vpop.permute.xlu0 %4887
    %4889 = vrot.lane.b32.xlu0 %v3956, 64
    %v4890 = vpop.permute.xlu0 %4889
    %4891 = vrot.lane.b32.xlu0 %v3959, 64
    %v4892 = vpop.permute.xlu0 %4891
    %4893 = vrot.lane.b32.xlu0 %v3962, 64
    %v4894 = vpop.permute.xlu0 %4893
    %4895 = vrot.lane.b32.xlu0 %v3965, 64
    %v4896 = vpop.permute.xlu0 %4895
    %4897 = vrot.lane.b32.xlu0 %v4250, 64
    %v4898 = vpop.permute.xlu0 %4897
    %4899 = vrot.lane.b32.xlu0 %v4249, 64
    %v4900 = vpop.permute.xlu0 %4899
    %4901 = vrot.lane.b32.xlu0 %v4478, 64
    %v4902 = vpop.permute.xlu0 %4901
    %4903 = vrot.lane.b32.xlu0 %v4477, 64
    %v4904 = vpop.permute.xlu0 %4903
    %4905 = vrot.lane.b32.xlu0 %v1766, 64
    %v4906 = vpop.permute.xlu0 %4905
    %4907 = vrot.lane.b32.xlu0 %v3971, 64
    %v4908 = vpop.permute.xlu0 %4907
    %4909 = vrot.lane.b32.xlu0 %v3974, 64
    %v4910 = vpop.permute.xlu0 %4909
    %4911 = vrot.lane.b32.xlu0 %v3977, 64
    %v4912 = vpop.permute.xlu0 %4911
    %4913 = vrot.lane.b32.xlu0 %v3980, 64
    %v4914 = vpop.permute.xlu0 %4913
    %4915 = vrot.lane.b32.xlu0 %v3983, 64
    %v4916 = vpop.permute.xlu0 %4915
    %4917 = vrot.lane.b32.xlu0 %v4253, 64
    %v4918 = vpop.permute.xlu0 %4917
    %4919 = vrot.lane.b32.xlu0 %v4252, 64
    %v4920 = vpop.permute.xlu0 %4919
    %4921 = vrot.lane.b32.xlu0 %v4481, 64
    %v4922 = vpop.permute.xlu0 %4921
    %4923 = vrot.lane.b32.xlu0 %v4480, 64
    %v4924 = vpop.permute.xlu0 %4923
    %4944 = vrot.lane.b32.xlu0 %v4028, 96
    %v4945 = vpop.permute.xlu0 %4944
    %4946 = vrot.lane.b32.xlu0 %v4031, 96
    %v4947 = vpop.permute.xlu0 %4946
    %4948 = vrot.lane.b32.xlu0 %v4034, 96
    %v4949 = vpop.permute.xlu0 %4948
    %4950 = vrot.lane.b32.xlu0 %v4037, 96
    %v4951 = vpop.permute.xlu0 %4950
    %4952 = vrot.lane.b32.xlu0 %v4040, 96
    %v4953 = vpop.permute.xlu0 %4952
    %4954 = vrot.lane.b32.xlu0 %v4301, 96
    %v4955 = vpop.permute.xlu0 %4954
    %4956 = vrot.lane.b32.xlu0 %v4300, 96
    %v4957 = vpop.permute.xlu0 %4956
    %4958 = vrot.lane.b32.xlu0 %v4500, 96
    %v4959 = vpop.permute.xlu0 %4958
    %4960 = vrot.lane.b32.xlu0 %v4499, 96
    %v4961 = vpop.permute.xlu0 %4960
    %4962 = vrot.lane.b32.xlu0 %v1844, 96
    %v4963 = vpop.permute.xlu0 %4962
    %4964 = vrot.lane.b32.xlu0 %v4046, 96
    %v4965 = vpop.permute.xlu0 %4964
    %4966 = vrot.lane.b32.xlu0 %v4049, 96
    %v4967 = vpop.permute.xlu0 %4966
    %4968 = vrot.lane.b32.xlu0 %v4052, 96
    %v4969 = vpop.permute.xlu0 %4968
    %4970 = vrot.lane.b32.xlu0 %v4055, 96
    %v4971 = vpop.permute.xlu0 %4970
    %4972 = vrot.lane.b32.xlu0 %v4058, 96
    %v4973 = vpop.permute.xlu0 %4972
    %4974 = vrot.lane.b32.xlu0 %v4304, 96
    %v4975 = vpop.permute.xlu0 %4974
    %4976 = vrot.lane.b32.xlu0 %v4303, 96
    %v4977 = vpop.permute.xlu0 %4976
    %4978 = vrot.lane.b32.xlu0 %v4503, 96
    %v4979 = vpop.permute.xlu0 %4978
    %4980 = vrot.lane.b32.xlu0 %v4502, 96
    %v4981 = vpop.permute.xlu0 %4980
    %v5001 = vrot.slane %v3820, 7
    %v5002 = vrot.slane %v3821, 7
    %v5003 = vrot.slane %v3822, 7
    %v5004 = vrot.slane %v3823, 7
    %v5005 = vrot.slane %v3824, 7
    %v5006 = vrot.slane %v3825, 7
    %v5007 = vrot.slane %v3828, 7
    %v5008 = vrot.slane %v3829, 7
    %v5009 = vrot.slane %v3830, 7
    %v5010 = vrot.slane %v3831, 7
    %v5011 = vrot.slane %v3832, 7
    %v5012 = vrot.slane %v3833, 7
    %5026 = vrot.lane.b32.xlu0 %v3836, 32
    %v5027 = vpop.permute.xlu0 %5026
    %5028 = vrot.lane.b32.xlu0 %v3837, 32
    %v5029 = vpop.permute.xlu0 %5028
    %5030 = vrot.lane.b32.xlu0 %v3838, 32
    %v5031 = vpop.permute.xlu0 %5030
    %5032 = vrot.lane.b32.xlu0 %v3839, 32
    %v5033 = vpop.permute.xlu0 %5032
    %5034 = vrot.lane.b32.xlu0 %v3840, 32
    %v5035 = vpop.permute.xlu0 %5034
    %5036 = vrot.lane.b32.xlu0 %v3825, 32
    %v5037 = vpop.permute.xlu0 %5036
    %5038 = vrot.lane.b32.xlu0 %v3841, 32
    %v5039 = vpop.permute.xlu0 %5038
    %5040 = vrot.lane.b32.xlu0 %v1644, 32
    %v5041 = vpop.permute.xlu0 %5040
    %5042 = vrot.lane.b32.xlu0 %v3844, 32
    %v5043 = vpop.permute.xlu0 %5042
    %5044 = vrot.lane.b32.xlu0 %v3845, 32
    %v5045 = vpop.permute.xlu0 %5044
    %5046 = vrot.lane.b32.xlu0 %v3846, 32
    %v5047 = vpop.permute.xlu0 %5046
    %5048 = vrot.lane.b32.xlu0 %v3847, 32
    %v5049 = vpop.permute.xlu0 %5048
    %5050 = vrot.lane.b32.xlu0 %v3848, 32
    %v5051 = vpop.permute.xlu0 %5050
    %5052 = vrot.lane.b32.xlu0 %v3833, 32
    %v5053 = vpop.permute.xlu0 %5052
    %5054 = vrot.lane.b32.xlu0 %v3849, 32
    %v5055 = vpop.permute.xlu0 %5054
    %5071 = vrot.lane.b32.xlu0 %v3881, 64
    %v5072 = vpop.permute.xlu0 %5071
    %5073 = vrot.lane.b32.xlu0 %v3884, 64
    %v5074 = vpop.permute.xlu0 %5073
    %5075 = vrot.lane.b32.xlu0 %v3887, 64
    %v5076 = vpop.permute.xlu0 %5075
    %5077 = vrot.lane.b32.xlu0 %v3890, 64
    %v5078 = vpop.permute.xlu0 %5077
    %5079 = vrot.lane.b32.xlu0 %v4198, 64
    %v5080 = vpop.permute.xlu0 %5079
    %5081 = vrot.lane.b32.xlu0 %v4424, 64
    %v5082 = vpop.permute.xlu0 %5081
    %5083 = vrot.lane.b32.xlu0 %v4423, 64
    %v5084 = vpop.permute.xlu0 %5083
    %5085 = vrot.lane.b32.xlu0 %v1688, 64
    %v5086 = vpop.permute.xlu0 %5085
    %5087 = vrot.lane.b32.xlu0 %v3899, 64
    %v5088 = vpop.permute.xlu0 %5087
    %5089 = vrot.lane.b32.xlu0 %v3902, 64
    %v5090 = vpop.permute.xlu0 %5089
    %5091 = vrot.lane.b32.xlu0 %v3905, 64
    %v5092 = vpop.permute.xlu0 %5091
    %5093 = vrot.lane.b32.xlu0 %v3908, 64
    %v5094 = vpop.permute.xlu0 %5093
    %5095 = vrot.lane.b32.xlu0 %v4201, 64
    %v5096 = vpop.permute.xlu0 %5095
    %5097 = vrot.lane.b32.xlu0 %v4427, 64
    %v5098 = vpop.permute.xlu0 %5097
    %5099 = vrot.lane.b32.xlu0 %v4426, 64
    %v5100 = vpop.permute.xlu0 %5099
    %5116 = vrot.lane.b32.xlu0 %v3956, 96
    %v5117 = vpop.permute.xlu0 %5116
    %5118 = vrot.lane.b32.xlu0 %v3959, 96
    %v5119 = vpop.permute.xlu0 %5118
    %5120 = vrot.lane.b32.xlu0 %v3962, 96
    %v5121 = vpop.permute.xlu0 %5120
    %5122 = vrot.lane.b32.xlu0 %v3965, 96
    %v5123 = vpop.permute.xlu0 %5122
    %5124 = vrot.lane.b32.xlu0 %v4249, 96
    %v5125 = vpop.permute.xlu0 %5124
    %5126 = vrot.lane.b32.xlu0 %v4478, 96
    %v5127 = vpop.permute.xlu0 %5126
    %5128 = vrot.lane.b32.xlu0 %v4477, 96
    %v5129 = vpop.permute.xlu0 %5128
    %5130 = vrot.lane.b32.xlu0 %v1766, 96
    %v5131 = vpop.permute.xlu0 %5130
    %5132 = vrot.lane.b32.xlu0 %v3974, 96
    %v5133 = vpop.permute.xlu0 %5132
    %5134 = vrot.lane.b32.xlu0 %v3977, 96
    %v5135 = vpop.permute.xlu0 %5134
    %5136 = vrot.lane.b32.xlu0 %v3980, 96
    %v5137 = vpop.permute.xlu0 %5136
    %5138 = vrot.lane.b32.xlu0 %v3983, 96
    %v5139 = vpop.permute.xlu0 %5138
    %5140 = vrot.lane.b32.xlu0 %v4252, 96
    %v5141 = vpop.permute.xlu0 %5140
    %5142 = vrot.lane.b32.xlu0 %v4481, 96
    %v5143 = vpop.permute.xlu0 %5142
    %5144 = vrot.lane.b32.xlu0 %v4480, 96
    %v5145 = vpop.permute.xlu0 %5144
    %v5161 = vsel %vm2550, %v3835, %v4831
    %v5162 = vsel %vm2550, %v3836, %v4833
    %v5163 = vsel %vm2550, %v3837, %v4835
    %v5164 = vsel %vm2550, %v3838, %v4837
    %v5165 = vsel %vm2550, %v3839, %v4839
    %v5166 = vsel %vm2550, %v3824, %v4841
    %v5167 = vsel %vm2550, %v3840, %v4843
    %v5168 = vsel %vm2550, %v3825, %v4845
    %v5169 = vsel %vm2550, %v3841, %v4847
    %v5170 = vsel %vm2550, %v1644, %v4849
    %v5171 = vsel %vm2550, %v3843, %v4851
    %v5172 = vsel %vm2550, %v3844, %v4853
    %v5173 = vsel %vm2550, %v3845, %v4855
    %v5174 = vsel %vm2550, %v3846, %v4857
    %v5175 = vsel %vm2550, %v3847, %v4859
    %v5176 = vsel %vm2550, %v3832, %v4861
    %v5177 = vsel %vm2550, %v3848, %v4863
    %v5178 = vsel %vm2550, %v3833, %v4865
    %v5179 = vsel %vm2550, %v3849, %v4867
    %v5180 = vsel %vm2578, %v5161, %v4888
    %v5181 = vsel %vm2578, %v5162, %v4890
    %v5182 = vsel %vm2578, %v5163, %v4892
    %v5183 = vsel %vm2578, %v5164, %v4894
    %v5184 = vsel %vm2578, %v5165, %v4896
    %v5185 = vsel %vm2578, %v5166, %v4898
    %v5186 = vsel %vm2578, %v5167, %v4900
    %v5187 = vsel %vm2578, %v5168, %v4902
    %v5188 = vsel %vm2578, %v5169, %v4904
    %v5189 = vsel %vm2578, %v5170, %v4906
    %v5190 = vsel %vm2578, %v5171, %v4908
    %v5191 = vsel %vm2578, %v5172, %v4910
    %v5192 = vsel %vm2578, %v5173, %v4912
    %v5193 = vsel %vm2578, %v5174, %v4914
    %v5194 = vsel %vm2578, %v5175, %v4916
    %v5195 = vsel %vm2578, %v5176, %v4918
    %v5196 = vsel %vm2578, %v5177, %v4920
    %v5197 = vsel %vm2578, %v5178, %v4922
    %v5198 = vsel %vm2578, %v5179, %v4924
    %v5199 = vsel %vm2607, %v5180, %v4945
    %v5200 = vsel %vm2607, %v5181, %v4947
    %v5201 = vsel %vm2607, %v5182, %v4949
    %v5202 = vsel %vm2607, %v5183, %v4951
    %v5203 = vsel %vm2607, %v5184, %v4953
    %v5204 = vsel %vm2607, %v5185, %v4955
    %v5205 = vsel %vm2607, %v5186, %v4957
    %v5206 = vsel %vm2607, %v5187, %v4959
    %v5207 = vsel %vm2607, %v5188, %v4961
    %v5208 = vsel %vm2607, %v5189, %v4963
    %v5209 = vsel %vm2607, %v5190, %v4965
    %v5210 = vsel %vm2607, %v5191, %v4967
    %v5211 = vsel %vm2607, %v5192, %v4969
    %v5212 = vsel %vm2607, %v5193, %v4971
    %v5213 = vsel %vm2607, %v5194, %v4973
    %v5214 = vsel %vm2607, %v5195, %v4975
    %v5215 = vsel %vm2607, %v5196, %v4977
    %v5216 = vsel %vm2607, %v5197, %v4979
    %v5217 = vsel %vm2607, %v5198, %v4981
    %v5218 = vsel %vm2550, %v5001, %v4157
    %v5219 = vsel %vm2550, %v5001, %v5027
    %v5220 = vsel %vm2550, %v5002, %v4159
    %v5221 = vsel %vm2550, %v5002, %v5029
    %v5222 = vsel %vm2550, %v5003, %v4161
    %v5223 = vsel %vm2550, %v5003, %v5031
    %v5224 = vsel %vm2550, %v5004, %v4163
    %v5225 = vsel %vm2550, %v5004, %v5033
    %v5226 = vsel %vm2550, %v5005, %v4165
    %v5227 = vsel %vm2550, %v5005, %v5035
    %v5228 = vsel %vm2550, %v5006, %v5037
    %v5229 = vsel %vm2550, %v5006, %v5039
    %v5230 = vsel %vm2550, %v2927, %v4151
    %v5231 = vsel %vm2550, %v2927, %v5041
    %v5232 = vsel %vm2550, %v5007, %v4171
    %v5233 = vsel %vm2550, %v5007, %v5043
    %v5234 = vsel %vm2550, %v5008, %v4173
    %v5235 = vsel %vm2550, %v5008, %v5045
    %v5236 = vsel %vm2550, %v5009, %v4175
    %v5237 = vsel %vm2550, %v5009, %v5047
    %v5238 = vsel %vm2550, %v5010, %v4177
    %v5239 = vsel %vm2550, %v5010, %v5049
    %v5240 = vsel %vm2550, %v5011, %v4179
    %v5241 = vsel %vm2550, %v5011, %v5051
    %v5242 = vsel %vm2550, %v5012, %v5053
    %v5243 = vsel %vm2550, %v5012, %v5055
    %v5244 = vsel %vm2578, %v5218, %v4210
    %v5245 = vsel %vm2578, %v5219, %v5072
    %v5246 = vsel %vm2578, %v5220, %v4212
    %v5247 = vsel %vm2578, %v5221, %v5074
    %v5248 = vsel %vm2578, %v5222, %v4214
    %v5249 = vsel %vm2578, %v5223, %v5076
    %v5250 = vsel %vm2578, %v5224, %v4216
    %v5251 = vsel %vm2578, %v5225, %v5078
    %v5252 = vsel %vm2578, %v5226, %v4218
    %v5253 = vsel %vm2578, %v5227, %v5080
    %v5254 = vsel %vm2578, %v5228, %v5082
    %v5255 = vsel %vm2578, %v5229, %v5084
    %v5256 = vsel %vm2578, %v5230, %v4204
    %v5257 = vsel %vm2578, %v5231, %v5086
    %v5258 = vsel %vm2578, %v5232, %v4224
    %v5259 = vsel %vm2578, %v5233, %v5088
    %v5260 = vsel %vm2578, %v5234, %v4226
    %v5261 = vsel %vm2578, %v5235, %v5090
    %v5262 = vsel %vm2578, %v5236, %v4228
    %v5263 = vsel %vm2578, %v5237, %v5092
    %v5264 = vsel %vm2578, %v5238, %v4230
    %v5265 = vsel %vm2578, %v5239, %v5094
    %v5266 = vsel %vm2578, %v5240, %v4232
    %v5267 = vsel %vm2578, %v5241, %v5096
    %v5268 = vsel %vm2578, %v5242, %v5098
    %v5269 = vsel %vm2578, %v5243, %v5100
    %v5270 = vsel %vm2607, %v5244, %v4261
    %v5271 = vsel %vm2607, %v5245, %v5117
    %v5272 = vsel %vm2607, %v5246, %v4263
    %v5273 = vsel %vm2607, %v5247, %v5119
    %v5274 = vsel %vm2607, %v5248, %v4265
    %v5275 = vsel %vm2607, %v5249, %v5121
    %v5276 = vsel %vm2607, %v5250, %v4267
    %v5277 = vsel %vm2607, %v5251, %v5123
    %v5278 = vsel %vm2607, %v5252, %v4269
    %v5279 = vsel %vm2607, %v5253, %v5125
    %v5280 = vsel %vm2607, %v5254, %v5127
    %v5281 = vsel %vm2607, %v5255, %v5129
    %v5282 = vsel %vm2607, %v5256, %v4255
    %v5283 = vsel %vm2607, %v5257, %v5131
    %v5284 = vsel %vm2607, %v5258, %v4275
    %v5285 = vsel %vm2607, %v5259, %v5133
    %v5286 = vsel %vm2607, %v5260, %v4277
    %v5287 = vsel %vm2607, %v5261, %v5135
    %v5288 = vsel %vm2607, %v5262, %v4279
    %v5289 = vsel %vm2607, %v5263, %v5137
    %v5290 = vsel %vm2607, %v5264, %v4281
    %v5291 = vsel %vm2607, %v5265, %v5139
    %v5292 = vsel %vm2607, %v5266, %v4283
    %v5293 = vsel %vm2607, %v5267, %v5141
    %v5294 = vsel %vm2607, %v5268, %v5143
    %v5295 = vsel %vm2607, %v5269, %v5145
    %v5352 = vrot.slane %v4679, 1
    %v5353 = vrot.slane %v5199, 1
    %v5354 = vsel %vm123, %v5352, %v5353
    %v5355 = vrot.slane %v5270, 1
    %v5356 = vrot.slane %v5271, 1
    %v5357 = vsel %vm123, %v5355, %v5356
    %v5358 = vrot.slane %v4032, 1
    %v5359 = vrot.slane %v4031, 1
    %v5360 = vsel %vm123, %v5358, %v5359
    %v5361 = vrot.slane %v4680, 1
    %v5362 = vrot.slane %v5200, 1
    %v5363 = vsel %vm123, %v5361, %v5362
    %v5364 = vrot.slane %v5272, 1
    %v5365 = vrot.slane %v5273, 1
    %v5366 = vsel %vm123, %v5364, %v5365
    %v5367 = vrot.slane %v4035, 1
    %v5368 = vrot.slane %v4034, 1
    %v5369 = vsel %vm123, %v5367, %v5368
    %v5370 = vrot.slane %v4681, 1
    %v5371 = vrot.slane %v5201, 1
    %v5372 = vsel %vm123, %v5370, %v5371
    %v5373 = vrot.slane %v5274, 1
    %v5374 = vrot.slane %v5275, 1
    %v5375 = vsel %vm123, %v5373, %v5374
    %v5376 = vrot.slane %v4038, 1
    %v5377 = vrot.slane %v4037, 1
    %v5378 = vsel %vm123, %v5376, %v5377
    %v5379 = vrot.slane %v4682, 1
    %v5380 = vrot.slane %v5202, 1
    %v5381 = vsel %vm123, %v5379, %v5380
    %v5382 = vrot.slane %v5276, 1
    %v5383 = vrot.slane %v5277, 1
    %v5384 = vsel %vm123, %v5382, %v5383
    %v5385 = vrot.slane %v4041, 1
    %v5386 = vrot.slane %v4040, 1
    %v5387 = vsel %vm123, %v5385, %v5386
    %v5388 = vrot.slane %v4683, 1
    %v5389 = vrot.slane %v5203, 1
    %v5390 = vsel %vm123, %v5388, %v5389
    %v5391 = vrot.slane %v5278, 1
    %v5392 = vrot.slane %v5279, 1
    %v5393 = vsel %vm123, %v5391, %v5392
    %v5394 = vrot.slane %v4301, 1
    %v5395 = vrot.slane %v4300, 1
    %v5396 = vsel %vm123, %v5394, %v5395
    %v5397 = vrot.slane %v5204, 1
    %v5398 = vrot.slane %v5205, 1
    %v5399 = vsel %vm123, %v5397, %v5398
    %v5400 = vrot.slane %v5280, 1
    %v5401 = vrot.slane %v5281, 1
    %v5402 = vsel %vm123, %v5400, %v5401
    %v5403 = vrot.slane %v4500, 1
    %v5404 = vrot.slane %v4499, 1
    %v5405 = vsel %vm123, %v5403, %v5404
    %v5406 = vrot.slane %v5206, 1
    %v5407 = vrot.slane %v5207, 1
    %v5408 = vsel %vm123, %v5406, %v5407
    %v5409 = vrot.slane %v5282, 1
    %v5410 = vrot.slane %v5283, 1
    %v5411 = vsel %vm123, %v5409, %v5410
    %v5412 = vrot.slane %v4677, 1
    %v5413 = vrot.slane %v5208, 1
    %v5414 = vsel %vm123, %v5412, %v5413
    %v5415 = vrot.slane %v4685, 1
    %v5416 = vrot.slane %v5209, 1
    %v5417 = vsel %vm123, %v5415, %v5416
    %v5418 = vrot.slane %v5284, 1
    %v5419 = vrot.slane %v5285, 1
    %v5420 = vsel %vm123, %v5418, %v5419
    %v5421 = vrot.slane %v4050, 1
    %v5422 = vrot.slane %v4049, 1
    %v5423 = vsel %vm123, %v5421, %v5422
    %v5424 = vrot.slane %v4686, 1
    %v5425 = vrot.slane %v5210, 1
    %v5426 = vsel %vm123, %v5424, %v5425
    %v5427 = vrot.slane %v5286, 1
    %v5428 = vrot.slane %v5287, 1
    %v5429 = vsel %vm123, %v5427, %v5428
    %v5430 = vrot.slane %v4053, 1
    %v5431 = vrot.slane %v4052, 1
    %v5432 = vsel %vm123, %v5430, %v5431
    %v5433 = vrot.slane %v4687, 1
    %v5434 = vrot.slane %v5211, 1
    %v5435 = vsel %vm123, %v5433, %v5434
    %v5436 = vrot.slane %v5288, 1
    %v5437 = vrot.slane %v5289, 1
    %v5438 = vsel %vm123, %v5436, %v5437
    %v5439 = vrot.slane %v4056, 1
    %v5440 = vrot.slane %v4055, 1
    %v5441 = vsel %vm123, %v5439, %v5440
    %v5442 = vrot.slane %v4688, 1
    %v5443 = vrot.slane %v5212, 1
    %v5444 = vsel %vm123, %v5442, %v5443
    %v5445 = vrot.slane %v5290, 1
    %v5446 = vrot.slane %v5291, 1
    %v5447 = vsel %vm123, %v5445, %v5446
    %v5448 = vrot.slane %v4059, 1
    %v5449 = vrot.slane %v4058, 1
    %v5450 = vsel %vm123, %v5448, %v5449
    %v5451 = vrot.slane %v4689, 1
    %v5452 = vrot.slane %v5213, 1
    %v5453 = vsel %vm123, %v5451, %v5452
    %v5454 = vrot.slane %v5292, 1
    %v5455 = vrot.slane %v5293, 1
    %v5456 = vsel %vm123, %v5454, %v5455
    %v5457 = vrot.slane %v4304, 1
    %v5458 = vrot.slane %v4303, 1
    %v5459 = vsel %vm123, %v5457, %v5458
    %v5460 = vrot.slane %v5214, 1
    %v5461 = vrot.slane %v5215, 1
    %v5462 = vsel %vm123, %v5460, %v5461
    %v5463 = vrot.slane %v5294, 1
    %v5464 = vrot.slane %v5295, 1
    %v5465 = vsel %vm123, %v5463, %v5464
    %v5466 = vrot.slane %v4503, 1
    %v5467 = vrot.slane %v4502, 1
    %v5468 = vsel %vm123, %v5466, %v5467
    %v5469 = vrot.slane %v5216, 1
    %v5470 = vrot.slane %v5217, 1
    %v5471 = vsel %vm123, %v5469, %v5470
    %v5500 = vld [vmem:[%s5] sm:$0xff]
    %v5501 = vld [vmem:[%s5 + $0x8] sm:$0xff]
    %v5502 = vld [vmem:[%s5 + $0x10] sm:$0xff]
    %v5503 = vld [vmem:[%s5 + $0x18] sm:$0xff]
    %v5504 = vld [vmem:[%s5 + $0x20] sm:$0xff]
    %v5505 = vld [vmem:[%s5 + $0x28] sm:$0xff]
    %v5506 = vld [vmem:[%s5 + $0x30] sm:$0xff]
    %v5507 = vld [vmem:[%s5 + $0x38] sm:$0xff]
    %v5508 = vld [vmem:[%s5 + $0x40] sm:$0xff]
    %v5509 = vld [vmem:[%s5 + $0x48] sm:$0xff]
    %v5510 = vld [vmem:[%s5 + $0x50] sm:$0xff]
    %v5511 = vld [vmem:[%s5 + $0x58] sm:$0xff]
    %v5512 = vld [vmem:[%s5 + $0x60] sm:$0xff]
    %v5513 = vld [vmem:[%s5 + $0x68] sm:$0xff]
    %v5514 = vld [vmem:[%s5 + $0x70] sm:$0xff]
    %v5515 = vld [vmem:[%s5 + $0x78] sm:$0xff]
    %v5516 = vld [vmem:[%s5 + $0x80] sm:$0xff]
    %v5517 = vld [vmem:[%s5 + $0x88] sm:$0xff]
    %v5518 = vld [vmem:[%s5 + $0x90] sm:$0xff]
    %v5519 = vld [vmem:[%s5 + $0x98] sm:$0xff]
    %v5520 = vld [vmem:[%s5 + $0xa0] sm:$0xff]
    %v5521 = vld [vmem:[%s5 + $0xa8] sm:$0xff]
    %v5522 = vld [vmem:[%s5 + $0xb0] sm:$0xff]
    %v5523 = vld [vmem:[%s5 + $0xb8] sm:$0xff]
    %v5524 = vld [vmem:[%s5 + $0xc0] sm:$0xff]
    %v5525 = vld [vmem:[%s5 + $0xc8] sm:$0xff]
    %v5526 = vld [vmem:[%s5 + $0xd0] sm:$0xff]
    %v5527 = vld [vmem:[%s5 + $0xd8] sm:$0xff]
    %v5528 = vld [vmem:[%s5 + $0xe0] sm:$0xff]
    %v5529 = vld [vmem:[%s5 + $0xe8] sm:$0xff]
    %v5530 = vld [vmem:[%s5 + $0xf0] sm:$0xff]
    %v5531 = vld [vmem:[%s5 + $0xf8] sm:$0xff]
    %v5532 = vld [vmem:[%s5 + $0x100] sm:$0xff]
    %v5533 = vld [vmem:[%s5 + $0x108] sm:$0xff]
    %v5534 = vld [vmem:[%s5 + $0x110] sm:$0xff]
    %v5535 = vld [vmem:[%s5 + $0x118] sm:$0xff]
    %v5536 = vld [vmem:[%s5 + $0x120] sm:$0xff]
    %v5537 = vld [vmem:[%s5 + $0x128] sm:$0xff]
    %v5538 = vld [vmem:[%s5 + $0x130] sm:$0xff]
    %v5539 = vld [vmem:[%s5 + $0x138] sm:$0xff]
    %v5540 = vld [vmem:[%s5 + $0x140] sm:$0xff]
    %v5541 = vld [vmem:[%s5 + $0x148] sm:$0xff]
    %v5542 = vld [vmem:[%s5 + $0x150] sm:$0xff]
    %v5543 = vld [vmem:[%s5 + $0x158] sm:$0xff]
    %v5544 = vld [vmem:[%s5 + $0x160] sm:$0xff]
    %v5545 = vld [vmem:[%s5 + $0x168] sm:$0xff]
    %v5546 = vld [vmem:[%s5 + $0x170] sm:$0xff]
    %v5547 = vld [vmem:[%s5 + $0x178] sm:$0xff]
    %v5548 = vld [vmem:[%s5 + $0x180] sm:$0xff]
    %v5549 = vld [vmem:[%s5 + $0x188] sm:$0xff]
    %v5550 = vld [vmem:[%s5 + $0x190] sm:$0xff]
    %v5551 = vld [vmem:[%s5 + $0x198] sm:$0xff]
    %v5552 = vld [vmem:[%s5 + $0x1a0] sm:$0xff]
    %v5553 = vld [vmem:[%s5 + $0x1a8] sm:$0xff]
    %v5554 = vld [vmem:[%s5 + $0x1b0] sm:$0xff]
    %v5555 = vld [vmem:[%s5 + $0x1b8] sm:$0xff]
    %v5556 = vld [vmem:[%s5 + $0x1c0] sm:$0xff]
    %v5557 = vld [vmem:[%s5 + $0x1c8] sm:$0xff]
    %v5558 = vld [vmem:[%s5 + $0x1d0] sm:$0xff]
    %v5559 = vld [vmem:[%s5 + $0x1d8] sm:$0xff]
    %v5560 = vld [vmem:[%s5 + $0x1e0] sm:$0xff]
    %v5561 = vld [vmem:[%s5 + $0x1e8] sm:$0xff]
    %v5562 = vld [vmem:[%s5 + $0x1f0] sm:$0xff]
    %v5563 = vld [vmem:[%s5 + $0x1f8] sm:$0xff]
    %v5564 = vld [vmem:[%s5 + $0x200] sm:$0xff]
    %v5565 = vld [vmem:[%s5 + $0x208] sm:$0xff]
    %v5566 = vld [vmem:[%s5 + $0x210] sm:$0xff]
    %v5567 = vld [vmem:[%s5 + $0x218] sm:$0xff]
    %v5568 = vld [vmem:[%s5 + $0x220] sm:$0xff]
    %v5569 = vld [vmem:[%s5 + $0x228] sm:$0xff]
    %v5570 = vld [vmem:[%s5 + $0x230] sm:$0xff]
    %v5571 = vld [vmem:[%s5 + $0x238] sm:$0xff]
    %v5572 = vld [vmem:[%s5 + $0x240] sm:$0xff]
    %v5573 = vld [vmem:[%s5 + $0x248] sm:$0xff]
    %v5574 = vld [vmem:[%s5 + $0x250] sm:$0xff]
    %v5575 = vld [vmem:[%s5 + $0x258] sm:$0xff]
    %v5576 = vld [vmem:[%s5 + $0x260] sm:$0xff]
    %v5577 = vld [vmem:[%s5 + $0x268] sm:$0xff]
    %v5578 = vld [vmem:[%s5 + $0x270] sm:$0xff]
    %v5579 = vld [vmem:[%s5 + $0x278] sm:$0xff]
    %v5580 = vld [vmem:[%s5 + $0x280] sm:$0xff]
    %v5581 = vld [vmem:[%s5 + $0x288] sm:$0xff]
    %v5582 = vld [vmem:[%s5 + $0x290] sm:$0xff]
    %v5583 = vld [vmem:[%s5 + $0x298] sm:$0xff]
    %v5584 = vld [vmem:[%s5 + $0x2a0] sm:$0xff]
    %v5585 = vld [vmem:[%s5 + $0x2a8] sm:$0xff]
    %v5586 = vld [vmem:[%s5 + $0x2b0] sm:$0xff]
    %v5587 = vld [vmem:[%s5 + $0x2b8] sm:$0xff]
    %v5588 = vld [vmem:[%s5 + $0x2c0] sm:$0xff]
    %v5589 = vld [vmem:[%s5 + $0x2c8] sm:$0xff]
    %v5590 = vld [vmem:[%s5 + $0x2d0] sm:$0xff]
    %v5591 = vld [vmem:[%s5 + $0x2d8] sm:$0xff]
    %v5592 = vld [vmem:[%s5 + $0x2e0] sm:$0xff]
    %v5593 = vld [vmem:[%s5 + $0x2e8] sm:$0xff]
    %v5594 = vld [vmem:[%s5 + $0x2f0] sm:$0xff]
    %v5595 = vld [vmem:[%s5 + $0x2f8] sm:$0xff]
    %v5596 = vld [vmem:[%s5 + $0x300] sm:$0xff]
    %v5597 = vld [vmem:[%s5 + $0x308] sm:$0xff]
    %v5598 = vld [vmem:[%s5 + $0x310] sm:$0xff]
    %v5599 = vld [vmem:[%s5 + $0x318] sm:$0xff]
    %v5600 = vld [vmem:[%s6] sm:$0x1]
    %v5602 = vperm.slane %v5600, 0
    %v5604 = vsel %vm2550, %v5360, 0
    %v5606 = vsel %vm2550, %v5369, 0
    %v5608 = vsel %vm2550, %v5378, 0
    %v5610 = vsel %vm2550, %v5387, 0
    %v5612 = vsel %vm2550, %v5396, 0
    %v5614 = vsel %vm2550, %v5405, 0
    %v5616 = vsel %vm2550, %v3356, 0
    %v5618 = vsel %vm2550, %v5423, 0
    %v5620 = vsel %vm2550, %v5432, 0
    %v5622 = vsel %vm2550, %v5441, 0
    %v5624 = vsel %vm2550, %v5450, 0
    %v5626 = vsel %vm2550, %v5459, 0
    %v5628 = vsel %vm2550, %v5468, 0
    %5630 = vmatpush.msra.mxu0 %v5515
    %5631 = vmatpush.msra.mxu0 %v5514
    %5632 = vmatpush.msra.mxu0 %v5513
    %5633 = vmatpush.msra.mxu0 %v5512
    %5634 = vmatpush.msra.mxu0 %v5511
    %5635 = vmatpush.msra.mxu0 %v5510
    %5636 = vmatpush.msra.mxu0 %v5509
    %5637 = vmatpush.msra.mxu0 %v5508
    %5638 = vmatpush.msra.mxu0 %v5507
    %5639 = vmatpush.msra.mxu0 %v5506
    %5640 = vmatpush.msra.mxu0 %v5505
    %5641 = vmatpush.msra.mxu0 %v5504
    %5642 = vmatpush.msra.mxu0 %v5503
    %5643 = vmatpush.msra.mxu0 %v5502
    %5644 = vmatpush.msra.mxu0 %v5501
    %5645 = vmatpush.msra.mxu0 %v5500
    %5646 = vmatmul.f32.gmra.mxu0 %v4677
    %v5647 = vpop.f32.mrf.mxu0
    %v5648 = vadd.f32 %v5602, %v5647
    %5649 = vmatmul.f32.gmra.mxu0 %v4677
    %v5650 = vpop.f32.mrf.mxu0
    %v5651 = vadd.f32 %v5602, %v5650
    %5652 = vmatmul.f32.gmra.mxu0 %v4678
    %v5653 = vpop.f32.mrf.mxu0
    %v5654 = vadd.f32 %v5602, %v5653
    %5655 = vmatmul.f32.gmra.mxu0 %v4679
    %v5656 = vpop.f32.mrf.mxu0
    %v5657 = vadd.f32 %v5602, %v5656
    %5658 = vmatmul.f32.gmra.mxu0 %v4680
    %v5659 = vpop.f32.mrf.mxu0
    %v5660 = vadd.f32 %v5602, %v5659
    %5661 = vmatmul.f32.gmra.mxu0 %v4681
    %v5662 = vpop.f32.mrf.mxu0
    %v5663 = vadd.f32 %v5602, %v5662
    %5664 = vmatmul.f32.gmra.mxu0 %v4682
    %v5665 = vpop.f32.mrf.mxu0
    %v5666 = vadd.f32 %v5602, %v5665
    %5667 = vmatmul.f32.gmra.mxu0 %v4683
    %v5668 = vpop.f32.mrf.mxu0
    %v5669 = vadd.f32 %v5602, %v5668
    %5670 = vmatmul.f32.gmra.mxu0 %v4677
    %v5671 = vpop.f32.mrf.mxu0
    %v5672 = vadd.f32 %v5602, %v5671
    %5673 = vmatmul.f32.gmra.mxu0 %v4677
    %v5674 = vpop.f32.mrf.mxu0
    %v5675 = vadd.f32 %v5602, %v5674
    %5676 = vmatmul.f32.gmra.mxu0 %v4684
    %v5677 = vpop.f32.mrf.mxu0
    %v5678 = vadd.f32 %v5602, %v5677
    %5679 = vmatmul.f32.gmra.mxu0 %v4685
    %v5680 = vpop.f32.mrf.mxu0
    %v5681 = vadd.f32 %v5602, %v5680
    %5682 = vmatmul.f32.gmra.mxu0 %v4686
    %v5683 = vpop.f32.mrf.mxu0
    %v5684 = vadd.f32 %v5602, %v5683
    %5685 = vmatmul.f32.gmra.mxu0 %v4687
    %v5686 = vpop.f32.mrf.mxu0
    %v5687 = vadd.f32 %v5602, %v5686
    %5688 = vmatmul.f32.gmra.mxu0 %v4688
    %v5689 = vpop.f32.mrf.mxu0
    %v5690 = vadd.f32 %v5602, %v5689
    %5691 = vmatmul.f32.gmra.mxu0 %v4689
    %v5692 = vpop.f32.mrf.mxu0
    %v5693 = vadd.f32 %v5602, %v5692
    %5694 = vdwg.mxu0
    %5695 = vmatpush.msra.mxu0 %v5531
    %5696 = vmatpush.msra.mxu0 %v5530
    %5697 = vmatpush.msra.mxu0 %v5529
    %5698 = vmatpush.msra.mxu0 %v5528
    %5699 = vmatpush.msra.mxu0 %v5527
    %5700 = vmatpush.msra.mxu0 %v5526
    %5701 = vmatpush.msra.mxu0 %v5525
    %5702 = vmatpush.msra.mxu0 %v5524
    %5703 = vmatpush.msra.mxu0 %v5523
    %5704 = vmatpush.msra.mxu0 %v5522
    %5705 = vmatpush.msra.mxu0 %v5521
    %5706 = vmatpush.msra.mxu0 %v5520
    %5707 = vmatpush.msra.mxu0 %v5519
    %5708 = vmatpush.msra.mxu0 %v5518
    %5709 = vmatpush.msra.mxu0 %v5517
    %5710 = vmatpush.msra.mxu0 %v5516
    %5711 = vmatmul.f32.gmra.mxu0 %v4720
    %v5712 = vpop.f32.mrf.mxu0
    %v5713 = vadd.f32 %v5648, %v5712
    %5714 = vmatmul.f32.gmra.mxu0 %v4721
    %v5715 = vpop.f32.mrf.mxu0
    %v5716 = vadd.f32 %v5651, %v5715
    %5717 = vmatmul.f32.gmra.mxu0 %v4722
    %v5718 = vpop.f32.mrf.mxu0
    %v5719 = vadd.f32 %v5654, %v5718
    %5720 = vmatmul.f32.gmra.mxu0 %v4723
    %v5721 = vpop.f32.mrf.mxu0
    %v5722 = vadd.f32 %v5657, %v5721
    %5723 = vmatmul.f32.gmra.mxu0 %v4724
    %v5724 = vpop.f32.mrf.mxu0
    %v5725 = vadd.f32 %v5660, %v5724
    %5726 = vmatmul.f32.gmra.mxu0 %v4725
    %v5727 = vpop.f32.mrf.mxu0
    %v5728 = vadd.f32 %v5663, %v5727
    %5729 = vmatmul.f32.gmra.mxu0 %v4726
    %v5730 = vpop.f32.mrf.mxu0
    %v5731 = vadd.f32 %v5666, %v5730
    %5732 = vmatmul.f32.gmra.mxu0 %v4727
    %v5733 = vpop.f32.mrf.mxu0
    %v5734 = vadd.f32 %v5669, %v5733
    %5735 = vmatmul.f32.gmra.mxu0 %v4720
    %v5736 = vpop.f32.mrf.mxu0
    %v5737 = vadd.f32 %v5672, %v5736
    %5738 = vmatmul.f32.gmra.mxu0 %v4728
    %v5739 = vpop.f32.mrf.mxu0
    %v5740 = vadd.f32 %v5675, %v5739
    %5741 = vmatmul.f32.gmra.mxu0 %v4729
    %v5742 = vpop.f32.mrf.mxu0
    %v5743 = vadd.f32 %v5678, %v5742
    %5744 = vmatmul.f32.gmra.mxu0 %v4730
    %v5745 = vpop.f32.mrf.mxu0
    %v5746 = vadd.f32 %v5681, %v5745
    %5747 = vmatmul.f32.gmra.mxu0 %v4731
    %v5748 = vpop.f32.mrf.mxu0
    %v5749 = vadd.f32 %v5684, %v5748
    %5750 = vmatmul.f32.gmra.mxu0 %v4732
    %v5751 = vpop.f32.mrf.mxu0
    %v5752 = vadd.f32 %v5687, %v5751
    %5753 = vmatmul.f32.gmra.mxu0 %v4733
    %v5754 = vpop.f32.mrf.mxu0
    %v5755 = vadd.f32 %v5690, %v5754
    %5756 = vmatmul.f32.gmra.mxu0 %v4734
    %v5757 = vpop.f32.mrf.mxu0
    %v5758 = vadd.f32 %v5693, %v5757
    %5759 = vdwg.mxu0
    %5760 = vmatpush.msra.mxu0 %v5547
    %5761 = vmatpush.msra.mxu0 %v5546
    %5762 = vmatpush.msra.mxu0 %v5545
    %5763 = vmatpush.msra.mxu0 %v5544
    %5764 = vmatpush.msra.mxu0 %v5543
    %5765 = vmatpush.msra.mxu0 %v5542
    %5766 = vmatpush.msra.mxu0 %v5541
    %5767 = vmatpush.msra.mxu0 %v5540
    %5768 = vmatpush.msra.mxu0 %v5539
    %5769 = vmatpush.msra.mxu0 %v5538
    %5770 = vmatpush.msra.mxu0 %v5537
    %5771 = vmatpush.msra.mxu0 %v5536
    %5772 = vmatpush.msra.mxu0 %v5535
    %5773 = vmatpush.msra.mxu0 %v5534
    %5774 = vmatpush.msra.mxu0 %v5533
    %5775 = vmatpush.msra.mxu0 %v5532
    %5776 = vmatmul.f32.gmra.mxu0 %v4766
    %v5777 = vpop.f32.mrf.mxu0
    %v5778 = vadd.f32 %v5713, %v5777
    %5779 = vmatmul.f32.gmra.mxu0 %v4767
    %v5780 = vpop.f32.mrf.mxu0
    %v5781 = vadd.f32 %v5716, %v5780
    %5782 = vmatmul.f32.gmra.mxu0 %v4768
    %v5783 = vpop.f32.mrf.mxu0
    %v5784 = vadd.f32 %v5719, %v5783
    %5785 = vmatmul.f32.gmra.mxu0 %v4769
    %v5786 = vpop.f32.mrf.mxu0
    %v5787 = vadd.f32 %v5722, %v5786
    %5788 = vmatmul.f32.gmra.mxu0 %v4770
    %v5789 = vpop.f32.mrf.mxu0
    %v5790 = vadd.f32 %v5725, %v5789
    %5791 = vmatmul.f32.gmra.mxu0 %v4771
    %v5792 = vpop.f32.mrf.mxu0
    %v5793 = vadd.f32 %v5728, %v5792
    %5794 = vmatmul.f32.gmra.mxu0 %v4772
    %v5795 = vpop.f32.mrf.mxu0
    %v5796 = vadd.f32 %v5731, %v5795
    %5797 = vmatmul.f32.gmra.mxu0 %v4773
    %v5798 = vpop.f32.mrf.mxu0
    %v5799 = vadd.f32 %v5734, %v5798
    %5800 = vmatmul.f32.gmra.mxu0 %v4774
    %v5801 = vpop.f32.mrf.mxu0
    %v5802 = vadd.f32 %v5737, %v5801
    %5803 = vmatmul.f32.gmra.mxu0 %v4775
    %v5804 = vpop.f32.mrf.mxu0
    %v5805 = vadd.f32 %v5740, %v5804
    %5806 = vmatmul.f32.gmra.mxu0 %v4776
    %v5807 = vpop.f32.mrf.mxu0
    %v5808 = vadd.f32 %v5743, %v5807
    %5809 = vmatmul.f32.gmra.mxu0 %v4777
    %v5810 = vpop.f32.mrf.mxu0
    %v5811 = vadd.f32 %v5746, %v5810
    %5812 = vmatmul.f32.gmra.mxu0 %v4778
    %v5813 = vpop.f32.mrf.mxu0
    %v5814 = vadd.f32 %v5749, %v5813
    %5815 = vmatmul.f32.gmra.mxu0 %v4779
    %v5816 = vpop.f32.mrf.mxu0
    %v5817 = vadd.f32 %v5752, %v5816
    %5818 = vmatmul.f32.gmra.mxu0 %v4780
    %v5819 = vpop.f32.mrf.mxu0
    %v5820 = vadd.f32 %v5755, %v5819
    %5821 = vmatmul.f32.gmra.mxu0 %v4781
    %v5822 = vpop.f32.mrf.mxu0
    %v5823 = vadd.f32 %v5758, %v5822
    %5824 = vdwg.mxu0
    %5825 = vmatpush.msra.mxu0 %v5563
    %5826 = vmatpush.msra.mxu0 %v5562
    %5827 = vmatpush.msra.mxu0 %v5561
    %5828 = vmatpush.msra.mxu0 %v5560
    %5829 = vmatpush.msra.mxu0 %v5559
    %5830 = vmatpush.msra.mxu0 %v5558
    %5831 = vmatpush.msra.mxu0 %v5557
    %5832 = vmatpush.msra.mxu0 %v5556
    %5833 = vmatpush.msra.mxu0 %v5555
    %5834 = vmatpush.msra.mxu0 %v5554
    %5835 = vmatpush.msra.mxu0 %v5553
    %5836 = vmatpush.msra.mxu0 %v5552
    %5837 = vmatpush.msra.mxu0 %v5551
    %5838 = vmatpush.msra.mxu0 %v5550
    %5839 = vmatpush.msra.mxu0 %v5549
    %5840 = vmatpush.msra.mxu0 %v5548
    %5841 = vmatmul.f32.gmra.mxu0 %v4814
    %v5842 = vpop.f32.mrf.mxu0
    %v5843 = vadd.f32 %v5778, %v5842
    %5844 = vmatmul.f32.gmra.mxu0 %v4815
    %v5845 = vpop.f32.mrf.mxu0
    %v5846 = vadd.f32 %v5781, %v5845
    %5847 = vmatmul.f32.gmra.mxu0 %v4816
    %v5848 = vpop.f32.mrf.mxu0
    %v5849 = vadd.f32 %v5784, %v5848
    %5850 = vmatmul.f32.gmra.mxu0 %v4817
    %v5851 = vpop.f32.mrf.mxu0
    %v5852 = vadd.f32 %v5787, %v5851
    %5853 = vmatmul.f32.gmra.mxu0 %v4818
    %v5854 = vpop.f32.mrf.mxu0
    %v5855 = vadd.f32 %v5790, %v5854
    %5856 = vmatmul.f32.gmra.mxu0 %v4819
    %v5857 = vpop.f32.mrf.mxu0
    %v5858 = vadd.f32 %v5793, %v5857
    %5859 = vmatmul.f32.gmra.mxu0 %v4820
    %v5860 = vpop.f32.mrf.mxu0
    %v5861 = vadd.f32 %v5796, %v5860
    %5862 = vmatmul.f32.gmra.mxu0 %v4821
    %v5863 = vpop.f32.mrf.mxu0
    %v5864 = vadd.f32 %v5799, %v5863
    %5865 = vmatmul.f32.gmra.mxu0 %v4822
    %v5866 = vpop.f32.mrf.mxu0
    %v5867 = vadd.f32 %v5802, %v5866
    %5868 = vmatmul.f32.gmra.mxu0 %v4823
    %v5869 = vpop.f32.mrf.mxu0
    %v5870 = vadd.f32 %v5805, %v5869
    %5871 = vmatmul.f32.gmra.mxu0 %v4824
    %v5872 = vpop.f32.mrf.mxu0
    %v5873 = vadd.f32 %v5808, %v5872
    %5874 = vmatmul.f32.gmra.mxu0 %v4825
    %v5875 = vpop.f32.mrf.mxu0
    %v5876 = vadd.f32 %v5811, %v5875
    %5877 = vmatmul.f32.gmra.mxu0 %v4826
    %v5878 = vpop.f32.mrf.mxu0
    %v5879 = vadd.f32 %v5814, %v5878
    %5880 = vmatmul.f32.gmra.mxu0 %v4827
    %v5881 = vpop.f32.mrf.mxu0
    %v5882 = vadd.f32 %v5817, %v5881
    %5883 = vmatmul.f32.gmra.mxu0 %v4828
    %v5884 = vpop.f32.mrf.mxu0
    %v5885 = vadd.f32 %v5820, %v5884
    %5886 = vmatmul.f32.gmra.mxu0 %v4829
    %v5887 = vpop.f32.mrf.mxu0
    %v5888 = vadd.f32 %v5823, %v5887
    %5889 = vdwg.mxu0
    %5890 = vmatpush.msra.mxu0 %v5579
    %5891 = vmatpush.msra.mxu0 %v5578
    %5892 = vmatpush.msra.mxu0 %v5577
    %5893 = vmatpush.msra.mxu0 %v5576
    %5894 = vmatpush.msra.mxu0 %v5575
    %5895 = vmatpush.msra.mxu0 %v5574
    %5896 = vmatpush.msra.mxu0 %v5573
    %5897 = vmatpush.msra.mxu0 %v5572
    %5898 = vmatpush.msra.mxu0 %v5571
    %5899 = vmatpush.msra.mxu0 %v5570
    %5900 = vmatpush.msra.mxu0 %v5569
    %5901 = vmatpush.msra.mxu0 %v5568
    %5902 = vmatpush.msra.mxu0 %v5567
    %5903 = vmatpush.msra.mxu0 %v5566
    %5904 = vmatpush.msra.mxu0 %v5565
    %5905 = vmatpush.msra.mxu0 %v5564
    %5906 = vmatmul.f32.gmra.mxu0 %v5354
    %v5907 = vpop.f32.mrf.mxu0
    %v5908 = vadd.f32 %v5843, %v5907
    %5909 = vmatmul.f32.gmra.mxu0 %v5363
    %v5910 = vpop.f32.mrf.mxu0
    %v5911 = vadd.f32 %v5846, %v5910
    %5912 = vmatmul.f32.gmra.mxu0 %v5372
    %v5913 = vpop.f32.mrf.mxu0
    %v5914 = vadd.f32 %v5849, %v5913
    %5915 = vmatmul.f32.gmra.mxu0 %v5381
    %v5916 = vpop.f32.mrf.mxu0
    %v5917 = vadd.f32 %v5852, %v5916
    %5918 = vmatmul.f32.gmra.mxu0 %v5390
    %v5919 = vpop.f32.mrf.mxu0
    %v5920 = vadd.f32 %v5855, %v5919
    %5921 = vmatmul.f32.gmra.mxu0 %v5399
    %v5922 = vpop.f32.mrf.mxu0
    %v5923 = vadd.f32 %v5858, %v5922
    %5924 = vmatmul.f32.gmra.mxu0 %v5408
    %v5925 = vpop.f32.mrf.mxu0
    %v5926 = vadd.f32 %v5861, %v5925
    %5927 = vmatmul.f32.gmra.mxu0 %v5414
    %v5928 = vpop.f32.mrf.mxu0
    %v5929 = vadd.f32 %v5864, %v5928
    %5930 = vmatmul.f32.gmra.mxu0 %v5417
    %v5931 = vpop.f32.mrf.mxu0
    %v5932 = vadd.f32 %v5867, %v5931
    %5933 = vmatmul.f32.gmra.mxu0 %v5426
    %v5934 = vpop.f32.mrf.mxu0
    %v5935 = vadd.f32 %v5870, %v5934
    %5936 = vmatmul.f32.gmra.mxu0 %v5435
    %v5937 = vpop.f32.mrf.mxu0
    %v5938 = vadd.f32 %v5873, %v5937
    %5939 = vmatmul.f32.gmra.mxu0 %v5444
    %v5940 = vpop.f32.mrf.mxu0
    %v5941 = vadd.f32 %v5876, %v5940
    %5942 = vmatmul.f32.gmra.mxu0 %v5453
    %v5943 = vpop.f32.mrf.mxu0
    %v5944 = vadd.f32 %v5879, %v5943
    %5945 = vmatmul.f32.gmra.mxu0 %v5462
    %v5946 = vpop.f32.mrf.mxu0
    %v5947 = vadd.f32 %v5882, %v5946
    %5948 = vmatmul.f32.gmra.mxu0 %v5471
    %v5949 = vpop.f32.mrf.mxu0
    %v5950 = vadd.f32 %v5885, %v5949
    %5951 = vmatmul.f32.gmra.mxu0 %v5414
    %v5952 = vpop.f32.mrf.mxu0
    %v5953 = vadd.f32 %v5888, %v5952
    %5954 = vdwg.mxu0
    %5955 = vmatpush.msra.mxu0 %v5595
    %5956 = vmatpush.msra.mxu0 %v5594
    %5957 = vmatpush.msra.mxu0 %v5593
    %5958 = vmatpush.msra.mxu0 %v5592
    %5959 = vmatpush.msra.mxu0 %v5591
    %5960 = vmatpush.msra.mxu0 %v5590
    %5961 = vmatpush.msra.mxu0 %v5589
    %5962 = vmatpush.msra.mxu0 %v5588
    %5963 = vmatpush.msra.mxu0 %v5587
    %5964 = vmatpush.msra.mxu0 %v5586
    %5965 = vmatpush.msra.mxu0 %v5585
    %5966 = vmatpush.msra.mxu0 %v5584
    %5967 = vmatpush.msra.mxu0 %v5583
    %5968 = vmatpush.msra.mxu0 %v5582
    %5969 = vmatpush.msra.mxu0 %v5581
    %5970 = vmatpush.msra.mxu0 %v5580
    %5971 = vmatmul.f32.gmra.mxu0 %v5357
    %v5972 = vpop.f32.mrf.mxu0
    %v5973 = vadd.f32 %v5908, %v5972
    %5974 = vmatmul.f32.gmra.mxu0 %v5366
    %v5975 = vpop.f32.mrf.mxu0
    %v5976 = vadd.f32 %v5911, %v5975
    %5977 = vmatmul.f32.gmra.mxu0 %v5375
    %v5978 = vpop.f32.mrf.mxu0
    %v5979 = vadd.f32 %v5914, %v5978
    %5980 = vmatmul.f32.gmra.mxu0 %v5384
    %v5981 = vpop.f32.mrf.mxu0
    %v5982 = vadd.f32 %v5917, %v5981
    %5983 = vmatmul.f32.gmra.mxu0 %v5393
    %v5984 = vpop.f32.mrf.mxu0
    %v5985 = vadd.f32 %v5920, %v5984
    %5986 = vmatmul.f32.gmra.mxu0 %v5402
    %v5987 = vpop.f32.mrf.mxu0
    %v5988 = vadd.f32 %v5923, %v5987
    %5989 = vmatmul.f32.gmra.mxu0 %v5411
    %v5990 = vpop.f32.mrf.mxu0
    %v5991 = vadd.f32 %v5926, %v5990
    %5992 = vmatmul.f32.gmra.mxu0 %v5411
    %v5993 = vpop.f32.mrf.mxu0
    %v5994 = vadd.f32 %v5929, %v5993
    %5995 = vmatmul.f32.gmra.mxu0 %v5420
    %v5996 = vpop.f32.mrf.mxu0
    %v5997 = vadd.f32 %v5932, %v5996
    %5998 = vmatmul.f32.gmra.mxu0 %v5429
    %v5999 = vpop.f32.mrf.mxu0
    %v6000 = vadd.f32 %v5935, %v5999
    %6001 = vmatmul.f32.gmra.mxu0 %v5438
    %v6002 = vpop.f32.mrf.mxu0
    %v6003 = vadd.f32 %v5938, %v6002
    %6004 = vmatmul.f32.gmra.mxu0 %v5447
    %v6005 = vpop.f32.mrf.mxu0
    %v6006 = vadd.f32 %v5941, %v6005
    %6007 = vmatmul.f32.gmra.mxu0 %v5456
    %v6008 = vpop.f32.mrf.mxu0
    %v6009 = vadd.f32 %v5944, %v6008
    %6010 = vmatmul.f32.gmra.mxu0 %v5465
    %v6011 = vpop.f32.mrf.mxu0
    %v6012 = vadd.f32 %v5947, %v6011
    %6013 = vmatmul.f32.gmra.mxu0 %v5411
    %v6014 = vpop.f32.mrf.mxu0
    %v6015 = vadd.f32 %v5950, %v6014
    %6016 = vmatmul.f32.gmra.mxu0 %v5411
    %v6017 = vpop.f32.mrf.mxu0
    %v6018 = vadd.f32 %v5953, %v6017
    %6019 = vdwg.mxu0
    %6020 = vmatpush.msra.mxu0 0.0
    %6021 = vmatpush.msra.mxu0 0.0
    %6022 = vmatpush.msra.mxu0 0.0
    %6023 = vmatpush.msra.mxu0 0.0
    %6024 = vmatpush.msra.mxu0 0.0
    %6025 = vmatpush.msra.mxu0 0.0
    %6026 = vmatpush.msra.mxu0 0.0
    %6027 = vmatpush.msra.mxu0 0.0
    %6028 = vmatpush.msra.mxu0 0.0
    %6029 = vmatpush.msra.mxu0 0.0
    %6030 = vmatpush.msra.mxu0 0.0
    %6031 = vmatpush.msra.mxu0 0.0
    %6032 = vmatpush.msra.mxu0 %v5599
    %6033 = vmatpush.msra.mxu0 %v5598
    %6034 = vmatpush.msra.mxu0 %v5597
    %6035 = vmatpush.msra.mxu0 %v5596
    %6036 = vmatmul.f32.gmra.mxu0 %v5604
    %v6037 = vpop.f32.mrf.mxu0
    %v6038 = vadd.f32 %v5973, %v6037
    %6039 = vmatmul.f32.gmra.mxu0 %v5606
    %v6040 = vpop.f32.mrf.mxu0
    %v6041 = vadd.f32 %v5976, %v6040
    %6042 = vmatmul.f32.gmra.mxu0 %v5608
    %v6043 = vpop.f32.mrf.mxu0
    %v6044 = vadd.f32 %v5979, %v6043
    %6045 = vmatmul.f32.gmra.mxu0 %v5610
    %v6046 = vpop.f32.mrf.mxu0
    %v6047 = vadd.f32 %v5982, %v6046
    %6048 = vmatmul.f32.gmra.mxu0 %v5612
    %v6049 = vpop.f32.mrf.mxu0
    %v6050 = vadd.f32 %v5985, %v6049
    %6051 = vmatmul.f32.gmra.mxu0 %v5614
    %v6052 = vpop.f32.mrf.mxu0
    %v6053 = vadd.f32 %v5988, %v6052
    %6054 = vmatmul.f32.gmra.mxu0 %v5616
    %v6055 = vpop.f32.mrf.mxu0
    %v6056 = vadd.f32 %v5991, %v6055
    %6057 = vmatmul.f32.gmra.mxu0 %v5616
    %v6058 = vpop.f32.mrf.mxu0
    %v6059 = vadd.f32 %v5994, %v6058
    %6060 = vmatmul.f32.gmra.mxu0 %v5618
    %v6061 = vpop.f32.mrf.mxu0
    %v6062 = vadd.f32 %v5997, %v6061
    %6063 = vmatmul.f32.gmra.mxu0 %v5620
    %v6064 = vpop.f32.mrf.mxu0
    %v6065 = vadd.f32 %v6000, %v6064
    %6066 = vmatmul.f32.gmra.mxu0 %v5622
    %v6067 = vpop.f32.mrf.mxu0
    %v6068 = vadd.f32 %v6003, %v6067
    %6069 = vmatmul.f32.gmra.mxu0 %v5624
    %v6070 = vpop.f32.mrf.mxu0
    %v6071 = vadd.f32 %v6006, %v6070
    %6072 = vmatmul.f32.gmra.mxu0 %v5626
    %v6073 = vpop.f32.mrf.mxu0
    %v6074 = vadd.f32 %v6009, %v6073
    %6075 = vmatmul.f32.gmra.mxu0 %v5628
    %v6076 = vpop.f32.mrf.mxu0
    %v6077 = vadd.f32 %v6012, %v6076
    %6078 = vmatmul.f32.gmra.mxu0 %v5616
    %v6079 = vpop.f32.mrf.mxu0
    %v6080 = vadd.f32 %v6015, %v6079
    %6081 = vmatmul.f32.gmra.mxu0 %v5616
    %v6082 = vpop.f32.mrf.mxu0
    %v6083 = vadd.f32 %v6018, %v6082
    %6084 = vdwg.mxu0
    %v6085 = vmax.f32 %v6038, 0.0
    %v6086 = vmax.f32 %v6041, 0.0
    %v6087 = vmax.f32 %v6044, 0.0
    %v6088 = vmax.f32 %v6047, 0.0
    %v6089 = vmax.f32 %v6050, 0.0
    %v6090 = vmax.f32 %v6053, 0.0
    %v6091 = vmax.f32 %v6056, 0.0
    %v6092 = vmax.f32 %v6059, 0.0
    %v6093 = vmax.f32 %v6062, 0.0
    %v6094 = vmax.f32 %v6065, 0.0
    %v6095 = vmax.f32 %v6068, 0.0
    %v6096 = vmax.f32 %v6071, 0.0
    %v6097 = vmax.f32 %v6074, 0.0
    %v6098 = vmax.f32 %v6077, 0.0
    %v6099 = vmax.f32 %v6080, 0.0
    %v6100 = vmax.f32 %v6083, 0.0
    %v6101 = vld [vmem:[%s7] sm:$0xff]
    %v6102 = vld [vmem:[%s7 + $0x8] sm:$0xff]
    %v6103 = vld [vmem:[%s7 + $0x10] sm:$0xff]
    %v6104 = vld [vmem:[%s7 + $0x18] sm:$0xff]
    %v6105 = vld [vmem:[%s7 + $0x20] sm:$0xff]
    %v6106 = vld [vmem:[%s7 + $0x28] sm:$0xff]
    %v6107 = vld [vmem:[%s7 + $0x30] sm:$0xff]
    %v6108 = vld [vmem:[%s7 + $0x38] sm:$0xff]
    %v6109 = vld [vmem:[%s8] sm:$0x1]
    %v6111 = vperm.slane %v6109, 0
    %v6114 = vsel %vm2578, %v6085, 0
    %v6117 = vsel %vm2578, %v6086, 0
    %v6120 = vsel %vm2578, %v6087, 0
    %v6123 = vsel %vm2578, %v6088, 0
    %v6126 = vsel %vm2578, %v6089, 0
    %v6129 = vsel %vm2578, %v6090, 0
    %v6132 = vsel %vm2578, %v6091, 0
    %v6135 = vsel %vm2578, %v6092, 0
    %v6138 = vsel %vm2578, %v6093, 0
    %v6141 = vsel %vm2578, %v6094, 0
    %v6144 = vsel %vm2578, %v6095, 0
    %v6147 = vsel %vm2578, %v6096, 0
    %v6150 = vsel %vm2578, %v6097, 0
    %v6153 = vsel %vm2578, %v6098, 0
    %v6156 = vsel %vm2578, %v6099, 0
    %v6159 = vsel %vm2578, %v6100, 0
    %6161 = vmatpush.msra.mxu0 0.0
    %6162 = vmatpush.msra.mxu0 0.0
    %6163 = vmatpush.msra.mxu0 0.0
    %6164 = vmatpush.msra.mxu0 0.0
    %6165 = vmatpush.msra.mxu0 0.0
    %6166 = vmatpush.msra.mxu0 0.0
    %6167 = vmatpush.msra.mxu0 0.0
    %6168 = vmatpush.msra.mxu0 0.0
    %6169 = vmatpush.msra.mxu0 %v6108
    %6170 = vmatpush.msra.mxu0 %v6107
    %6171 = vmatpush.msra.mxu0 %v6106
    %6172 = vmatpush.msra.mxu0 %v6105
    %6173 = vmatpush.msra.mxu0 %v6104
    %6174 = vmatpush.msra.mxu0 %v6103
    %6175 = vmatpush.msra.mxu0 %v6102
    %6176 = vmatpush.msra.mxu0 %v6101
    %6177 = vmatmul.f32.gmra.mxu0 %v6114
    %v6178 = vpop.f32.mrf.mxu0
    %v6179 = vadd.f32 %v6111, %v6178
    %6180 = vmatmul.f32.gmra.mxu0 %v6117
    %v6181 = vpop.f32.mrf.mxu0
    %v6182 = vadd.f32 %v6111, %v6181
    %6183 = vmatmul.f32.gmra.mxu0 %v6120
    %v6184 = vpop.f32.mrf.mxu0
    %v6185 = vadd.f32 %v6111, %v6184
    %6186 = vmatmul.f32.gmra.mxu0 %v6123
    %v6187 = vpop.f32.mrf.mxu0
    %v6188 = vadd.f32 %v6111, %v6187
    %6189 = vmatmul.f32.gmra.mxu0 %v6126
    %v6190 = vpop.f32.mrf.mxu0
    %v6191 = vadd.f32 %v6111, %v6190
    %6192 = vmatmul.f32.gmra.mxu0 %v6129
    %v6193 = vpop.f32.mrf.mxu0
    %v6194 = vadd.f32 %v6111, %v6193
    %6195 = vmatmul.f32.gmra.mxu0 %v6132
    %v6196 = vpop.f32.mrf.mxu0
    %v6197 = vadd.f32 %v6111, %v6196
    %6198 = vmatmul.f32.gmra.mxu0 %v6135
    %v6199 = vpop.f32.mrf.mxu0
    %v6200 = vadd.f32 %v6111, %v6199
    %6201 = vmatmul.f32.gmra.mxu0 %v6138
    %v6202 = vpop.f32.mrf.mxu0
    %v6203 = vadd.f32 %v6111, %v6202
    %6204 = vmatmul.f32.gmra.mxu0 %v6141
    %v6205 = vpop.f32.mrf.mxu0
    %v6206 = vadd.f32 %v6111, %v6205
    %6207 = vmatmul.f32.gmra.mxu0 %v6144
    %v6208 = vpop.f32.mrf.mxu0
    %v6209 = vadd.f32 %v6111, %v6208
    %6210 = vmatmul.f32.gmra.mxu0 %v6147
    %v6211 = vpop.f32.mrf.mxu0
    %v6212 = vadd.f32 %v6111, %v6211
    %6213 = vmatmul.f32.gmra.mxu0 %v6150
    %v6214 = vpop.f32.mrf.mxu0
    %v6215 = vadd.f32 %v6111, %v6214
    %6216 = vmatmul.f32.gmra.mxu0 %v6153
    %v6217 = vpop.f32.mrf.mxu0
    %v6218 = vadd.f32 %v6111, %v6217
    %6219 = vmatmul.f32.gmra.mxu0 %v6156
    %v6220 = vpop.f32.mrf.mxu0
    %v6221 = vadd.f32 %v6111, %v6220
    %6222 = vmatmul.f32.gmra.mxu0 %v6159
    %v6223 = vpop.f32.mrf.mxu0
    %v6224 = vadd.f32 %v6111, %v6223
    %6225 = vdwg.mxu0
    %v6226 = vmax.f32 %v6179, 0.0
    %v6227 = vmax.f32 %v6182, 0.0
    %v6228 = vmax.f32 %v6185, 0.0
    %v6229 = vmax.f32 %v6188, 0.0
    %v6230 = vmax.f32 %v6191, 0.0
    %v6231 = vmax.f32 %v6194, 0.0
    %v6232 = vmax.f32 %v6197, 0.0
    %v6233 = vmax.f32 %v6200, 0.0
    %v6234 = vmax.f32 %v6203, 0.0
    %v6235 = vmax.f32 %v6206, 0.0
    %v6236 = vmax.f32 %v6209, 0.0
    %v6237 = vmax.f32 %v6212, 0.0
    %v6238 = vmax.f32 %v6215, 0.0
    %v6239 = vmax.f32 %v6218, 0.0
    %v6240 = vmax.f32 %v6221, 0.0
    %v6241 = vmax.f32 %v6224, 0.0
    %v6242 = vld [vmem:[%s9] sm:$0xff]
    %v6243 = vld [vmem:[%s9 + $0x8] sm:$0xff]
    %v6244 = vld [vmem:[%s9 + $0x10] sm:$0xff]
    %v6245 = vld [vmem:[%s9 + $0x18] sm:$0xff]
    %v6246 = vld [vmem:[%s9 + $0x20] sm:$0xff]
    %v6247 = vld [vmem:[%s9 + $0x28] sm:$0xff]
    %v6248 = vld [vmem:[%s9 + $0x30] sm:$0xff]
    %v6249 = vld [vmem:[%s9 + $0x38] sm:$0xff]
    %v6250 = vld [vmem:[%s10] sm:$0x1]
    %v6252 = vperm.slane %v6250, 0
    %v6255 = vsel %vm2578, %v6226, 0
    %v6258 = vsel %vm2578, %v6227, 0
    %v6261 = vsel %vm2578, %v6228, 0
    %v6264 = vsel %vm2578, %v6229, 0
    %v6267 = vsel %vm2578, %v6230, 0
    %v6270 = vsel %vm2578, %v6231, 0
    %v6273 = vsel %vm2578, %v6232, 0
    %v6276 = vsel %vm2578, %v6233, 0
    %v6279 = vsel %vm2578, %v6234, 0
    %v6282 = vsel %vm2578, %v6235, 0
    %v6285 = vsel %vm2578, %v6236, 0
    %v6288 = vsel %vm2578, %v6237, 0
    %v6291 = vsel %vm2578, %v6238, 0
    %v6294 = vsel %vm2578, %v6239, 0
    %v6297 = vsel %vm2578, %v6240, 0
    %v6300 = vsel %vm2578, %v6241, 0
    %6302 = vmatpush.msra.mxu0 0.0
    %6303 = vmatpush.msra.mxu0 0.0
    %6304 = vmatpush.msra.mxu0 0.0
    %6305 = vmatpush.msra.mxu0 0.0
    %6306 = vmatpush.msra.mxu0 0.0
    %6307 = vmatpush.msra.mxu0 0.0
    %6308 = vmatpush.msra.mxu0 0.0
    %6309 = vmatpush.msra.mxu0 0.0
    %6310 = vmatpush.msra.mxu0 %v6249
    %6311 = vmatpush.msra.mxu0 %v6248
    %6312 = vmatpush.msra.mxu0 %v6247
    %6313 = vmatpush.msra.mxu0 %v6246
    %6314 = vmatpush.msra.mxu0 %v6245
    %6315 = vmatpush.msra.mxu0 %v6244
    %6316 = vmatpush.msra.mxu0 %v6243
    %6317 = vmatpush.msra.mxu0 %v6242
    %6318 = vmatmul.f32.gmra.mxu0 %v6255
    %v6319 = vpop.f32.mrf.mxu0
    %v6320 = vadd.f32 %v6252, %v6319
    %6321 = vmatmul.f32.gmra.mxu0 %v6258
    %v6322 = vpop.f32.mrf.mxu0
    %v6323 = vadd.f32 %v6252, %v6322
    %6324 = vmatmul.f32.gmra.mxu0 %v6261
    %v6325 = vpop.f32.mrf.mxu0
    %v6326 = vadd.f32 %v6252, %v6325
    %6327 = vmatmul.f32.gmra.mxu0 %v6264
    %v6328 = vpop.f32.mrf.mxu0
    %v6329 = vadd.f32 %v6252, %v6328
    %6330 = vmatmul.f32.gmra.mxu0 %v6267
    %v6331 = vpop.f32.mrf.mxu0
    %v6332 = vadd.f32 %v6252, %v6331
    %6333 = vmatmul.f32.gmra.mxu0 %v6270
    %v6334 = vpop.f32.mrf.mxu0
    %v6335 = vadd.f32 %v6252, %v6334
    %6336 = vmatmul.f32.gmra.mxu0 %v6273
    %v6337 = vpop.f32.mrf.mxu0
    %v6338 = vadd.f32 %v6252, %v6337
    %6339 = vmatmul.f32.gmra.mxu0 %v6276
    %v6340 = vpop.f32.mrf.mxu0
    %v6341 = vadd.f32 %v6252, %v6340
    %6342 = vmatmul.f32.gmra.mxu0 %v6279
    %v6343 = vpop.f32.mrf.mxu0
    %v6344 = vadd.f32 %v6252, %v6343
    %6345 = vmatmul.f32.gmra.mxu0 %v6282
    %v6346 = vpop.f32.mrf.mxu0
    %v6347 = vadd.f32 %v6252, %v6346
    %6348 = vmatmul.f32.gmra.mxu0 %v6285
    %v6349 = vpop.f32.mrf.mxu0
    %v6350 = vadd.f32 %v6252, %v6349
    %6351 = vmatmul.f32.gmra.mxu0 %v6288
    %v6352 = vpop.f32.mrf.mxu0
    %v6353 = vadd.f32 %v6252, %v6352
    %6354 = vmatmul.f32.gmra.mxu0 %v6291
    %v6355 = vpop.f32.mrf.mxu0
    %v6356 = vadd.f32 %v6252, %v6355
    %6357 = vmatmul.f32.gmra.mxu0 %v6294
    %v6358 = vpop.f32.mrf.mxu0
    %v6359 = vadd.f32 %v6252, %v6358
    %6360 = vmatmul.f32.gmra.mxu0 %v6297
    %v6361 = vpop.f32.mrf.mxu0
    %v6362 = vadd.f32 %v6252, %v6361
    %6363 = vmatmul.f32.gmra.mxu0 %v6300
    %v6364 = vpop.f32.mrf.mxu0
    %v6365 = vadd.f32 %v6252, %v6364
    %6366 = vdwg.mxu0
    %v6367 = vmax.f32 %v6320, 0.0
    %v6368 = vmax.f32 %v6323, 0.0
    %v6369 = vmax.f32 %v6326, 0.0
    %v6370 = vmax.f32 %v6329, 0.0
    %v6371 = vmax.f32 %v6332, 0.0
    %v6372 = vmax.f32 %v6335, 0.0
    %v6373 = vmax.f32 %v6338, 0.0
    %v6374 = vmax.f32 %v6341, 0.0
    %v6375 = vmax.f32 %v6344, 0.0
    %v6376 = vmax.f32 %v6347, 0.0
    %v6377 = vmax.f32 %v6350, 0.0
    %v6378 = vmax.f32 %v6353, 0.0
    %v6379 = vmax.f32 %v6356, 0.0
    %v6380 = vmax.f32 %v6359, 0.0
    %v6381 = vmax.f32 %v6362, 0.0
    %v6382 = vmax.f32 %v6365, 0.0
    %v6383 = vsel %vm2578, %v6367, -inf
    %v6384 = vsel %vm2578, %v6368, -inf
    %v6385 = vsel %vm2578, %v6369, -inf
    %v6386 = vmax.f32 %v6383, %v6385
    %v6387 = vsel %vm2578, %v6370, -inf
    %v6388 = vmax.f32 %v6384, %v6387
    %v6389 = vsel %vm2578, %v6371, -inf
    %v6390 = vmax.f32 %v6386, %v6389
    %v6391 = vsel %vm2578, %v6372, -inf
    %v6392 = vmax.f32 %v6388, %v6391
    %v6393 = vsel %vm2578, %v6373, -inf
    %v6394 = vmax.f32 %v6390, %v6393
    %v6395 = vsel %vm2578, %v6374, -inf
    %v6396 = vmax.f32 %v6392, %v6395
    %v6397 = vmax.f32 %v6394, %v6396
    %v6398 = vrot.slane %v6397, 4
    %v6399 = vmax.f32 %v6397, %v6398
    %v6400 = vrot.slane %v6399, 2
    %v6401 = vmax.f32 %v6399, %v6400
    %v6402 = vrot.slane %v6401, 1
    %v6403 = vmax.f32 %v6401, %v6402
    %v6404 = vsel %vm2578, %v6375, -inf
    %v6405 = vsel %vm2578, %v6376, -inf
    %v6406 = vsel %vm2578, %v6377, -inf
    %v6407 = vmax.f32 %v6404, %v6406
    %v6408 = vsel %vm2578, %v6378, -inf
    %v6409 = vmax.f32 %v6405, %v6408
    %v6410 = vsel %vm2578, %v6379, -inf
    %v6411 = vmax.f32 %v6407, %v6410
    %v6412 = vsel %vm2578, %v6380, -inf
    %v6413 = vmax.f32 %v6409, %v6412
    %v6414 = vsel %vm2578, %v6381, -inf
    %v6415 = vmax.f32 %v6411, %v6414
    %v6416 = vsel %vm2578, %v6382, -inf
    %v6417 = vmax.f32 %v6413, %v6416
    %v6418 = vmax.f32 %v6415, %v6417
    %v6419 = vrot.slane %v6418, 4
    %v6420 = vmax.f32 %v6418, %v6419
    %v6421 = vrot.slane %v6420, 2
    %v6422 = vmax.f32 %v6420, %v6421
    %v6423 = vrot.slane %v6422, 1
    %v6424 = vmax.f32 %v6422, %v6423
    %v6425 = vld [vmem:[%s11] sm:$0xff]
    %v6426 = vld [vmem:[%s11 + $0x8] sm:$0xff]
    %v6427 = vld [vmem:[%s11 + $0x10] sm:$0xff]
    %v6428 = vld [vmem:[%s11 + $0x18] sm:$0xff]
    %v6429 = vld [vmem:[%s11 + $0x20] sm:$0xff]
    %v6430 = vld [vmem:[%s11 + $0x28] sm:$0xff]
    %v6431 = vld [vmem:[%s11 + $0x30] sm:$0xff]
    %v6432 = vld [vmem:[%s11 + $0x38] sm:$0xff]
    %v6433 = vld [vmem:[%s12] sm:$0x1]
    %v6435 = vperm.slane %v6433, 0
    %vm6439 = vcmask 1041409
    %v6440 = vsel %vm6439, %v6424, %v6403
    %v6441 = vsel %vm2578, %v6440, 0
    %6443 = vmatpush.msra.mxu0 0.0
    %6444 = vmatpush.msra.mxu0 0.0
    %6445 = vmatpush.msra.mxu0 0.0
    %6446 = vmatpush.msra.mxu0 0.0
    %6447 = vmatpush.msra.mxu0 0.0
    %6448 = vmatpush.msra.mxu0 0.0
    %6449 = vmatpush.msra.mxu0 0.0
    %6450 = vmatpush.msra.mxu0 0.0
    %6451 = vmatpush.msra.mxu0 %v6432
    %6452 = vmatpush.msra.mxu0 %v6431
    %6453 = vmatpush.msra.mxu0 %v6430
    %6454 = vmatpush.msra.mxu0 %v6429
    %6455 = vmatpush.msra.mxu0 %v6428
    %6456 = vmatpush.msra.mxu0 %v6427
    %6457 = vmatpush.msra.mxu0 %v6426
    %6458 = vmatpush.msra.mxu0 %v6425
    %6459 = vmatmul.f32.gmra.mxu0 %v6441
    %v6460 = vpop.f32.mrf.mxu0
    %v6461 = vadd.f32 %v6435, %v6460
    %6462 = vdwg.mxu0
    %v6463 = vmax.f32 %v6461, 0.0
    %v6464 = vld [vmem:[%s13] sm:$0xff]
    %v6465 = vld [vmem:[%s13 + $0x8] sm:$0xff]
    %v6466 = vld [vmem:[%s13 + $0x10] sm:$0xff]
    %v6467 = vld [vmem:[%s13 + $0x18] sm:$0xff]
    %v6468 = vld [vmem:[%s13 + $0x20] sm:$0xff]
    %v6469 = vld [vmem:[%s13 + $0x28] sm:$0xff]
    %v6470 = vld [vmem:[%s13 + $0x30] sm:$0xff]
    %v6471 = vld [vmem:[%s13 + $0x38] sm:$0xff]
    %v6472 = vld [vmem:[%s14] sm:$0x1]
    %v6474 = vperm.slane %v6472, 0
    %v6477 = vsel %vm2578, %v6463, 0
    %6479 = vmatpush.msra.mxu0 0.0
    %6480 = vmatpush.msra.mxu0 0.0
    %6481 = vmatpush.msra.mxu0 0.0
    %6482 = vmatpush.msra.mxu0 0.0
    %6483 = vmatpush.msra.mxu0 0.0
    %6484 = vmatpush.msra.mxu0 0.0
    %6485 = vmatpush.msra.mxu0 0.0
    %6486 = vmatpush.msra.mxu0 0.0
    %6487 = vmatpush.msra.mxu0 %v6471
    %6488 = vmatpush.msra.mxu0 %v6470
    %6489 = vmatpush.msra.mxu0 %v6469
    %6490 = vmatpush.msra.mxu0 %v6468
    %6491 = vmatpush.msra.mxu0 %v6467
    %6492 = vmatpush.msra.mxu0 %v6466
    %6493 = vmatpush.msra.mxu0 %v6465
    %6494 = vmatpush.msra.mxu0 %v6464
    %6495 = vmatmul.f32.gmra.mxu0 %v6477
    %v6496 = vpop.f32.mrf.mxu0
    %v6497 = vadd.f32 %v6474, %v6496
    %6498 = vdwg.mxu0
    %v6499 = vsub.f32 0.0, %v6497
    %v6500 = vmul.f32 %v6499, 1.442695
    %v6501 = vpow.pop %v6500
    %v6502 = vadd.f32 %v6501, 1.0
    %v6503 = vrcp.pop %v6502
    %v6504 = vmul.f32 %v6502, %v6503
    %v6505 = vsub.f32 1.0, %v6504
    %v6506 = vmul.f32 %v6503, %v6505
    %v6507 = vadd.f32 %v6503, %v6506
    %vm6508 = vweird.f32 %v6502
    %vm6509 = vweird.f32 %v6503
    %vm6510 = vmor %vm6508, %vm6509
    %v6511 = vsel %vm6510, %v6503, %v6507
    %v6512 = vand.u32 2147483647, %v6502
    %vm6513 = vcmp.eq.f32.partialorder %v6512, 8.507059e+37
    %v6514 = vand.u32 %v6502, 2147483648
    %v6515 = vor.u32 1.1754944e-38, %v6514
    %v6516 = vsel %vm6513, %v6515, %v6511
    %v6517 = vmul.f32 1.0, %v6516
    %vm6518 = vcmask 25600
    %6519 = vst.msk [vmem:[#allocation2] sm:$0x3] %vm6518, %v6517
    // Predicated region
    $region62: #{tpu_custom_call.1} parent=1 // pred_check
      _
    $region63: #{tpu_custom_call.1} parent=1 // pred_check_branch
      %6521 = sbr.rel (0) target = $region65
    $region64: #{tpu_custom_call.1} parent=1 // pred_region
      %6523 = vsyncadd [#allocation3], 0
      %s6525 = sshll.u32 [#allocation2], 4
      %s6526 = int_to_ptr.vmem [resolvable:$true] %s6525
      %s6527 = sshll.u32 %s15, 4
      %s6528 = int_to_ptr.hbm [resolvable:$true] %s6527
      %6530 = dma.vmem_to_hbm [thread:$0]  %s6526, 32, %s6528, [#allocation3]
    $region65: #{tpu_custom_call.1} parent=1 // pred_fallthru
      _
    // Predicated region
    $region66: #{tpu_custom_call.1} parent=1 // pred_check
      _
    $region67: #{tpu_custom_call.1} parent=1 // pred_check_branch
      %6532 = sbr.rel (0) target = $region69
    $region68: #{tpu_custom_call.1} parent=1 // pred_region
      %6534 = dma.done [#allocation3], 32
    $region69: #{tpu_custom_call.1} parent=1 // pred_fallthru
      _
    %6535 = vsyncpa [#allocation3], 1

</llo_original>
